<compile_context>
chip_gen: v5e
topology: v5e:2x2
jax: 0.10.0
libtpu: 0.0.40
codegen_flags: <defaults>
</compile_context>

<pallas_src>
import functools

import numpy as np
import jax
import jax.numpy as jnp
from jax.experimental import pallas as pl
from jax.experimental.pallas import tpu as pltpu  # noqa: F401  (TPU backend assumed)

LEAKY_SLOPE = 0.2
BN_EPS = 1e-5


# ------------------------------ kernel helpers ------------------------------ #

def _leaky(z):
    # LeakyReLU(0.2): for z < 0, 0.2*z > z, so max(z, 0.2*z) == leaky_relu (1 VALU op).
    return jnp.maximum(z, LEAKY_SLOPE * z)


def _mm(a, b):
    # bf16 x bf16 MXU matmul with f32 accumulation (review item 3).
    return jnp.dot(a.astype(jnp.bfloat16), b.astype(jnp.bfloat16),
                   preferred_element_type=jnp.float32)


def _mm_f32(a, b):
    # Tiny f32 matmuls used only for BN statistics (exact 0/1 reduce / broadcast).
    return jnp.dot(a, b, preferred_element_type=jnp.float32)


def _conv_taps(x, s_ref, tcat):
    """4x4 / stride-2 / pad-1 conv in (B*H, W*Cin) row layout.

    x     : (B*H,  W*Cin)       f32 activation rows
    s_ref : (4, B*OH, B*H)      bf16 per-kh row-selection matrices (H padding baked in)
    tcat  : (4*W*Cin, OW*Cout)  bf16 Toeplitz weights, kh blocks stacked along rows
    """
    # Four selected slabs, lane-concatenated (each slab is 128 lanes -> aligned concat),
    # then one conv matmul: (B*OH, 4*W*Cin) @ (4*W*Cin, OW*Cout).
    sel = jnp.concatenate([_mm(s_ref[k], x) for k in range(4)], axis=-1)
    return _mm(sel, tcat)


def _bn_leaky_rows(y, gamma_row, beta_row):
    """Train-mode BatchNorm + LeakyReLU when lanes == channels (spatial 1x1)."""
    mean = jnp.mean(y, axis=0, keepdims=True)
    d = y - mean
    var = jnp.mean(d * d, axis=0, keepdims=True)
    return _leaky(d * jax.lax.rsqrt(var + BN_EPS) * gamma_row + beta_row)


def _bn_leaky_grouped(y, gamma_row, beta_row, r, rt, count):
    """Train-mode BatchNorm + LeakyReLU in (B*OH, OW*C) row layout.

    Per-channel stats need a reduction over rows AND over the OW lane groups; the
    lane-group reduce / broadcast-back is done with tiny 0/1 matmuls:
      r  : (OW*C, Cpad)   sums lanes of one channel into one column
      rt : (Cpad, OW*C)   broadcasts per-channel values back to the lane layout
    gamma_row / beta_row are already pre-broadcast to the (1, OW*C) lane layout.
    """
    inv_n = 1.0 / count
    csum = _mm_f32(jnp.sum(y, axis=0, keepdims=True), r)            # (1, Cpad)
    mean_b = _mm_f32(csum * inv_n, rt)                              # (1, OW*C)
    d = y - mean_b
    cvar = _mm_f32(jnp.sum(d * d, axis=0, keepdims=True), r) * inv_n
    inv_b = _mm_f32(jax.lax.rsqrt(cvar + BN_EPS), rt)               # (1, OW*C)
    return _leaky(d * inv_b * gamma_row + beta_row)


# ------------------------------ fused kernel -------------------------------- #

def _d2_kernel(x_ref, s1_ref, t1_ref, s2_ref, s3_ref, s4_ref, s5_ref, s6_ref,
               tmid_ref, r_ref, rt_ref, g_sp_ref, b_sp_ref,
               w11_ref, g_tail_ref, b_tail_ref, o_ref, *, counts):
    # ---- layer 1: 4x4/s2 conv (3 -> nd/2) + LeakyReLU (no BN) -------------------
    # 192-lane image slabs -> keep the per-tap summed form (no misaligned concat).
    x = x_ref[...]                                                   # (B*64, 64*3)
    h = (_mm(_mm(s1_ref[0], x), t1_ref[0])
         + _mm(_mm(s1_ref[1], x), t1_ref[1])
         + _mm(_mm(s1_ref[2], x), t1_ref[2])
         + _mm(_mm(s1_ref[3], x), t1_ref[3]))
    h = _leaky(h)                                                    # (B*32, 32*4) = (64, 128)

    # ---- layers 2-5: 4x4/s2 conv + BN + LeakyReLU (spatial 16,8,4,2) ------------
    s_refs = (s2_ref, s3_ref, s4_ref, s5_ref)
    for i in range(4):
        y = _conv_taps(h, s_refs[i], tmid_ref[i])
        h = _bn_leaky_grouped(y, g_sp_ref[i:i + 1, :], b_sp_ref[i:i + 1, :],
                              r_ref[i], rt_ref[i], counts[i])

    # ---- layer 6: 4x4/s2 conv on the 2x2 map -> 1x1 (lanes == channels) ---------
    y = _conv_taps(h, s6_ref, tmid_ref[4])
    h = _bn_leaky_rows(y, g_tail_ref[0:1, :], b_tail_ref[0:1, :])    # (B, 128)

    # ---- layers 7-10: 3x3 pad-1 conv on a 1x1 map == 1x1 conv (centre tap) ------
    # Weights are zero-padded to 128x128; padded channels stay exactly 0 through BN.
    for i in range(4):
        y = _mm(h, w11_ref[i])
        h = _bn_leaky_rows(y, g_tail_ref[i + 1:i + 2, :],
                           b_tail_ref[i + 1:i + 2, :])

    # Store only the real channels (no padded HBM write, review item 1).
    o_ref[...] = h[:, :o_ref.shape[1]]


# --------------------------- parameter construction ------------------------- #

def make_d2_params(nd, key):
    """Deterministic synthetic parameters for D2.encode_img (HWIO weights)."""
    cfg = [
        (3,        nd // 2,  4, 2, 1, False),
        (nd // 2,  nd,       4, 2, 1, True),
        (nd,       nd * 2,   4, 2, 1, True),
        (nd * 2,   nd * 4,   4, 2, 1, True),
        (nd * 4,   nd * 8,   4, 2, 1, True),
        (nd * 8,   nd * 16,  4, 2, 1, True),
        (nd * 16,  nd * 8,   3, 1, 1, True),
        (nd * 8,   nd * 4,   3, 1, 1, True),
        (nd * 4,   nd * 2,   3, 1, 1, True),
        (nd * 2,   nd,       3, 1, 1, True),
    ]
    params = []
    for (cin, cout, k, s, p, has_bn) in cfg:
        key, wk, gk, bk = jax.random.split(key, 4)
        w = 0.05 * jax.random.normal(wk, (k, k, cin, cout), jnp.float32)
        layer = {"w": w, "k": k, "s": s, "p": p, "cin": cin, "cout": cout,
                 "has_bn": has_bn}
        if has_bn:
            layer["gamma"] = 1.0 + 0.1 * jax.random.normal(gk, (cout,), jnp.float32)
            layer["beta"] = 0.1 * jax.random.normal(bk, (cout,), jnp.float32)
        params.append(layer)
    return params


def _sel_mats(B, H, OH, k, s, p):
    """0/1 row-selection matrices S[kh]: picks input row s*oh - p + kh (zero if OOB)."""
    S = np.zeros((k, B * OH, B * H), np.float32)
    for kh in range(k):
        for b in range(B):
            for oh in range(OH):
                h = s * oh - p + kh
                if 0 <= h < H:
                    S[kh, b * OH + oh, b * H + h] = 1.0
    return jnp.asarray(S, jnp.bfloat16)


def _toeplitz_taps(W, OW, k, s, p, w_hwio):
    """Per-kh Toeplitz-along-W weights: (k, W*Cin, OW*Cout), kw taps + stride + pad baked in."""
    cin, cout = w_hwio.shape[2], w_hwio.shape[3]
    M = np.zeros((k, W, OW), np.float32)
    for kw in range(k):
        for ow in range(OW):
            w = s * ow - p + kw
            if 0 <= w < W:
                M[kw, w, ow] = 1.0
    T = jnp.einsum('xwo,hxic->hwioc', jnp.asarray(M), w_hwio)
    return T.reshape(k, W * cin, OW * cout)


def _group_mats(OW, C, cpad):
    """0/1 lane-group reduction matrix R[(ow*C + c), c] = 1 (channels padded to cpad)."""
    R = np.zeros((OW * C, cpad), np.float32)
    for ow in range(OW):
        for c in range(C):
            R[ow * C + c, c] = 1.0
    return R


def pack_d2_operands(params, B, H_img):
    """Pack weights / BN params into the fused kernel's matmul operands (weights in bf16)."""
    ops = {}
    # Spatial size at the input of each of the 6 stride-2 convs (+ the final 1x1).
    H = [H_img]
    for l in params[:6]:
        H.append((H[-1] + 2 * l["p"] - l["k"]) // l["s"] + 1)        # [64,32,16,8,4,2,1]

    cpad = max(params[i]["cout"] for i in range(1, 5))               # 64  (layers 2-5)
    wpad = params[5]["cout"]                                         # 128 (tail width)

    # ---- layer 1 (no BN): per-tap selection + Toeplitz weights ----
    l1 = params[0]
    ops["s1"] = _sel_mats(B, H[0], H[1], l1["k"], l1["s"], l1["p"])
    ops["t1"] = _toeplitz_taps(H[0], H[1], l1["k"], l1["s"], l1["p"],
                               l1["w"]).astype(jnp.bfloat16)         # (4, 192, 128)

    # ---- layers 2-6: selection + kh-stacked Toeplitz (each (512, 128) at nd=8) ----
    tmid, g_sp, b_sp, r_list, rt_list = [], [], [], [], []
    for idx in range(1, 6):
        l = params[idx]
        Hin, Hout = H[idx], H[idx + 1]
        ops[f"s{idx + 1}"] = _sel_mats(B, Hin, Hout, l["k"], l["s"], l["p"])
        t = _toeplitz_taps(Hin, Hout, l["k"], l["s"], l["p"], l["w"])
        tmid.append(t.reshape(l["k"] * Hin * l["cin"], Hout * l["cout"]))
        if idx <= 4:   # layers 2-5: grouped BN (OW > 1), gamma/beta pre-broadcast over OW
            g_sp.append(jnp.tile(l["gamma"], Hout))
            b_sp.append(jnp.tile(l["beta"], Hout))
            R = _group_mats(Hout, l["cout"], cpad)
            r_list.append(R)
            rt_list.append(R.T)
    ops["tmid"] = jnp.stack(tmid).astype(jnp.bfloat16)               # (5, 512, 128)
    ops["g_sp"] = jnp.stack(g_sp)                                    # (4, 128) f32
    ops["b_sp"] = jnp.stack(b_sp)                                    # (4, 128) f32
    ops["r"] = jnp.asarray(np.stack(r_list))                         # (4, 128, 64) f32
    ops["rt"] = jnp.asarray(np.stack(rt_list))                       # (4, 64, 128) f32

    # ---- layers 6-10 BN params + layers 7-10 centre-tap weights (zero-padded) ----
    l6 = params[5]
    g_tail, b_tail, w11 = [l6["gamma"]], [l6["beta"]], []
    for l in params[6:10]:
        wc = l["w"][1, 1]                                            # (cin, cout) centre tap
        w11.append(jnp.pad(wc, ((0, wpad - wc.shape[0]), (0, wpad - wc.shape[1]))))
        g_tail.append(jnp.pad(l["gamma"], (0, wpad - l["cout"]), constant_values=1.0))
        b_tail.append(jnp.pad(l["beta"], (0, wpad - l["cout"])))
    ops["w11"] = jnp.stack(w11).astype(jnp.bfloat16)                 # (4, 128, 128)
    ops["g_tail"] = jnp.stack(g_tail)                                # (5, 128) f32
    ops["b_tail"] = jnp.stack(b_tail)                                # (5, 128) f32

    # BN sample counts (B*OH*OW) for the grouped-BN layers 2-5 (static Python ints).
    counts = tuple(B * H[idx + 1] * H[idx + 1] for idx in range(1, 5))
    return ops, counts


# --------------------------------- forward ---------------------------------- #

@functools.partial(jax.jit, static_argnums=(2, 3))
def d2_forward(image_nchw, ops, counts, nd):
    """Equivalent of D2.forward: encode_img(image); returns NCHW (B, nd, 1, 1)."""
    B, _, H, W = image_nchw.shape
    x = jnp.transpose(image_nchw, (0, 2, 3, 1)).astype(jnp.float32)  # NHWC
    x_rows = x.reshape(B * H, W * x.shape[-1])                       # (B*H, W*Cin) = (128, 192)

    kernel = functools.partial(_d2_kernel, counts=counts)
    out = pl.pallas_call(
        kernel,
        out_shape=jax.ShapeDtypeStruct((B, nd), jnp.float32),        # only real channels stored
    )(x_rows, ops["s1"], ops["t1"], ops["s2"], ops["s3"], ops["s4"],
      ops["s5"], ops["s6"], ops["tmid"], ops["r"], ops["rt"],
      ops["g_sp"], ops["b_sp"], ops["w11"], ops["g_tail"], ops["b_tail"])
    return out.reshape(B, nd, 1, 1)                                  # NCHW, spatial 1x1


# ----------------------------------- main ------------------------------------ #

if __name__ == "__main__":
    nd, np_feat = 8, 16          # D2(Nd=8, Np=16); Np only feeds the unused logit heads
    B, H, W = 2, 64, 64          # 6 stride-2 convs -> 1x1 spatial at the output

    key = jax.random.PRNGKey(0)
    key, img_key = jax.random.split(key)
    image = jax.random.normal(img_key, (B, 3, H, W), jnp.float32)    # NCHW like PyTorch

    params = make_d2_params(nd, key)
    ops, counts = pack_d2_operands(params, B, H)

    out = d2_forward(image, ops, counts, nd)
    out = jax.block_until_ready(out)

    assert out.shape == (B, nd, H // 64, W // 64), out.shape
    assert bool(jnp.all(jnp.isfinite(out)))
    print("KERNEL_OK")
</pallas_src>

<mosaic_0001>
module attributes {stable_mosaic.version = 11 : i64} {
  func.func @_d2_kernel(%arg0: memref<128x192xf32, #tpu.memory_space<vmem>>, %arg1: memref<4x64x128xbf16, #tpu.memory_space<vmem>>, %arg2: memref<4x192x128xbf16, #tpu.memory_space<vmem>>, %arg3: memref<4x32x64xbf16, #tpu.memory_space<vmem>>, %arg4: memref<4x16x32xbf16, #tpu.memory_space<vmem>>, %arg5: memref<4x8x16xbf16, #tpu.memory_space<vmem>>, %arg6: memref<4x4x8xbf16, #tpu.memory_space<vmem>>, %arg7: memref<4x2x4xbf16, #tpu.memory_space<vmem>>, %arg8: memref<5x512x128xbf16, #tpu.memory_space<vmem>>, %arg9: memref<4x128x64xf32, #tpu.memory_space<vmem>>, %arg10: memref<4x64x128xf32, #tpu.memory_space<vmem>>, %arg11: memref<4x128xf32, #tpu.memory_space<vmem>>, %arg12: memref<4x128xf32, #tpu.memory_space<vmem>>, %arg13: memref<4x128x128xbf16, #tpu.memory_space<vmem>>, %arg14: memref<5x128xf32, #tpu.memory_space<vmem>>, %arg15: memref<5x128xf32, #tpu.memory_space<vmem>>, %arg16: memref<2x8xf32, #tpu.memory_space<vmem>>) attributes {dimension_semantics = [], scalar_prefetch = 0 : i64, scratch_operands = 0 : i64, tpu.core_type = #tpu.core_type<tc>} {
    %c0 = arith.constant 0 : index
    %c0_0 = arith.constant 0 : index
    %0 = vector.load %arg0[%c0, %c0_0] : memref<128x192xf32, #tpu.memory_space<vmem>>, vector<128x192xf32>
    %c0_1 = arith.constant 0 : index
    %c0_2 = arith.constant 0 : index
    %c0_3 = arith.constant 0 : index
    %1 = vector.load %arg1[%c0_1, %c0_2, %c0_3] : memref<4x64x128xbf16, #tpu.memory_space<vmem>>, vector<1x64x128xbf16>
    %2 = vector.shape_cast %1 : vector<1x64x128xbf16> to vector<64x128xbf16>
    %3 = arith.truncf %0 : vector<128x192xf32> to vector<128x192xbf16>
    %cst = arith.constant dense<0.000000e+00> : vector<64x192xf32>
    %4 = tpu.matmul %2, %3, %cst {dimension_numbers = #tpu.dot_dimension_numbers<[1], [0], [0], [1], [0, 0, 1, 1], [], []>} : vector<64x128xbf16>, vector<128x192xbf16>, vector<64x192xf32> -> vector<64x192xf32>
    %c0_4 = arith.constant 0 : index
    %c0_5 = arith.constant 0 : index
    %c0_6 = arith.constant 0 : index
    %5 = vector.load %arg2[%c0_4, %c0_5, %c0_6] : memref<4x192x128xbf16, #tpu.memory_space<vmem>>, vector<1x192x128xbf16>
    %6 = vector.shape_cast %5 : vector<1x192x128xbf16> to vector<192x128xbf16>
    %7 = arith.truncf %4 : vector<64x192xf32> to vector<64x192xbf16>
    %cst_7 = arith.constant dense<0.000000e+00> : vector<64x128xf32>
    %8 = tpu.matmul %7, %6, %cst_7 {dimension_numbers = #tpu.dot_dimension_numbers<[1], [0], [0], [1], [0, 0, 1, 1], [], []>} : vector<64x192xbf16>, vector<192x128xbf16>, vector<64x128xf32> -> vector<64x128xf32>
    %c1 = arith.constant 1 : index
    %c0_8 = arith.constant 0 : index
    %c0_9 = arith.constant 0 : index
    %9 = vector.load %arg1[%c1, %c0_8, %c0_9] : memref<4x64x128xbf16, #tpu.memory_space<vmem>>, vector<1x64x128xbf16>
    %10 = vector.shape_cast %9 : vector<1x64x128xbf16> to vector<64x128xbf16>
    %11 = arith.truncf %0 : vector<128x192xf32> to vector<128x192xbf16>
    %cst_10 = arith.constant dense<0.000000e+00> : vector<64x192xf32>
    %12 = tpu.matmul %10, %11, %cst_10 {dimension_numbers = #tpu.dot_dimension_numbers<[1], [0], [0], [1], [0, 0, 1, 1], [], []>} : vector<64x128xbf16>, vector<128x192xbf16>, vector<64x192xf32> -> vector<64x192xf32>
    %c1_11 = arith.constant 1 : index
    %c0_12 = arith.constant 0 : index
    %c0_13 = arith.constant 0 : index
    %13 = vector.load %arg2[%c1_11, %c0_12, %c0_13] : memref<4x192x128xbf16, #tpu.memory_space<vmem>>, vector<1x192x128xbf16>
    %14 = vector.shape_cast %13 : vector<1x192x128xbf16> to vector<192x128xbf16>
    %15 = arith.truncf %12 : vector<64x192xf32> to vector<64x192xbf16>
    %cst_14 = arith.constant dense<0.000000e+00> : vector<64x128xf32>
    %16 = tpu.matmul %15, %14, %cst_14 {dimension_numbers = #tpu.dot_dimension_numbers<[1], [0], [0], [1], [0, 0, 1, 1], [], []>} : vector<64x192xbf16>, vector<192x128xbf16>, vector<64x128xf32> -> vector<64x128xf32>
    %17 = arith.addf %8, %16 : vector<64x128xf32>
    %c2 = arith.constant 2 : index
    %c0_15 = arith.constant 0 : index
    %c0_16 = arith.constant 0 : index
    %18 = vector.load %arg1[%c2, %c0_15, %c0_16] : memref<4x64x128xbf16, #tpu.memory_space<vmem>>, vector<1x64x128xbf16>
    %19 = vector.shape_cast %18 : vector<1x64x128xbf16> to vector<64x128xbf16>
    %20 = arith.truncf %0 : vector<128x192xf32> to vector<128x192xbf16>
    %cst_17 = arith.constant dense<0.000000e+00> : vector<64x192xf32>
    %21 = tpu.matmul %19, %20, %cst_17 {dimension_numbers = #tpu.dot_dimension_numbers<[1], [0], [0], [1], [0, 0, 1, 1], [], []>} : vector<64x128xbf16>, vector<128x192xbf16>, vector<64x192xf32> -> vector<64x192xf32>
    %c2_18 = arith.constant 2 : index
    %c0_19 = arith.constant 0 : index
    %c0_20 = arith.constant 0 : index
    %22 = vector.load %arg2[%c2_18, %c0_19, %c0_20] : memref<4x192x128xbf16, #tpu.memory_space<vmem>>, vector<1x192x128xbf16>
    %23 = vector.shape_cast %22 : vector<1x192x128xbf16> to vector<192x128xbf16>
    %24 = arith.truncf %21 : vector<64x192xf32> to vector<64x192xbf16>
    %cst_21 = arith.constant dense<0.000000e+00> : vector<64x128xf32>
    %25 = tpu.matmul %24, %23, %cst_21 {dimension_numbers = #tpu.dot_dimension_numbers<[1], [0], [0], [1], [0, 0, 1, 1], [], []>} : vector<64x192xbf16>, vector<192x128xbf16>, vector<64x128xf32> -> vector<64x128xf32>
    %26 = arith.addf %17, %25 : vector<64x128xf32>
    %c3 = arith.constant 3 : index
    %c0_22 = arith.constant 0 : index
    %c0_23 = arith.constant 0 : index
    %27 = vector.load %arg1[%c3, %c0_22, %c0_23] : memref<4x64x128xbf16, #tpu.memory_space<vmem>>, vector<1x64x128xbf16>
    %28 = vector.shape_cast %27 : vector<1x64x128xbf16> to vector<64x128xbf16>
    %29 = arith.truncf %0 : vector<128x192xf32> to vector<128x192xbf16>
    %cst_24 = arith.constant dense<0.000000e+00> : vector<64x192xf32>
    %30 = tpu.matmul %28, %29, %cst_24 {dimension_numbers = #tpu.dot_dimension_numbers<[1], [0], [0], [1], [0, 0, 1, 1], [], []>} : vector<64x128xbf16>, vector<128x192xbf16>, vector<64x192xf32> -> vector<64x192xf32>
    %c3_25 = arith.constant 3 : index
    %c0_26 = arith.constant 0 : index
    %c0_27 = arith.constant 0 : index
    %31 = vector.load %arg2[%c3_25, %c0_26, %c0_27] : memref<4x192x128xbf16, #tpu.memory_space<vmem>>, vector<1x192x128xbf16>
    %32 = vector.shape_cast %31 : vector<1x192x128xbf16> to vector<192x128xbf16>
    %33 = arith.truncf %30 : vector<64x192xf32> to vector<64x192xbf16>
    %cst_28 = arith.constant dense<0.000000e+00> : vector<64x128xf32>
    %34 = tpu.matmul %33, %32, %cst_28 {dimension_numbers = #tpu.dot_dimension_numbers<[1], [0], [0], [1], [0, 0, 1, 1], [], []>} : vector<64x192xbf16>, vector<192x128xbf16>, vector<64x128xf32> -> vector<64x128xf32>
    %35 = arith.addf %26, %34 : vector<64x128xf32>
    %cst_29 = arith.constant 2.000000e-01 : f32
    %36 = vector.broadcast %cst_29 : f32 to vector<64x128xf32>
    %37 = arith.mulf %36, %35 : vector<64x128xf32>
    %38 = arith.maximumf %35, %37 : vector<64x128xf32>
    %c0_30 = arith.constant 0 : index
    %c0_31 = arith.constant 0 : index
    %c0_32 = arith.constant 0 : index
    %39 = vector.load %arg8[%c0_30, %c0_31, %c0_32] : memref<5x512x128xbf16, #tpu.memory_space<vmem>>, vector<1x512x128xbf16>
    %40 = vector.shape_cast %39 : vector<1x512x128xbf16> to vector<512x128xbf16>
    %c0_33 = arith.constant 0 : index
    %c0_34 = arith.constant 0 : index
    %c0_35 = arith.constant 0 : index
    %41 = vector.load %arg3[%c0_33, %c0_34, %c0_35] : memref<4x32x64xbf16, #tpu.memory_space<vmem>>, vector<1x32x64xbf16>
    %42 = vector.shape_cast %41 : vector<1x32x64xbf16> to vector<32x64xbf16>
    %43 = arith.truncf %38 : vector<64x128xf32> to vector<64x128xbf16>
    %cst_36 = arith.constant dense<0.000000e+00> : vector<32x128xf32>
    %44 = tpu.matmul %42, %43, %cst_36 {dimension_numbers = #tpu.dot_dimension_numbers<[1], [0], [0], [1], [0, 0, 1, 1], [], []>} : vector<32x64xbf16>, vector<64x128xbf16>, vector<32x128xf32> -> vector<32x128xf32>
    %c1_37 = arith.constant 1 : index
    %c0_38 = arith.constant 0 : index
    %c0_39 = arith.constant 0 : index
    %45 = vector.load %arg3[%c1_37, %c0_38, %c0_39] : memref<4x32x64xbf16, #tpu.memory_space<vmem>>, vector<1x32x64xbf16>
    %46 = vector.shape_cast %45 : vector<1x32x64xbf16> to vector<32x64xbf16>
    %47 = arith.truncf %38 : vector<64x128xf32> to vector<64x128xbf16>
    %cst_40 = arith.constant dense<0.000000e+00> : vector<32x128xf32>
    %48 = tpu.matmul %46, %47, %cst_40 {dimension_numbers = #tpu.dot_dimension_numbers<[1], [0], [0], [1], [0, 0, 1, 1], [], []>} : vector<32x64xbf16>, vector<64x128xbf16>, vector<32x128xf32> -> vector<32x128xf32>
    %c2_41 = arith.constant 2 : index
    %c0_42 = arith.constant 0 : index
    %c0_43 = arith.constant 0 : index
    %49 = vector.load %arg3[%c2_41, %c0_42, %c0_43] : memref<4x32x64xbf16, #tpu.memory_space<vmem>>, vector<1x32x64xbf16>
    %50 = vector.shape_cast %49 : vector<1x32x64xbf16> to vector<32x64xbf16>
    %51 = arith.truncf %38 : vector<64x128xf32> to vector<64x128xbf16>
    %cst_44 = arith.constant dense<0.000000e+00> : vector<32x128xf32>
    %52 = tpu.matmul %50, %51, %cst_44 {dimension_numbers = #tpu.dot_dimension_numbers<[1], [0], [0], [1], [0, 0, 1, 1], [], []>} : vector<32x64xbf16>, vector<64x128xbf16>, vector<32x128xf32> -> vector<32x128xf32>
    %c3_45 = arith.constant 3 : index
    %c0_46 = arith.constant 0 : index
    %c0_47 = arith.constant 0 : index
    %53 = vector.load %arg3[%c3_45, %c0_46, %c0_47] : memref<4x32x64xbf16, #tpu.memory_space<vmem>>, vector<1x32x64xbf16>
    %54 = vector.shape_cast %53 : vector<1x32x64xbf16> to vector<32x64xbf16>
    %55 = arith.truncf %38 : vector<64x128xf32> to vector<64x128xbf16>
    %cst_48 = arith.constant dense<0.000000e+00> : vector<32x128xf32>
    %56 = tpu.matmul %54, %55, %cst_48 {dimension_numbers = #tpu.dot_dimension_numbers<[1], [0], [0], [1], [0, 0, 1, 1], [], []>} : vector<32x64xbf16>, vector<64x128xbf16>, vector<32x128xf32> -> vector<32x128xf32>
    %57 = tpu.concatenate %44, %48, %52, %56 in 1 : vector<32x128xf32>, vector<32x128xf32>, vector<32x128xf32>, vector<32x128xf32> -> vector<32x512xf32>
    %58 = arith.truncf %57 : vector<32x512xf32> to vector<32x512xbf16>
    %cst_49 = arith.constant dense<0.000000e+00> : vector<32x128xf32>
    %59 = tpu.matmul %58, %40, %cst_49 {dimension_numbers = #tpu.dot_dimension_numbers<[1], [0], [0], [1], [0, 0, 1, 1], [], []>} : vector<32x512xbf16>, vector<512x128xbf16>, vector<32x128xf32> -> vector<32x128xf32>
    %c0_50 = arith.constant 0 : index
    %c0_51 = arith.constant 0 : index
    %60 = vector.load %arg11[%c0_50, %c0_51] : memref<4x128xf32, #tpu.memory_space<vmem>>, vector<1x128xf32>
    %c0_52 = arith.constant 0 : index
    %c0_53 = arith.constant 0 : index
    %61 = vector.load %arg12[%c0_52, %c0_53] : memref<4x128xf32, #tpu.memory_space<vmem>>, vector<1x128xf32>
    %c0_54 = arith.constant 0 : index
    %c0_55 = arith.constant 0 : index
    %c0_56 = arith.constant 0 : index
    %62 = vector.load %arg9[%c0_54, %c0_55, %c0_56] : memref<4x128x64xf32, #tpu.memory_space<vmem>>, vector<1x128x64xf32>
    %63 = vector.shape_cast %62 : vector<1x128x64xf32> to vector<128x64xf32>
    %c0_57 = arith.constant 0 : index
    %c0_58 = arith.constant 0 : index
    %c0_59 = arith.constant 0 : index
    %64 = vector.load %arg10[%c0_57, %c0_58, %c0_59] : memref<4x64x128xf32, #tpu.memory_space<vmem>>, vector<1x64x128xf32>
    %65 = vector.shape_cast %64 : vector<1x64x128xf32> to vector<64x128xf32>
    %cst_60 = arith.constant dense<0.000000e+00> : vector<128xf32>
    %66 = vector.multi_reduction <add>, %59, %cst_60 [0] : vector<32x128xf32> to vector<128xf32>
    %67 = vector.shape_cast %66 : vector<128xf32> to vector<1x128xf32>
    %cst_61 = arith.constant dense<0.000000e+00> : vector<1x64xf32>
    %68 = tpu.matmul %67, %63, %cst_61 {dimension_numbers = #tpu.dot_dimension_numbers<[1], [0], [0], [1], [0, 0, 1, 1], [], []>} : vector<1x128xf32>, vector<128x64xf32>, vector<1x64xf32> -> vector<1x64xf32>
    %cst_62 = arith.constant 0.001953125 : f32
    %69 = vector.broadcast %cst_62 : f32 to vector<1x64xf32>
    %70 = arith.mulf %68, %69 : vector<1x64xf32>
    %cst_63 = arith.constant dense<0.000000e+00> : vector<1x128xf32>
    %71 = tpu.matmul %70, %65, %cst_63 {dimension_numbers = #tpu.dot_dimension_numbers<[1], [0], [0], [1], [0, 0, 1, 1], [], []>} : vector<1x64xf32>, vector<64x128xf32>, vector<1x128xf32> -> vector<1x128xf32>
    %72 = vector.broadcast %71 : vector<1x128xf32> to vector<32x128xf32>
    %73 = arith.subf %59, %72 : vector<32x128xf32>
    %74 = arith.mulf %73, %73 : vector<32x128xf32>
    %cst_64 = arith.constant dense<0.000000e+00> : vector<128xf32>
    %75 = vector.multi_reduction <add>, %74, %cst_64 [0] : vector<32x128xf32> to vector<128xf32>
    %76 = vector.shape_cast %75 : vector<128xf32> to vector<1x128xf32>
    %cst_65 = arith.constant dense<0.000000e+00> : vector<1x64xf32>
    %77 = tpu.matmul %76, %63, %cst_65 {dimension_numbers = #tpu.dot_dimension_numbers<[1], [0], [0], [1], [0, 0, 1, 1], [], []>} : vector<1x128xf32>, vector<128x64xf32>, vector<1x64xf32> -> vector<1x64xf32>
    %cst_66 = arith.constant 0.001953125 : f32
    %78 = vector.broadcast %cst_66 : f32 to vector<1x64xf32>
    %79 = arith.mulf %77, %78 : vector<1x64xf32>
    %cst_67 = arith.constant 9.99999974E-6 : f32
    %80 = vector.broadcast %cst_67 : f32 to vector<1x64xf32>
    %81 = arith.addf %79, %80 : vector<1x64xf32>
    %82 = math.rsqrt %81 : vector<1x64xf32>
    %cst_68 = arith.constant dense<0.000000e+00> : vector<1x128xf32>
    %83 = tpu.matmul %82, %65, %cst_68 {dimension_numbers = #tpu.dot_dimension_numbers<[1], [0], [0], [1], [0, 0, 1, 1], [], []>} : vector<1x64xf32>, vector<64x128xf32>, vector<1x128xf32> -> vector<1x128xf32>
    %84 = vector.broadcast %83 : vector<1x128xf32> to vector<32x128xf32>
    %85 = arith.mulf %73, %84 : vector<32x128xf32>
    %86 = vector.broadcast %60 : vector<1x128xf32> to vector<32x128xf32>
    %87 = arith.mulf %85, %86 : vector<32x128xf32>
    %88 = vector.broadcast %61 : vector<1x128xf32> to vector<32x128xf32>
    %89 = arith.addf %87, %88 : vector<32x128xf32>
    %cst_69 = arith.constant 2.000000e-01 : f32
    %90 = vector.broadcast %cst_69 : f32 to vector<32x128xf32>
    %91 = arith.mulf %90, %89 : vector<32x128xf32>
    %92 = arith.maximumf %89, %91 : vector<32x128xf32>
    %c1_70 = arith.constant 1 : index
    %c0_71 = arith.constant 0 : index
    %c0_72 = arith.constant 0 : index
    %93 = vector.load %arg8[%c1_70, %c0_71, %c0_72] : memref<5x512x128xbf16, #tpu.memory_space<vmem>>, vector<1x512x128xbf16>
    %94 = vector.shape_cast %93 : vector<1x512x128xbf16> to vector<512x128xbf16>
    %c0_73 = arith.constant 0 : index
    %c0_74 = arith.constant 0 : index
    %c0_75 = arith.constant 0 : index
    %95 = vector.load %arg4[%c0_73, %c0_74, %c0_75] : memref<4x16x32xbf16, #tpu.memory_space<vmem>>, vector<1x16x32xbf16>
    %96 = vector.shape_cast %95 : vector<1x16x32xbf16> to vector<16x32xbf16>
    %97 = arith.truncf %92 : vector<32x128xf32> to vector<32x128xbf16>
    %cst_76 = arith.constant dense<0.000000e+00> : vector<16x128xf32>
    %98 = tpu.matmul %96, %97, %cst_76 {dimension_numbers = #tpu.dot_dimension_numbers<[1], [0], [0], [1], [0, 0, 1, 1], [], []>} : vector<16x32xbf16>, vector<32x128xbf16>, vector<16x128xf32> -> vector<16x128xf32>
    %c1_77 = arith.constant 1 : index
    %c0_78 = arith.constant 0 : index
    %c0_79 = arith.constant 0 : index
    %99 = vector.load %arg4[%c1_77, %c0_78, %c0_79] : memref<4x16x32xbf16, #tpu.memory_space<vmem>>, vector<1x16x32xbf16>
    %100 = vector.shape_cast %99 : vector<1x16x32xbf16> to vector<16x32xbf16>
    %101 = arith.truncf %92 : vector<32x128xf32> to vector<32x128xbf16>
    %cst_80 = arith.constant dense<0.000000e+00> : vector<16x128xf32>
    %102 = tpu.matmul %100, %101, %cst_80 {dimension_numbers = #tpu.dot_dimension_numbers<[1], [0], [0], [1], [0, 0, 1, 1], [], []>} : vector<16x32xbf16>, vector<32x128xbf16>, vector<16x128xf32> -> vector<16x128xf32>
    %c2_81 = arith.constant 2 : index
    %c0_82 = arith.constant 0 : index
    %c0_83 = arith.constant 0 : index
    %103 = vector.load %arg4[%c2_81, %c0_82, %c0_83] : memref<4x16x32xbf16, #tpu.memory_space<vmem>>, vector<1x16x32xbf16>
    %104 = vector.shape_cast %103 : vector<1x16x32xbf16> to vector<16x32xbf16>
    %105 = arith.truncf %92 : vector<32x128xf32> to vector<32x128xbf16>
    %cst_84 = arith.constant dense<0.000000e+00> : vector<16x128xf32>
    %106 = tpu.matmul %104, %105, %cst_84 {dimension_numbers = #tpu.dot_dimension_numbers<[1], [0], [0], [1], [0, 0, 1, 1], [], []>} : vector<16x32xbf16>, vector<32x128xbf16>, vector<16x128xf32> -> vector<16x128xf32>
    %c3_85 = arith.constant 3 : index
    %c0_86 = arith.constant 0 : index
    %c0_87 = arith.constant 0 : index
    %107 = vector.load %arg4[%c3_85, %c0_86, %c0_87] : memref<4x16x32xbf16, #tpu.memory_space<vmem>>, vector<1x16x32xbf16>
    %108 = vector.shape_cast %107 : vector<1x16x32xbf16> to vector<16x32xbf16>
    %109 = arith.truncf %92 : vector<32x128xf32> to vector<32x128xbf16>
    %cst_88 = arith.constant dense<0.000000e+00> : vector<16x128xf32>
    %110 = tpu.matmul %108, %109, %cst_88 {dimension_numbers = #tpu.dot_dimension_numbers<[1], [0], [0], [1], [0, 0, 1, 1], [], []>} : vector<16x32xbf16>, vector<32x128xbf16>, vector<16x128xf32> -> vector<16x128xf32>
    %111 = tpu.concatenate %98, %102, %106, %110 in 1 : vector<16x128xf32>, vector<16x128xf32>, vector<16x128xf32>, vector<16x128xf32> -> vector<16x512xf32>
    %112 = arith.truncf %111 : vector<16x512xf32> to vector<16x512xbf16>
    %cst_89 = arith.constant dense<0.000000e+00> : vector<16x128xf32>
    %113 = tpu.matmul %112, %94, %cst_89 {dimension_numbers = #tpu.dot_dimension_numbers<[1], [0], [0], [1], [0, 0, 1, 1], [], []>} : vector<16x512xbf16>, vector<512x128xbf16>, vector<16x128xf32> -> vector<16x128xf32>
    %c1_90 = arith.constant 1 : index
    %c0_91 = arith.constant 0 : index
    %114 = vector.load %arg11[%c1_90, %c0_91] : memref<4x128xf32, #tpu.memory_space<vmem>>, vector<1x128xf32>
    %c1_92 = arith.constant 1 : index
    %c0_93 = arith.constant 0 : index
    %115 = vector.load %arg12[%c1_92, %c0_93] : memref<4x128xf32, #tpu.memory_space<vmem>>, vector<1x128xf32>
    %c1_94 = arith.constant 1 : index
    %c0_95 = arith.constant 0 : index
    %c0_96 = arith.constant 0 : index
    %116 = vector.load %arg9[%c1_94, %c0_95, %c0_96] : memref<4x128x64xf32, #tpu.memory_space<vmem>>, vector<1x128x64xf32>
    %117 = vector.shape_cast %116 : vector<1x128x64xf32> to vector<128x64xf32>
    %c1_97 = arith.constant 1 : index
    %c0_98 = arith.constant 0 : index
    %c0_99 = arith.constant 0 : index
    %118 = vector.load %arg10[%c1_97, %c0_98, %c0_99] : memref<4x64x128xf32, #tpu.memory_space<vmem>>, vector<1x64x128xf32>
    %119 = vector.shape_cast %118 : vector<1x64x128xf32> to vector<64x128xf32>
    %cst_100 = arith.constant dense<0.000000e+00> : vector<128xf32>
    %120 = vector.multi_reduction <add>, %113, %cst_100 [0] : vector<16x128xf32> to vector<128xf32>
    %121 = vector.shape_cast %120 : vector<128xf32> to vector<1x128xf32>
    %cst_101 = arith.constant dense<0.000000e+00> : vector<1x64xf32>
    %122 = tpu.matmul %121, %117, %cst_101 {dimension_numbers = #tpu.dot_dimension_numbers<[1], [0], [0], [1], [0, 0, 1, 1], [], []>} : vector<1x128xf32>, vector<128x64xf32>, vector<1x64xf32> -> vector<1x64xf32>
    %cst_102 = arith.constant 7.812500e-03 : f32
    %123 = vector.broadcast %cst_102 : f32 to vector<1x64xf32>
    %124 = arith.mulf %122, %123 : vector<1x64xf32>
    %cst_103 = arith.constant dense<0.000000e+00> : vector<1x128xf32>
    %125 = tpu.matmul %124, %119, %cst_103 {dimension_numbers = #tpu.dot_dimension_numbers<[1], [0], [0], [1], [0, 0, 1, 1], [], []>} : vector<1x64xf32>, vector<64x128xf32>, vector<1x128xf32> -> vector<1x128xf32>
    %126 = vector.broadcast %125 : vector<1x128xf32> to vector<16x128xf32>
    %127 = arith.subf %113, %126 : vector<16x128xf32>
    %128 = arith.mulf %127, %127 : vector<16x128xf32>
    %cst_104 = arith.constant dense<0.000000e+00> : vector<128xf32>
    %129 = vector.multi_reduction <add>, %128, %cst_104 [0] : vector<16x128xf32> to vector<128xf32>
    %130 = vector.shape_cast %129 : vector<128xf32> to vector<1x128xf32>
    %cst_105 = arith.constant dense<0.000000e+00> : vector<1x64xf32>
    %131 = tpu.matmul %130, %117, %cst_105 {dimension_numbers = #tpu.dot_dimension_numbers<[1], [0], [0], [1], [0, 0, 1, 1], [], []>} : vector<1x128xf32>, vector<128x64xf32>, vector<1x64xf32> -> vector<1x64xf32>
    %cst_106 = arith.constant 7.812500e-03 : f32
    %132 = vector.broadcast %cst_106 : f32 to vector<1x64xf32>
    %133 = arith.mulf %131, %132 : vector<1x64xf32>
    %cst_107 = arith.constant 9.99999974E-6 : f32
    %134 = vector.broadcast %cst_107 : f32 to vector<1x64xf32>
    %135 = arith.addf %133, %134 : vector<1x64xf32>
    %136 = math.rsqrt %135 : vector<1x64xf32>
    %cst_108 = arith.constant dense<0.000000e+00> : vector<1x128xf32>
    %137 = tpu.matmul %136, %119, %cst_108 {dimension_numbers = #tpu.dot_dimension_numbers<[1], [0], [0], [1], [0, 0, 1, 1], [], []>} : vector<1x64xf32>, vector<64x128xf32>, vector<1x128xf32> -> vector<1x128xf32>
    %138 = vector.broadcast %137 : vector<1x128xf32> to vector<16x128xf32>
    %139 = arith.mulf %127, %138 : vector<16x128xf32>
    %140 = vector.broadcast %114 : vector<1x128xf32> to vector<16x128xf32>
    %141 = arith.mulf %139, %140 : vector<16x128xf32>
    %142 = vector.broadcast %115 : vector<1x128xf32> to vector<16x128xf32>
    %143 = arith.addf %141, %142 : vector<16x128xf32>
    %cst_109 = arith.constant 2.000000e-01 : f32
    %144 = vector.broadcast %cst_109 : f32 to vector<16x128xf32>
    %145 = arith.mulf %144, %143 : vector<16x128xf32>
    %146 = arith.maximumf %143, %145 : vector<16x128xf32>
    %c2_110 = arith.constant 2 : index
    %c0_111 = arith.constant 0 : index
    %c0_112 = arith.constant 0 : index
    %147 = vector.load %arg8[%c2_110, %c0_111, %c0_112] : memref<5x512x128xbf16, #tpu.memory_space<vmem>>, vector<1x512x128xbf16>
    %148 = vector.shape_cast %147 : vector<1x512x128xbf16> to vector<512x128xbf16>
    %c0_113 = arith.constant 0 : index
    %c0_114 = arith.constant 0 : index
    %c0_115 = arith.constant 0 : index
    %149 = vector.load %arg5[%c0_113, %c0_114, %c0_115] : memref<4x8x16xbf16, #tpu.memory_space<vmem>>, vector<1x8x16xbf16>
    %150 = vector.shape_cast %149 : vector<1x8x16xbf16> to vector<8x16xbf16>
    %151 = arith.truncf %146 : vector<16x128xf32> to vector<16x128xbf16>
    %cst_116 = arith.constant dense<0.000000e+00> : vector<8x128xf32>
    %152 = tpu.matmul %150, %151, %cst_116 {dimension_numbers = #tpu.dot_dimension_numbers<[1], [0], [0], [1], [0, 0, 1, 1], [], []>} : vector<8x16xbf16>, vector<16x128xbf16>, vector<8x128xf32> -> vector<8x128xf32>
    %c1_117 = arith.constant 1 : index
    %c0_118 = arith.constant 0 : index
    %c0_119 = arith.constant 0 : index
    %153 = vector.load %arg5[%c1_117, %c0_118, %c0_119] : memref<4x8x16xbf16, #tpu.memory_space<vmem>>, vector<1x8x16xbf16>
    %154 = vector.shape_cast %153 : vector<1x8x16xbf16> to vector<8x16xbf16>
    %155 = arith.truncf %146 : vector<16x128xf32> to vector<16x128xbf16>
    %cst_120 = arith.constant dense<0.000000e+00> : vector<8x128xf32>
    %156 = tpu.matmul %154, %155, %cst_120 {dimension_numbers = #tpu.dot_dimension_numbers<[1], [0], [0], [1], [0, 0, 1, 1], [], []>} : vector<8x16xbf16>, vector<16x128xbf16>, vector<8x128xf32> -> vector<8x128xf32>
    %c2_121 = arith.constant 2 : index
    %c0_122 = arith.constant 0 : index
    %c0_123 = arith.constant 0 : index
    %157 = vector.load %arg5[%c2_121, %c0_122, %c0_123] : memref<4x8x16xbf16, #tpu.memory_space<vmem>>, vector<1x8x16xbf16>
    %158 = vector.shape_cast %157 : vector<1x8x16xbf16> to vector<8x16xbf16>
    %159 = arith.truncf %146 : vector<16x128xf32> to vector<16x128xbf16>
    %cst_124 = arith.constant dense<0.000000e+00> : vector<8x128xf32>
    %160 = tpu.matmul %158, %159, %cst_124 {dimension_numbers = #tpu.dot_dimension_numbers<[1], [0], [0], [1], [0, 0, 1, 1], [], []>} : vector<8x16xbf16>, vector<16x128xbf16>, vector<8x128xf32> -> vector<8x128xf32>
    %c3_125 = arith.constant 3 : index
    %c0_126 = arith.constant 0 : index
    %c0_127 = arith.constant 0 : index
    %161 = vector.load %arg5[%c3_125, %c0_126, %c0_127] : memref<4x8x16xbf16, #tpu.memory_space<vmem>>, vector<1x8x16xbf16>
    %162 = vector.shape_cast %161 : vector<1x8x16xbf16> to vector<8x16xbf16>
    %163 = arith.truncf %146 : vector<16x128xf32> to vector<16x128xbf16>
    %cst_128 = arith.constant dense<0.000000e+00> : vector<8x128xf32>
    %164 = tpu.matmul %162, %163, %cst_128 {dimension_numbers = #tpu.dot_dimension_numbers<[1], [0], [0], [1], [0, 0, 1, 1], [], []>} : vector<8x16xbf16>, vector<16x128xbf16>, vector<8x128xf32> -> vector<8x128xf32>
    %165 = tpu.concatenate %152, %156, %160, %164 in 1 : vector<8x128xf32>, vector<8x128xf32>, vector<8x128xf32>, vector<8x128xf32> -> vector<8x512xf32>
    %166 = arith.truncf %165 : vector<8x512xf32> to vector<8x512xbf16>
    %cst_129 = arith.constant dense<0.000000e+00> : vector<8x128xf32>
    %167 = tpu.matmul %166, %148, %cst_129 {dimension_numbers = #tpu.dot_dimension_numbers<[1], [0], [0], [1], [0, 0, 1, 1], [], []>} : vector<8x512xbf16>, vector<512x128xbf16>, vector<8x128xf32> -> vector<8x128xf32>
    %c2_130 = arith.constant 2 : index
    %c0_131 = arith.constant 0 : index
    %168 = vector.load %arg11[%c2_130, %c0_131] : memref<4x128xf32, #tpu.memory_space<vmem>>, vector<1x128xf32>
    %c2_132 = arith.constant 2 : index
    %c0_133 = arith.constant 0 : index
    %169 = vector.load %arg12[%c2_132, %c0_133] : memref<4x128xf32, #tpu.memory_space<vmem>>, vector<1x128xf32>
    %c2_134 = arith.constant 2 : index
    %c0_135 = arith.constant 0 : index
    %c0_136 = arith.constant 0 : index
    %170 = vector.load %arg9[%c2_134, %c0_135, %c0_136] : memref<4x128x64xf32, #tpu.memory_space<vmem>>, vector<1x128x64xf32>
    %171 = vector.shape_cast %170 : vector<1x128x64xf32> to vector<128x64xf32>
    %c2_137 = arith.constant 2 : index
    %c0_138 = arith.constant 0 : index
    %c0_139 = arith.constant 0 : index
    %172 = vector.load %arg10[%c2_137, %c0_138, %c0_139] : memref<4x64x128xf32, #tpu.memory_space<vmem>>, vector<1x64x128xf32>
    %173 = vector.shape_cast %172 : vector<1x64x128xf32> to vector<64x128xf32>
    %cst_140 = arith.constant dense<0.000000e+00> : vector<128xf32>
    %174 = vector.multi_reduction <add>, %167, %cst_140 [0] : vector<8x128xf32> to vector<128xf32>
    %175 = vector.shape_cast %174 : vector<128xf32> to vector<1x128xf32>
    %cst_141 = arith.constant dense<0.000000e+00> : vector<1x64xf32>
    %176 = tpu.matmul %175, %171, %cst_141 {dimension_numbers = #tpu.dot_dimension_numbers<[1], [0], [0], [1], [0, 0, 1, 1], [], []>} : vector<1x128xf32>, vector<128x64xf32>, vector<1x64xf32> -> vector<1x64xf32>
    %cst_142 = arith.constant 3.125000e-02 : f32
    %177 = vector.broadcast %cst_142 : f32 to vector<1x64xf32>
    %178 = arith.mulf %176, %177 : vector<1x64xf32>
    %cst_143 = arith.constant dense<0.000000e+00> : vector<1x128xf32>
    %179 = tpu.matmul %178, %173, %cst_143 {dimension_numbers = #tpu.dot_dimension_numbers<[1], [0], [0], [1], [0, 0, 1, 1], [], []>} : vector<1x64xf32>, vector<64x128xf32>, vector<1x128xf32> -> vector<1x128xf32>
    %180 = vector.broadcast %179 : vector<1x128xf32> to vector<8x128xf32>
    %181 = arith.subf %167, %180 : vector<8x128xf32>
    %182 = arith.mulf %181, %181 : vector<8x128xf32>
    %cst_144 = arith.constant dense<0.000000e+00> : vector<128xf32>
    %183 = vector.multi_reduction <add>, %182, %cst_144 [0] : vector<8x128xf32> to vector<128xf32>
    %184 = vector.shape_cast %183 : vector<128xf32> to vector<1x128xf32>
    %cst_145 = arith.constant dense<0.000000e+00> : vector<1x64xf32>
    %185 = tpu.matmul %184, %171, %cst_145 {dimension_numbers = #tpu.dot_dimension_numbers<[1], [0], [0], [1], [0, 0, 1, 1], [], []>} : vector<1x128xf32>, vector<128x64xf32>, vector<1x64xf32> -> vector<1x64xf32>
    %cst_146 = arith.constant 3.125000e-02 : f32
    %186 = vector.broadcast %cst_146 : f32 to vector<1x64xf32>
    %187 = arith.mulf %185, %186 : vector<1x64xf32>
    %cst_147 = arith.constant 9.99999974E-6 : f32
    %188 = vector.broadcast %cst_147 : f32 to vector<1x64xf32>
    %189 = arith.addf %187, %188 : vector<1x64xf32>
    %190 = math.rsqrt %189 : vector<1x64xf32>
    %cst_148 = arith.constant dense<0.000000e+00> : vector<1x128xf32>
    %191 = tpu.matmul %190, %173, %cst_148 {dimension_numbers = #tpu.dot_dimension_numbers<[1], [0], [0], [1], [0, 0, 1, 1], [], []>} : vector<1x64xf32>, vector<64x128xf32>, vector<1x128xf32> -> vector<1x128xf32>
    %192 = vector.broadcast %191 : vector<1x128xf32> to vector<8x128xf32>
    %193 = arith.mulf %181, %192 : vector<8x128xf32>
    %194 = vector.broadcast %168 : vector<1x128xf32> to vector<8x128xf32>
    %195 = arith.mulf %193, %194 : vector<8x128xf32>
    %196 = vector.broadcast %169 : vector<1x128xf32> to vector<8x128xf32>
    %197 = arith.addf %195, %196 : vector<8x128xf32>
    %cst_149 = arith.constant 2.000000e-01 : f32
    %198 = vector.broadcast %cst_149 : f32 to vector<8x128xf32>
    %199 = arith.mulf %198, %197 : vector<8x128xf32>
    %200 = arith.maximumf %197, %199 : vector<8x128xf32>
    %c3_150 = arith.constant 3 : index
    %c0_151 = arith.constant 0 : index
    %c0_152 = arith.constant 0 : index
    %201 = vector.load %arg8[%c3_150, %c0_151, %c0_152] : memref<5x512x128xbf16, #tpu.memory_space<vmem>>, vector<1x512x128xbf16>
    %202 = vector.shape_cast %201 : vector<1x512x128xbf16> to vector<512x128xbf16>
    %c0_153 = arith.constant 0 : index
    %c0_154 = arith.constant 0 : index
    %c0_155 = arith.constant 0 : index
    %203 = vector.load %arg6[%c0_153, %c0_154, %c0_155] : memref<4x4x8xbf16, #tpu.memory_space<vmem>>, vector<1x4x8xbf16>
    %204 = vector.shape_cast %203 : vector<1x4x8xbf16> to vector<4x8xbf16>
    %205 = arith.truncf %200 : vector<8x128xf32> to vector<8x128xbf16>
    %cst_156 = arith.constant dense<0.000000e+00> : vector<4x128xf32>
    %206 = tpu.matmul %204, %205, %cst_156 {dimension_numbers = #tpu.dot_dimension_numbers<[1], [0], [0], [1], [0, 0, 1, 1], [], []>} : vector<4x8xbf16>, vector<8x128xbf16>, vector<4x128xf32> -> vector<4x128xf32>
    %c1_157 = arith.constant 1 : index
    %c0_158 = arith.constant 0 : index
    %c0_159 = arith.constant 0 : index
    %207 = vector.load %arg6[%c1_157, %c0_158, %c0_159] : memref<4x4x8xbf16, #tpu.memory_space<vmem>>, vector<1x4x8xbf16>
    %208 = vector.shape_cast %207 : vector<1x4x8xbf16> to vector<4x8xbf16>
    %209 = arith.truncf %200 : vector<8x128xf32> to vector<8x128xbf16>
    %cst_160 = arith.constant dense<0.000000e+00> : vector<4x128xf32>
    %210 = tpu.matmul %208, %209, %cst_160 {dimension_numbers = #tpu.dot_dimension_numbers<[1], [0], [0], [1], [0, 0, 1, 1], [], []>} : vector<4x8xbf16>, vector<8x128xbf16>, vector<4x128xf32> -> vector<4x128xf32>
    %c2_161 = arith.constant 2 : index
    %c0_162 = arith.constant 0 : index
    %c0_163 = arith.constant 0 : index
    %211 = vector.load %arg6[%c2_161, %c0_162, %c0_163] : memref<4x4x8xbf16, #tpu.memory_space<vmem>>, vector<1x4x8xbf16>
    %212 = vector.shape_cast %211 : vector<1x4x8xbf16> to vector<4x8xbf16>
    %213 = arith.truncf %200 : vector<8x128xf32> to vector<8x128xbf16>
    %cst_164 = arith.constant dense<0.000000e+00> : vector<4x128xf32>
    %214 = tpu.matmul %212, %213, %cst_164 {dimension_numbers = #tpu.dot_dimension_numbers<[1], [0], [0], [1], [0, 0, 1, 1], [], []>} : vector<4x8xbf16>, vector<8x128xbf16>, vector<4x128xf32> -> vector<4x128xf32>
    %c3_165 = arith.constant 3 : index
    %c0_166 = arith.constant 0 : index
    %c0_167 = arith.constant 0 : index
    %215 = vector.load %arg6[%c3_165, %c0_166, %c0_167] : memref<4x4x8xbf16, #tpu.memory_space<vmem>>, vector<1x4x8xbf16>
    %216 = vector.shape_cast %215 : vector<1x4x8xbf16> to vector<4x8xbf16>
    %217 = arith.truncf %200 : vector<8x128xf32> to vector<8x128xbf16>
    %cst_168 = arith.constant dense<0.000000e+00> : vector<4x128xf32>
    %218 = tpu.matmul %216, %217, %cst_168 {dimension_numbers = #tpu.dot_dimension_numbers<[1], [0], [0], [1], [0, 0, 1, 1], [], []>} : vector<4x8xbf16>, vector<8x128xbf16>, vector<4x128xf32> -> vector<4x128xf32>
    %219 = tpu.concatenate %206, %210, %214, %218 in 1 : vector<4x128xf32>, vector<4x128xf32>, vector<4x128xf32>, vector<4x128xf32> -> vector<4x512xf32>
    %220 = arith.truncf %219 : vector<4x512xf32> to vector<4x512xbf16>
    %cst_169 = arith.constant dense<0.000000e+00> : vector<4x128xf32>
    %221 = tpu.matmul %220, %202, %cst_169 {dimension_numbers = #tpu.dot_dimension_numbers<[1], [0], [0], [1], [0, 0, 1, 1], [], []>} : vector<4x512xbf16>, vector<512x128xbf16>, vector<4x128xf32> -> vector<4x128xf32>
    %c3_170 = arith.constant 3 : index
    %c0_171 = arith.constant 0 : index
    %222 = vector.load %arg11[%c3_170, %c0_171] : memref<4x128xf32, #tpu.memory_space<vmem>>, vector<1x128xf32>
    %c3_172 = arith.constant 3 : index
    %c0_173 = arith.constant 0 : index
    %223 = vector.load %arg12[%c3_172, %c0_173] : memref<4x128xf32, #tpu.memory_space<vmem>>, vector<1x128xf32>
    %c3_174 = arith.constant 3 : index
    %c0_175 = arith.constant 0 : index
    %c0_176 = arith.constant 0 : index
    %224 = vector.load %arg9[%c3_174, %c0_175, %c0_176] : memref<4x128x64xf32, #tpu.memory_space<vmem>>, vector<1x128x64xf32>
    %225 = vector.shape_cast %224 : vector<1x128x64xf32> to vector<128x64xf32>
    %c3_177 = arith.constant 3 : index
    %c0_178 = arith.constant 0 : index
    %c0_179 = arith.constant 0 : index
    %226 = vector.load %arg10[%c3_177, %c0_178, %c0_179] : memref<4x64x128xf32, #tpu.memory_space<vmem>>, vector<1x64x128xf32>
    %227 = vector.shape_cast %226 : vector<1x64x128xf32> to vector<64x128xf32>
    %cst_180 = arith.constant dense<0.000000e+00> : vector<128xf32>
    %228 = vector.multi_reduction <add>, %221, %cst_180 [0] : vector<4x128xf32> to vector<128xf32>
    %229 = vector.shape_cast %228 : vector<128xf32> to vector<1x128xf32>
    %cst_181 = arith.constant dense<0.000000e+00> : vector<1x64xf32>
    %230 = tpu.matmul %229, %225, %cst_181 {dimension_numbers = #tpu.dot_dimension_numbers<[1], [0], [0], [1], [0, 0, 1, 1], [], []>} : vector<1x128xf32>, vector<128x64xf32>, vector<1x64xf32> -> vector<1x64xf32>
    %cst_182 = arith.constant 1.250000e-01 : f32
    %231 = vector.broadcast %cst_182 : f32 to vector<1x64xf32>
    %232 = arith.mulf %230, %231 : vector<1x64xf32>
    %cst_183 = arith.constant dense<0.000000e+00> : vector<1x128xf32>
    %233 = tpu.matmul %232, %227, %cst_183 {dimension_numbers = #tpu.dot_dimension_numbers<[1], [0], [0], [1], [0, 0, 1, 1], [], []>} : vector<1x64xf32>, vector<64x128xf32>, vector<1x128xf32> -> vector<1x128xf32>
    %234 = vector.broadcast %233 : vector<1x128xf32> to vector<4x128xf32>
    %235 = arith.subf %221, %234 : vector<4x128xf32>
    %236 = arith.mulf %235, %235 : vector<4x128xf32>
    %cst_184 = arith.constant dense<0.000000e+00> : vector<128xf32>
    %237 = vector.multi_reduction <add>, %236, %cst_184 [0] : vector<4x128xf32> to vector<128xf32>
    %238 = vector.shape_cast %237 : vector<128xf32> to vector<1x128xf32>
    %cst_185 = arith.constant dense<0.000000e+00> : vector<1x64xf32>
    %239 = tpu.matmul %238, %225, %cst_185 {dimension_numbers = #tpu.dot_dimension_numbers<[1], [0], [0], [1], [0, 0, 1, 1], [], []>} : vector<1x128xf32>, vector<128x64xf32>, vector<1x64xf32> -> vector<1x64xf32>
    %cst_186 = arith.constant 1.250000e-01 : f32
    %240 = vector.broadcast %cst_186 : f32 to vector<1x64xf32>
    %241 = arith.mulf %239, %240 : vector<1x64xf32>
    %cst_187 = arith.constant 9.99999974E-6 : f32
    %242 = vector.broadcast %cst_187 : f32 to vector<1x64xf32>
    %243 = arith.addf %241, %242 : vector<1x64xf32>
    %244 = math.rsqrt %243 : vector<1x64xf32>
    %cst_188 = arith.constant dense<0.000000e+00> : vector<1x128xf32>
    %245 = tpu.matmul %244, %227, %cst_188 {dimension_numbers = #tpu.dot_dimension_numbers<[1], [0], [0], [1], [0, 0, 1, 1], [], []>} : vector<1x64xf32>, vector<64x128xf32>, vector<1x128xf32> -> vector<1x128xf32>
    %246 = vector.broadcast %245 : vector<1x128xf32> to vector<4x128xf32>
    %247 = arith.mulf %235, %246 : vector<4x128xf32>
    %248 = vector.broadcast %222 : vector<1x128xf32> to vector<4x128xf32>
    %249 = arith.mulf %247, %248 : vector<4x128xf32>
    %250 = vector.broadcast %223 : vector<1x128xf32> to vector<4x128xf32>
    %251 = arith.addf %249, %250 : vector<4x128xf32>
    %cst_189 = arith.constant 2.000000e-01 : f32
    %252 = vector.broadcast %cst_189 : f32 to vector<4x128xf32>
    %253 = arith.mulf %252, %251 : vector<4x128xf32>
    %254 = arith.maximumf %251, %253 : vector<4x128xf32>
    %c4 = arith.constant 4 : index
    %c0_190 = arith.constant 0 : index
    %c0_191 = arith.constant 0 : index
    %255 = vector.load %arg8[%c4, %c0_190, %c0_191] : memref<5x512x128xbf16, #tpu.memory_space<vmem>>, vector<1x512x128xbf16>
    %256 = vector.shape_cast %255 : vector<1x512x128xbf16> to vector<512x128xbf16>
    %c0_192 = arith.constant 0 : index
    %c0_193 = arith.constant 0 : index
    %c0_194 = arith.constant 0 : index
    %257 = vector.load %arg7[%c0_192, %c0_193, %c0_194] : memref<4x2x4xbf16, #tpu.memory_space<vmem>>, vector<1x2x4xbf16>
    %258 = vector.shape_cast %257 : vector<1x2x4xbf16> to vector<2x4xbf16>
    %259 = arith.truncf %254 : vector<4x128xf32> to vector<4x128xbf16>
    %cst_195 = arith.constant dense<0.000000e+00> : vector<2x128xf32>
    %260 = tpu.matmul %258, %259, %cst_195 {dimension_numbers = #tpu.dot_dimension_numbers<[1], [0], [0], [1], [0, 0, 1, 1], [], []>} : vector<2x4xbf16>, vector<4x128xbf16>, vector<2x128xf32> -> vector<2x128xf32>
    %c1_196 = arith.constant 1 : index
    %c0_197 = arith.constant 0 : index
    %c0_198 = arith.constant 0 : index
    %261 = vector.load %arg7[%c1_196, %c0_197, %c0_198] : memref<4x2x4xbf16, #tpu.memory_space<vmem>>, vector<1x2x4xbf16>
    %262 = vector.shape_cast %261 : vector<1x2x4xbf16> to vector<2x4xbf16>
    %263 = arith.truncf %254 : vector<4x128xf32> to vector<4x128xbf16>
    %cst_199 = arith.constant dense<0.000000e+00> : vector<2x128xf32>
    %264 = tpu.matmul %262, %263, %cst_199 {dimension_numbers = #tpu.dot_dimension_numbers<[1], [0], [0], [1], [0, 0, 1, 1], [], []>} : vector<2x4xbf16>, vector<4x128xbf16>, vector<2x128xf32> -> vector<2x128xf32>
    %c2_200 = arith.constant 2 : index
    %c0_201 = arith.constant 0 : index
    %c0_202 = arith.constant 0 : index
    %265 = vector.load %arg7[%c2_200, %c0_201, %c0_202] : memref<4x2x4xbf16, #tpu.memory_space<vmem>>, vector<1x2x4xbf16>
    %266 = vector.shape_cast %265 : vector<1x2x4xbf16> to vector<2x4xbf16>
    %267 = arith.truncf %254 : vector<4x128xf32> to vector<4x128xbf16>
    %cst_203 = arith.constant dense<0.000000e+00> : vector<2x128xf32>
    %268 = tpu.matmul %266, %267, %cst_203 {dimension_numbers = #tpu.dot_dimension_numbers<[1], [0], [0], [1], [0, 0, 1, 1], [], []>} : vector<2x4xbf16>, vector<4x128xbf16>, vector<2x128xf32> -> vector<2x128xf32>
    %c3_204 = arith.constant 3 : index
    %c0_205 = arith.constant 0 : index
    %c0_206 = arith.constant 0 : index
    %269 = vector.load %arg7[%c3_204, %c0_205, %c0_206] : memref<4x2x4xbf16, #tpu.memory_space<vmem>>, vector<1x2x4xbf16>
    %270 = vector.shape_cast %269 : vector<1x2x4xbf16> to vector<2x4xbf16>
    %271 = arith.truncf %254 : vector<4x128xf32> to vector<4x128xbf16>
    %cst_207 = arith.constant dense<0.000000e+00> : vector<2x128xf32>
    %272 = tpu.matmul %270, %271, %cst_207 {dimension_numbers = #tpu.dot_dimension_numbers<[1], [0], [0], [1], [0, 0, 1, 1], [], []>} : vector<2x4xbf16>, vector<4x128xbf16>, vector<2x128xf32> -> vector<2x128xf32>
    %273 = tpu.concatenate %260, %264, %268, %272 in 1 : vector<2x128xf32>, vector<2x128xf32>, vector<2x128xf32>, vector<2x128xf32> -> vector<2x512xf32>
    %274 = arith.truncf %273 : vector<2x512xf32> to vector<2x512xbf16>
    %cst_208 = arith.constant dense<0.000000e+00> : vector<2x128xf32>
    %275 = tpu.matmul %274, %256, %cst_208 {dimension_numbers = #tpu.dot_dimension_numbers<[1], [0], [0], [1], [0, 0, 1, 1], [], []>} : vector<2x512xbf16>, vector<512x128xbf16>, vector<2x128xf32> -> vector<2x128xf32>
    %c0_209 = arith.constant 0 : index
    %c0_210 = arith.constant 0 : index
    %276 = vector.load %arg14[%c0_209, %c0_210] : memref<5x128xf32, #tpu.memory_space<vmem>>, vector<1x128xf32>
    %c0_211 = arith.constant 0 : index
    %c0_212 = arith.constant 0 : index
    %277 = vector.load %arg15[%c0_211, %c0_212] : memref<5x128xf32, #tpu.memory_space<vmem>>, vector<1x128xf32>
    %cst_213 = arith.constant dense<0.000000e+00> : vector<128xf32>
    %278 = vector.multi_reduction <add>, %275, %cst_213 [0] : vector<2x128xf32> to vector<128xf32>
    %279 = vector.shape_cast %278 : vector<128xf32> to vector<1x128xf32>
    %cst_214 = arith.constant 2.000000e+00 : f32
    %280 = vector.broadcast %cst_214 : f32 to vector<1x128xf32>
    %281 = arith.divf %279, %280 : vector<1x128xf32>
    %282 = vector.broadcast %281 : vector<1x128xf32> to vector<2x128xf32>
    %283 = arith.subf %275, %282 : vector<2x128xf32>
    %284 = arith.mulf %283, %283 : vector<2x128xf32>
    %cst_215 = arith.constant dense<0.000000e+00> : vector<128xf32>
    %285 = vector.multi_reduction <add>, %284, %cst_215 [0] : vector<2x128xf32> to vector<128xf32>
    %286 = vector.shape_cast %285 : vector<128xf32> to vector<1x128xf32>
    %cst_216 = arith.constant 2.000000e+00 : f32
    %287 = vector.broadcast %cst_216 : f32 to vector<1x128xf32>
    %288 = arith.divf %286, %287 : vector<1x128xf32>
    %cst_217 = arith.constant 9.99999974E-6 : f32
    %289 = vector.broadcast %cst_217 : f32 to vector<1x128xf32>
    %290 = arith.addf %288, %289 : vector<1x128xf32>
    %291 = math.rsqrt %290 : vector<1x128xf32>
    %292 = vector.broadcast %291 : vector<1x128xf32> to vector<2x128xf32>
    %293 = arith.mulf %283, %292 : vector<2x128xf32>
    %294 = vector.broadcast %276 : vector<1x128xf32> to vector<2x128xf32>
    %295 = arith.mulf %293, %294 : vector<2x128xf32>
    %296 = vector.broadcast %277 : vector<1x128xf32> to vector<2x128xf32>
    %297 = arith.addf %295, %296 : vector<2x128xf32>
    %cst_218 = arith.constant 2.000000e-01 : f32
    %298 = vector.broadcast %cst_218 : f32 to vector<2x128xf32>
    %299 = arith.mulf %298, %297 : vector<2x128xf32>
    %300 = arith.maximumf %297, %299 : vector<2x128xf32>
    %c0_219 = arith.constant 0 : index
    %c0_220 = arith.constant 0 : index
    %c0_221 = arith.constant 0 : index
    %301 = vector.load %arg13[%c0_219, %c0_220, %c0_221] : memref<4x128x128xbf16, #tpu.memory_space<vmem>>, vector<1x128x128xbf16>
    %302 = vector.shape_cast %301 : vector<1x128x128xbf16> to vector<128x128xbf16>
    %303 = arith.truncf %300 : vector<2x128xf32> to vector<2x128xbf16>
    %cst_222 = arith.constant dense<0.000000e+00> : vector<2x128xf32>
    %304 = tpu.matmul %303, %302, %cst_222 {dimension_numbers = #tpu.dot_dimension_numbers<[1], [0], [0], [1], [0, 0, 1, 1], [], []>} : vector<2x128xbf16>, vector<128x128xbf16>, vector<2x128xf32> -> vector<2x128xf32>
    %c1_223 = arith.constant 1 : index
    %c0_224 = arith.constant 0 : index
    %305 = vector.load %arg14[%c1_223, %c0_224] : memref<5x128xf32, #tpu.memory_space<vmem>>, vector<1x128xf32>
    %c1_225 = arith.constant 1 : index
    %c0_226 = arith.constant 0 : index
    %306 = vector.load %arg15[%c1_225, %c0_226] : memref<5x128xf32, #tpu.memory_space<vmem>>, vector<1x128xf32>
    %cst_227 = arith.constant dense<0.000000e+00> : vector<128xf32>
    %307 = vector.multi_reduction <add>, %304, %cst_227 [0] : vector<2x128xf32> to vector<128xf32>
    %308 = vector.shape_cast %307 : vector<128xf32> to vector<1x128xf32>
    %cst_228 = arith.constant 2.000000e+00 : f32
    %309 = vector.broadcast %cst_228 : f32 to vector<1x128xf32>
    %310 = arith.divf %308, %309 : vector<1x128xf32>
    %311 = vector.broadcast %310 : vector<1x128xf32> to vector<2x128xf32>
    %312 = arith.subf %304, %311 : vector<2x128xf32>
    %313 = arith.mulf %312, %312 : vector<2x128xf32>
    %cst_229 = arith.constant dense<0.000000e+00> : vector<128xf32>
    %314 = vector.multi_reduction <add>, %313, %cst_229 [0] : vector<2x128xf32> to vector<128xf32>
    %315 = vector.shape_cast %314 : vector<128xf32> to vector<1x128xf32>
    %cst_230 = arith.constant 2.000000e+00 : f32
    %316 = vector.broadcast %cst_230 : f32 to vector<1x128xf32>
    %317 = arith.divf %315, %316 : vector<1x128xf32>
    %cst_231 = arith.constant 9.99999974E-6 : f32
    %318 = vector.broadcast %cst_231 : f32 to vector<1x128xf32>
    %319 = arith.addf %317, %318 : vector<1x128xf32>
    %320 = math.rsqrt %319 : vector<1x128xf32>
    %321 = vector.broadcast %320 : vector<1x128xf32> to vector<2x128xf32>
    %322 = arith.mulf %312, %321 : vector<2x128xf32>
    %323 = vector.broadcast %305 : vector<1x128xf32> to vector<2x128xf32>
    %324 = arith.mulf %322, %323 : vector<2x128xf32>
    %325 = vector.broadcast %306 : vector<1x128xf32> to vector<2x128xf32>
    %326 = arith.addf %324, %325 : vector<2x128xf32>
    %cst_232 = arith.constant 2.000000e-01 : f32
    %327 = vector.broadcast %cst_232 : f32 to vector<2x128xf32>
    %328 = arith.mulf %327, %326 : vector<2x128xf32>
    %329 = arith.maximumf %326, %328 : vector<2x128xf32>
    %c1_233 = arith.constant 1 : index
    %c0_234 = arith.constant 0 : index
    %c0_235 = arith.constant 0 : index
    %330 = vector.load %arg13[%c1_233, %c0_234, %c0_235] : memref<4x128x128xbf16, #tpu.memory_space<vmem>>, vector<1x128x128xbf16>
    %331 = vector.shape_cast %330 : vector<1x128x128xbf16> to vector<128x128xbf16>
    %332 = arith.truncf %329 : vector<2x128xf32> to vector<2x128xbf16>
    %cst_236 = arith.constant dense<0.000000e+00> : vector<2x128xf32>
    %333 = tpu.matmul %332, %331, %cst_236 {dimension_numbers = #tpu.dot_dimension_numbers<[1], [0], [0], [1], [0, 0, 1, 1], [], []>} : vector<2x128xbf16>, vector<128x128xbf16>, vector<2x128xf32> -> vector<2x128xf32>
    %c2_237 = arith.constant 2 : index
    %c0_238 = arith.constant 0 : index
    %334 = vector.load %arg14[%c2_237, %c0_238] : memref<5x128xf32, #tpu.memory_space<vmem>>, vector<1x128xf32>
    %c2_239 = arith.constant 2 : index
    %c0_240 = arith.constant 0 : index
    %335 = vector.load %arg15[%c2_239, %c0_240] : memref<5x128xf32, #tpu.memory_space<vmem>>, vector<1x128xf32>
    %cst_241 = arith.constant dense<0.000000e+00> : vector<128xf32>
    %336 = vector.multi_reduction <add>, %333, %cst_241 [0] : vector<2x128xf32> to vector<128xf32>
    %337 = vector.shape_cast %336 : vector<128xf32> to vector<1x128xf32>
    %cst_242 = arith.constant 2.000000e+00 : f32
    %338 = vector.broadcast %cst_242 : f32 to vector<1x128xf32>
    %339 = arith.divf %337, %338 : vector<1x128xf32>
    %340 = vector.broadcast %339 : vector<1x128xf32> to vector<2x128xf32>
    %341 = arith.subf %333, %340 : vector<2x128xf32>
    %342 = arith.mulf %341, %341 : vector<2x128xf32>
    %cst_243 = arith.constant dense<0.000000e+00> : vector<128xf32>
    %343 = vector.multi_reduction <add>, %342, %cst_243 [0] : vector<2x128xf32> to vector<128xf32>
    %344 = vector.shape_cast %343 : vector<128xf32> to vector<1x128xf32>
    %cst_244 = arith.constant 2.000000e+00 : f32
    %345 = vector.broadcast %cst_244 : f32 to vector<1x128xf32>
    %346 = arith.divf %344, %345 : vector<1x128xf32>
    %cst_245 = arith.constant 9.99999974E-6 : f32
    %347 = vector.broadcast %cst_245 : f32 to vector<1x128xf32>
    %348 = arith.addf %346, %347 : vector<1x128xf32>
    %349 = math.rsqrt %348 : vector<1x128xf32>
    %350 = vector.broadcast %349 : vector<1x128xf32> to vector<2x128xf32>
    %351 = arith.mulf %341, %350 : vector<2x128xf32>
    %352 = vector.broadcast %334 : vector<1x128xf32> to vector<2x128xf32>
    %353 = arith.mulf %351, %352 : vector<2x128xf32>
    %354 = vector.broadcast %335 : vector<1x128xf32> to vector<2x128xf32>
    %355 = arith.addf %353, %354 : vector<2x128xf32>
    %cst_246 = arith.constant 2.000000e-01 : f32
    %356 = vector.broadcast %cst_246 : f32 to vector<2x128xf32>
    %357 = arith.mulf %356, %355 : vector<2x128xf32>
    %358 = arith.maximumf %355, %357 : vector<2x128xf32>
    %c2_247 = arith.constant 2 : index
    %c0_248 = arith.constant 0 : index
    %c0_249 = arith.constant 0 : index
    %359 = vector.load %arg13[%c2_247, %c0_248, %c0_249] : memref<4x128x128xbf16, #tpu.memory_space<vmem>>, vector<1x128x128xbf16>
    %360 = vector.shape_cast %359 : vector<1x128x128xbf16> to vector<128x128xbf16>
    %361 = arith.truncf %358 : vector<2x128xf32> to vector<2x128xbf16>
    %cst_250 = arith.constant dense<0.000000e+00> : vector<2x128xf32>
    %362 = tpu.matmul %361, %360, %cst_250 {dimension_numbers = #tpu.dot_dimension_numbers<[1], [0], [0], [1], [0, 0, 1, 1], [], []>} : vector<2x128xbf16>, vector<128x128xbf16>, vector<2x128xf32> -> vector<2x128xf32>
    %c3_251 = arith.constant 3 : index
    %c0_252 = arith.constant 0 : index
    %363 = vector.load %arg14[%c3_251, %c0_252] : memref<5x128xf32, #tpu.memory_space<vmem>>, vector<1x128xf32>
    %c3_253 = arith.constant 3 : index
    %c0_254 = arith.constant 0 : index
    %364 = vector.load %arg15[%c3_253, %c0_254] : memref<5x128xf32, #tpu.memory_space<vmem>>, vector<1x128xf32>
    %cst_255 = arith.constant dense<0.000000e+00> : vector<128xf32>
    %365 = vector.multi_reduction <add>, %362, %cst_255 [0] : vector<2x128xf32> to vector<128xf32>
    %366 = vector.shape_cast %365 : vector<128xf32> to vector<1x128xf32>
    %cst_256 = arith.constant 2.000000e+00 : f32
    %367 = vector.broadcast %cst_256 : f32 to vector<1x128xf32>
    %368 = arith.divf %366, %367 : vector<1x128xf32>
    %369 = vector.broadcast %368 : vector<1x128xf32> to vector<2x128xf32>
    %370 = arith.subf %362, %369 : vector<2x128xf32>
    %371 = arith.mulf %370, %370 : vector<2x128xf32>
    %cst_257 = arith.constant dense<0.000000e+00> : vector<128xf32>
    %372 = vector.multi_reduction <add>, %371, %cst_257 [0] : vector<2x128xf32> to vector<128xf32>
    %373 = vector.shape_cast %372 : vector<128xf32> to vector<1x128xf32>
    %cst_258 = arith.constant 2.000000e+00 : f32
    %374 = vector.broadcast %cst_258 : f32 to vector<1x128xf32>
    %375 = arith.divf %373, %374 : vector<1x128xf32>
    %cst_259 = arith.constant 9.99999974E-6 : f32
    %376 = vector.broadcast %cst_259 : f32 to vector<1x128xf32>
    %377 = arith.addf %375, %376 : vector<1x128xf32>
    %378 = math.rsqrt %377 : vector<1x128xf32>
    %379 = vector.broadcast %378 : vector<1x128xf32> to vector<2x128xf32>
    %380 = arith.mulf %370, %379 : vector<2x128xf32>
    %381 = vector.broadcast %363 : vector<1x128xf32> to vector<2x128xf32>
    %382 = arith.mulf %380, %381 : vector<2x128xf32>
    %383 = vector.broadcast %364 : vector<1x128xf32> to vector<2x128xf32>
    %384 = arith.addf %382, %383 : vector<2x128xf32>
    %cst_260 = arith.constant 2.000000e-01 : f32
    %385 = vector.broadcast %cst_260 : f32 to vector<2x128xf32>
    %386 = arith.mulf %385, %384 : vector<2x128xf32>
    %387 = arith.maximumf %384, %386 : vector<2x128xf32>
    %c3_261 = arith.constant 3 : index
    %c0_262 = arith.constant 0 : index
    %c0_263 = arith.constant 0 : index
    %388 = vector.load %arg13[%c3_261, %c0_262, %c0_263] : memref<4x128x128xbf16, #tpu.memory_space<vmem>>, vector<1x128x128xbf16>
    %389 = vector.shape_cast %388 : vector<1x128x128xbf16> to vector<128x128xbf16>
    %390 = arith.truncf %387 : vector<2x128xf32> to vector<2x128xbf16>
    %cst_264 = arith.constant dense<0.000000e+00> : vector<2x128xf32>
    %391 = tpu.matmul %390, %389, %cst_264 {dimension_numbers = #tpu.dot_dimension_numbers<[1], [0], [0], [1], [0, 0, 1, 1], [], []>} : vector<2x128xbf16>, vector<128x128xbf16>, vector<2x128xf32> -> vector<2x128xf32>
    %c4_265 = arith.constant 4 : index
    %c0_266 = arith.constant 0 : index
    %392 = vector.load %arg14[%c4_265, %c0_266] : memref<5x128xf32, #tpu.memory_space<vmem>>, vector<1x128xf32>
    %c4_267 = arith.constant 4 : index
    %c0_268 = arith.constant 0 : index
    %393 = vector.load %arg15[%c4_267, %c0_268] : memref<5x128xf32, #tpu.memory_space<vmem>>, vector<1x128xf32>
    %cst_269 = arith.constant dense<0.000000e+00> : vector<128xf32>
    %394 = vector.multi_reduction <add>, %391, %cst_269 [0] : vector<2x128xf32> to vector<128xf32>
    %395 = vector.shape_cast %394 : vector<128xf32> to vector<1x128xf32>
    %cst_270 = arith.constant 2.000000e+00 : f32
    %396 = vector.broadcast %cst_270 : f32 to vector<1x128xf32>
    %397 = arith.divf %395, %396 : vector<1x128xf32>
    %398 = vector.broadcast %397 : vector<1x128xf32> to vector<2x128xf32>
    %399 = arith.subf %391, %398 : vector<2x128xf32>
    %400 = arith.mulf %399, %399 : vector<2x128xf32>
    %cst_271 = arith.constant dense<0.000000e+00> : vector<128xf32>
    %401 = vector.multi_reduction <add>, %400, %cst_271 [0] : vector<2x128xf32> to vector<128xf32>
    %402 = vector.shape_cast %401 : vector<128xf32> to vector<1x128xf32>
    %cst_272 = arith.constant 2.000000e+00 : f32
    %403 = vector.broadcast %cst_272 : f32 to vector<1x128xf32>
    %404 = arith.divf %402, %403 : vector<1x128xf32>
    %cst_273 = arith.constant 9.99999974E-6 : f32
    %405 = vector.broadcast %cst_273 : f32 to vector<1x128xf32>
    %406 = arith.addf %404, %405 : vector<1x128xf32>
    %407 = math.rsqrt %406 : vector<1x128xf32>
    %408 = vector.broadcast %407 : vector<1x128xf32> to vector<2x128xf32>
    %409 = arith.mulf %399, %408 : vector<2x128xf32>
    %410 = vector.broadcast %392 : vector<1x128xf32> to vector<2x128xf32>
    %411 = arith.mulf %409, %410 : vector<2x128xf32>
    %412 = vector.broadcast %393 : vector<1x128xf32> to vector<2x128xf32>
    %413 = arith.addf %411, %412 : vector<2x128xf32>
    %cst_274 = arith.constant 2.000000e-01 : f32
    %414 = vector.broadcast %cst_274 : f32 to vector<2x128xf32>
    %415 = arith.mulf %414, %413 : vector<2x128xf32>
    %416 = arith.maximumf %413, %415 : vector<2x128xf32>
    %417 = vector.extract_strided_slice %416 {offsets = [0, 0], sizes = [2, 8], strides = [1, 1]} : vector<2x128xf32> to vector<2x8xf32>
    %c0_275 = arith.constant 0 : index
    %c0_276 = arith.constant 0 : index
    %418 = vector.load %arg16[%c0_275, %c0_276] : memref<2x8xf32, #tpu.memory_space<vmem>>, vector<2x8xf32>
    tpu.vector_store %arg16[%c0_275, %c0_276], %417 {strides = array<i32>} : memref<2x8xf32, #tpu.memory_space<vmem>>, vector<2x8xf32>,
    return
  }
}

</mosaic_0001>

<llo_original>
// kernel: d2_forward.1
$region0: #{d2_forward.1}
  #allocation0 [shape = 'u32[]', space=smem, size = 0x4, offset = 0x4, fixed_abs, tag = 'smem constant byte address 0x4 - core index']
  #allocation1 [shape = 'u32[72,128]{1,0:T(1,128)}', space=vmem, size = 0x9000, scoped, tag = 'internal scratch']
  %s0 = inlined_call_operand.vmem [shape: f32[128,192], index: 0, kind: input, shape index: {}]
  %s1 = inlined_call_operand.vmem [shape: bf16[4,64,128], index: 1, kind: input, shape index: {}]
  %s2 = inlined_call_operand.vmem [shape: bf16[4,192,128], index: 2, kind: input, shape index: {}]
  %s3 = inlined_call_operand.hbm [shape: bf16[4,32,64], index: 3, kind: input, shape index: {}]
  %s4 = inlined_call_operand.hbm [shape: bf16[4,16,32], index: 4, kind: input, shape index: {}]
  %s5 = inlined_call_operand.hbm [shape: bf16[4,8,16], index: 5, kind: input, shape index: {}]
  %s6 = inlined_call_operand.hbm [shape: bf16[4,4,8], index: 6, kind: input, shape index: {}]
  %s7 = inlined_call_operand.hbm [shape: bf16[4,2,4], index: 7, kind: input, shape index: {}]
  %s8 = inlined_call_operand.vmem [shape: bf16[5,512,128], index: 8, kind: input, shape index: {}]
  %s9 = inlined_call_operand.vmem [shape: f32[4,128,64], index: 9, kind: input, shape index: {}]
  %s10 = inlined_call_operand.vmem [shape: f32[4,64,128], index: 10, kind: input, shape index: {}]
  %s11 = inlined_call_operand.hbm [shape: f32[4,128], index: 11, kind: input, shape index: {}]
  %s12 = inlined_call_operand.hbm [shape: f32[4,128], index: 12, kind: input, shape index: {}]
  %s13 = inlined_call_operand.vmem [shape: bf16[4,128,128], index: 13, kind: input, shape index: {}]
  %s14 = inlined_call_operand.hbm [shape: f32[5,128], index: 14, kind: input, shape index: {}]
  %s15 = inlined_call_operand.hbm [shape: f32[5,128], index: 15, kind: input, shape index: {}]
  %s16 = inlined_call_operand.hbm [shape: f32[2,8], index: 16, kind: output, shape index: {}]
  %s17 = sld [smem:[#allocation0]]
  $region110: #{d2_forward.1} parent=0
    _
  %s19 = ssub.s32 1, %s17
  %s20 = scalar_select 0, %s19, %s17
  $region1: #{d2_forward.1} parent=0
    #allocation2 [shape = 'u8[32768]{0}', space=vmem, size = 0x8000, scoped, tag = 'input window, operand 3, single buffered']
    #allocation3 [shape = 's32[1]{0}', space=sflag, size = 0x4, scoped, tag = 'scoped memory for d2_forward.1']
    #allocation4 [shape = 's32[1]{0}', space=sflag, size = 0x4, scoped, tag = 'scoped memory for d2_forward.1']
    #allocation5 [shape = 'u8[16384]{0}', space=vmem, size = 0x4000, scoped, tag = 'input window, operand 4, single buffered']
    #allocation6 [shape = 's32[1]{0}', space=sflag, size = 0x4, scoped, tag = 'scoped memory for d2_forward.1']
    #allocation7 [shape = 'u8[8192]{0}', space=vmem, size = 0x2000, scoped, tag = 'input window, operand 5, single buffered']
    #allocation8 [shape = 'u8[4096]{0}', space=vmem, size = 0x1000, scoped, tag = 'input window, operand 6, single buffered']
    #allocation9 [shape = 's32[1]{0}', space=sflag, size = 0x4, scoped, tag = 'scoped memory for d2_forward.1']
    #allocation10 [shape = 'u8[2048]{0}', space=vmem, size = 0x800, scoped, tag = 'input window, operand 7, single buffered']
    #allocation11 [shape = 'u8[2048]{0}', space=vmem, size = 0x800, scoped, tag = 'input window, operand 11, single buffered']
    #allocation12 [shape = 's32[1]{0}', space=sflag, size = 0x4, scoped, tag = 'scoped memory for d2_forward.1']
    #allocation13 [shape = 'u8[2048]{0}', space=vmem, size = 0x800, scoped, tag = 'input window, operand 12, single buffered']
    #allocation14 [shape = 'u8[4096]{0}', space=vmem, size = 0x1000, scoped, tag = 'input window, operand 14, single buffered']
    #allocation15 [shape = 's32[1]{0}', space=sflag, size = 0x4, scoped, tag = 'scoped memory for d2_forward.1']
    #allocation16 [shape = 'u8[4096]{0}', space=vmem, size = 0x1000, scoped, tag = 'input window, operand 15, single buffered']
    #allocation17 [shape = 'u8[1024]{0}', space=vmem, size = 0x400, scoped, tag = 'output window, operand 0, single buffered']
    %21 = vsyncpa [#allocation3], 0
    %22 = vsyncpa [#allocation6], 0
    %23 = vsyncpa [#allocation9], 0
    %24 = vsyncpa [#allocation12], 0
    %25 = vsyncpa [#allocation15], 0
    %26 = vsyncpa [#allocation4], 0
    // Predicated region
    $region2: #{d2_forward.1} parent=1 // pred_check
      _
    $region3: #{d2_forward.1} parent=1 // pred_check_branch
      %28 = sbr.rel (0) target = $region5
    $region4: #{d2_forward.1} parent=1 // pred_region
      _
    $region5: #{d2_forward.1} parent=1 // pred_fallthru
      _
    // Predicated region
    $region6: #{d2_forward.1} parent=1 // pred_check
      _
    $region7: #{d2_forward.1} parent=1 // pred_check_branch
      %30 = sbr.rel (0) target = $region9
    $region8: #{d2_forward.1} parent=1 // pred_region
      _
    $region9: #{d2_forward.1} parent=1 // pred_fallthru
      _
    // Predicated region
    $region10: #{d2_forward.1} parent=1 // pred_check
      _
    $region11: #{d2_forward.1} parent=1 // pred_check_branch
      %32 = sbr.rel (0) target = $region13
    $region12: #{d2_forward.1} parent=1 // pred_region
      _
    $region13: #{d2_forward.1} parent=1 // pred_fallthru
      _
    // Predicated region
    $region14: #{d2_forward.1} parent=1 // pred_check
      _
    $region15: #{d2_forward.1} parent=1 // pred_check_branch
      %34 = sbr.rel (0) target = $region17
    $region16: #{d2_forward.1} parent=1 // pred_region
      %36 = vsyncadd [#allocation3], 0
      %s37 = sshll.u32 %s3, 4
      %s38 = int_to_ptr.hbm [resolvable:$true] %s37
      %s39 = sshll.u32 [#allocation2], 4
      %s40 = int_to_ptr.vmem [resolvable:$true] %s39
      %45 = dma.hbm_to_vmem [thread:$0]  %s38, 1024, %s40, [#allocation3], 64, 64, 4
    $region17: #{d2_forward.1} parent=1 // pred_fallthru
      _
    // Predicated region
    $region18: #{d2_forward.1} parent=1 // pred_check
      _
    $region19: #{d2_forward.1} parent=1 // pred_check_branch
      %47 = sbr.rel (0) target = $region21
    $region20: #{d2_forward.1} parent=1 // pred_region
      %49 = vsyncadd [#allocation6], 0
      %s50 = sshll.u32 %s4, 4
      %s51 = int_to_ptr.hbm [resolvable:$true] %s50
      %s52 = sshll.u32 [#allocation5], 4
      %s53 = int_to_ptr.vmem [resolvable:$true] %s52
      %58 = dma.hbm_to_vmem [thread:$0]  %s51, 512, %s53, [#allocation6], 64, 64, 4
    $region21: #{d2_forward.1} parent=1 // pred_fallthru
      _
    // Predicated region
    $region22: #{d2_forward.1} parent=1 // pred_check
      _
    $region23: #{d2_forward.1} parent=1 // pred_check_branch
      %60 = sbr.rel (0) target = $region25
    $region24: #{d2_forward.1} parent=1 // pred_region
      %62 = vsyncadd [#allocation6], 0
      %s63 = sshll.u32 %s5, 4
      %s64 = int_to_ptr.hbm [resolvable:$true] %s63
      %s65 = sshll.u32 [#allocation7], 4
      %s66 = int_to_ptr.vmem [resolvable:$true] %s65
      %71 = dma.hbm_to_vmem [thread:$0]  %s64, 256, %s66, [#allocation6], 64, 64, 4
    $region25: #{d2_forward.1} parent=1 // pred_fallthru
      _
    // Predicated region
    $region26: #{d2_forward.1} parent=1 // pred_check
      _
    $region27: #{d2_forward.1} parent=1 // pred_check_branch
      %73 = sbr.rel (0) target = $region29
    $region28: #{d2_forward.1} parent=1 // pred_region
      %75 = vsyncadd [#allocation9], 0
      %s76 = sshll.u32 %s6, 4
      %s77 = int_to_ptr.hbm [resolvable:$true] %s76
      %s78 = sshll.u32 [#allocation8], 4
      %s79 = int_to_ptr.vmem [resolvable:$true] %s78
      %84 = dma.hbm_to_vmem [thread:$0]  %s77, 128, %s79, [#allocation9], 32, 32, 2
    $region29: #{d2_forward.1} parent=1 // pred_fallthru
      _
    // Predicated region
    $region30: #{d2_forward.1} parent=1 // pred_check
      _
    $region31: #{d2_forward.1} parent=1 // pred_check_branch
      %86 = sbr.rel (0) target = $region33
    $region32: #{d2_forward.1} parent=1 // pred_region
      %88 = vsyncadd [#allocation9], 0
      %s89 = sshll.u32 %s7, 4
      %s90 = int_to_ptr.hbm [resolvable:$true] %s89
      %s91 = sshll.u32 [#allocation10], 4
      %s92 = int_to_ptr.vmem [resolvable:$true] %s91
      %97 = dma.hbm_to_vmem [thread:$0]  %s90, 64, %s92, [#allocation9], 16, 16, 1
    $region33: #{d2_forward.1} parent=1 // pred_fallthru
      _
    // Predicated region
    $region34: #{d2_forward.1} parent=1 // pred_check
      _
    $region35: #{d2_forward.1} parent=1 // pred_check_branch
      %99 = sbr.rel (0) target = $region37
    $region36: #{d2_forward.1} parent=1 // pred_region
      _
    $region37: #{d2_forward.1} parent=1 // pred_fallthru
      _
    // Predicated region
    $region38: #{d2_forward.1} parent=1 // pred_check
      _
    $region39: #{d2_forward.1} parent=1 // pred_check_branch
      %101 = sbr.rel (0) target = $region41
    $region40: #{d2_forward.1} parent=1 // pred_region
      _
    $region41: #{d2_forward.1} parent=1 // pred_fallthru
      _
    // Predicated region
    $region42: #{d2_forward.1} parent=1 // pred_check
      _
    $region43: #{d2_forward.1} parent=1 // pred_check_branch
      %103 = sbr.rel (0) target = $region45
    $region44: #{d2_forward.1} parent=1 // pred_region
      _
    $region45: #{d2_forward.1} parent=1 // pred_fallthru
      _
    // Predicated region
    $region46: #{d2_forward.1} parent=1 // pred_check
      _
    $region47: #{d2_forward.1} parent=1 // pred_check_branch
      %105 = sbr.rel (0) target = $region49
    $region48: #{d2_forward.1} parent=1 // pred_region
      %107 = vsyncadd [#allocation12], 0
      %s109 = sshll.u32 %s11, 4
      %s110 = int_to_ptr.hbm [resolvable:$true] %s109
      %s111 = sshll.u32 [#allocation11], 4
      %s112 = int_to_ptr.vmem [resolvable:$true] %s111
      %114 = dma.hbm_to_vmem [thread:$0]  %s110, 64, %s112, [#allocation12]
    $region49: #{d2_forward.1} parent=1 // pred_fallthru
      _
    // Predicated region
    $region50: #{d2_forward.1} parent=1 // pred_check
      _
    $region51: #{d2_forward.1} parent=1 // pred_check_branch
      %116 = sbr.rel (0) target = $region53
    $region52: #{d2_forward.1} parent=1 // pred_region
      %118 = vsyncadd [#allocation12], 0
      %s120 = sshll.u32 %s12, 4
      %s121 = int_to_ptr.hbm [resolvable:$true] %s120
      %s122 = sshll.u32 [#allocation13], 4
      %s123 = int_to_ptr.vmem [resolvable:$true] %s122
      %125 = dma.hbm_to_vmem [thread:$0]  %s121, 64, %s123, [#allocation12]
    $region53: #{d2_forward.1} parent=1 // pred_fallthru
      _
    // Predicated region
    $region54: #{d2_forward.1} parent=1 // pred_check
      _
    $region55: #{d2_forward.1} parent=1 // pred_check_branch
      %127 = sbr.rel (0) target = $region57
    $region56: #{d2_forward.1} parent=1 // pred_region
      _
    $region57: #{d2_forward.1} parent=1 // pred_fallthru
      _
    // Predicated region
    $region58: #{d2_forward.1} parent=1 // pred_check
      _
    $region59: #{d2_forward.1} parent=1 // pred_check_branch
      %129 = sbr.rel (0) target = $region61
    $region60: #{d2_forward.1} parent=1 // pred_region
      %131 = vsyncadd [#allocation15], 0
      %s133 = sshll.u32 %s14, 4
      %s134 = int_to_ptr.hbm [resolvable:$true] %s133
      %s135 = sshll.u32 [#allocation14], 4
      %s136 = int_to_ptr.vmem [resolvable:$true] %s135
      %138 = dma.hbm_to_vmem [thread:$0]  %s134, 128, %s136, [#allocation15]
    $region61: #{d2_forward.1} parent=1 // pred_fallthru
      _
    // Predicated region
    $region62: #{d2_forward.1} parent=1 // pred_check
      _
    $region63: #{d2_forward.1} parent=1 // pred_check_branch
      %140 = sbr.rel (0) target = $region65
    $region64: #{d2_forward.1} parent=1 // pred_region
      %142 = vsyncadd [#allocation15], 0
      %s144 = sshll.u32 %s15, 4
      %s145 = int_to_ptr.hbm [resolvable:$true] %s144
      %s146 = sshll.u32 [#allocation16], 4
      %s147 = int_to_ptr.vmem [resolvable:$true] %s146
      %149 = dma.hbm_to_vmem [thread:$0]  %s145, 128, %s147, [#allocation15]
    $region65: #{d2_forward.1} parent=1 // pred_fallthru
      _
    // Predicated region
    $region66: #{d2_forward.1} parent=1 // pred_check
      _
    $region67: #{d2_forward.1} parent=1 // pred_check_branch
      %151 = sbr.rel (0) target = $region69
    $region68: #{d2_forward.1} parent=1 // pred_region
      %153 = dma.done [#allocation3], 1024
    $region69: #{d2_forward.1} parent=1 // pred_fallthru
      _
    // Predicated region
    $region70: #{d2_forward.1} parent=1 // pred_check
      _
    $region71: #{d2_forward.1} parent=1 // pred_check_branch
      %155 = sbr.rel (0) target = $region73
    $region72: #{d2_forward.1} parent=1 // pred_region
      %157 = dma.done [#allocation6], 512
    $region73: #{d2_forward.1} parent=1 // pred_fallthru
      _
    // Predicated region
    $region74: #{d2_forward.1} parent=1 // pred_check
      _
    $region75: #{d2_forward.1} parent=1 // pred_check_branch
      %159 = sbr.rel (0) target = $region77
    $region76: #{d2_forward.1} parent=1 // pred_region
      %161 = dma.done [#allocation6], 256
    $region77: #{d2_forward.1} parent=1 // pred_fallthru
      _
    // Predicated region
    $region78: #{d2_forward.1} parent=1 // pred_check
      _
    $region79: #{d2_forward.1} parent=1 // pred_check_branch
      %163 = sbr.rel (0) target = $region81
    $region80: #{d2_forward.1} parent=1 // pred_region
      %165 = dma.done [#allocation9], 128
    $region81: #{d2_forward.1} parent=1 // pred_fallthru
      _
    // Predicated region
    $region82: #{d2_forward.1} parent=1 // pred_check
      _
    $region83: #{d2_forward.1} parent=1 // pred_check_branch
      %167 = sbr.rel (0) target = $region85
    $region84: #{d2_forward.1} parent=1 // pred_region
      %169 = dma.done [#allocation9], 64
    $region85: #{d2_forward.1} parent=1 // pred_fallthru
      _
    // Predicated region
    $region86: #{d2_forward.1} parent=1 // pred_check
      _
    $region87: #{d2_forward.1} parent=1 // pred_check_branch
      %171 = sbr.rel (0) target = $region89
    $region88: #{d2_forward.1} parent=1 // pred_region
      %173 = dma.done [#allocation12], 64
    $region89: #{d2_forward.1} parent=1 // pred_fallthru
      _
    // Predicated region
    $region90: #{d2_forward.1} parent=1 // pred_check
      _
    $region91: #{d2_forward.1} parent=1 // pred_check_branch
      %175 = sbr.rel (0) target = $region93
    $region92: #{d2_forward.1} parent=1 // pred_region
      %177 = dma.done [#allocation12], 64
    $region93: #{d2_forward.1} parent=1 // pred_fallthru
      _
    // Predicated region
    $region94: #{d2_forward.1} parent=1 // pred_check
      _
    $region95: #{d2_forward.1} parent=1 // pred_check_branch
      %179 = sbr.rel (0) target = $region97
    $region96: #{d2_forward.1} parent=1 // pred_region
      %181 = dma.done [#allocation15], 128
    $region97: #{d2_forward.1} parent=1 // pred_fallthru
      _
    // Predicated region
    $region98: #{d2_forward.1} parent=1 // pred_check
      _
    $region99: #{d2_forward.1} parent=1 // pred_check_branch
      %183 = sbr.rel (0) target = $region101
    $region100: #{d2_forward.1} parent=1 // pred_region
      %185 = dma.done [#allocation15], 128
    $region101: #{d2_forward.1} parent=1 // pred_fallthru
      _
    %v187 = vld [vmem:[%s0] sm:$0xff]
    %v188 = vld [vmem:[%s0 + $0x8] sm:$0xff]
    %v189 = vld [vmem:[%s0 + $0x10] sm:$0xff]
    %v190 = vld [vmem:[%s0 + $0x18] sm:$0xff]
    %v191 = vld [vmem:[%s0 + $0x20] sm:$0xff]
    %v192 = vld [vmem:[%s0 + $0x28] sm:$0xff]
    %v193 = vld [vmem:[%s0 + $0x30] sm:$0xff]
    %v194 = vld [vmem:[%s0 + $0x38] sm:$0xff]
    %v195 = vld [vmem:[%s0 + $0x40] sm:$0xff]
    %v196 = vld [vmem:[%s0 + $0x48] sm:$0xff]
    %v197 = vld [vmem:[%s0 + $0x50] sm:$0xff]
    %v198 = vld [vmem:[%s0 + $0x58] sm:$0xff]
    %v199 = vld [vmem:[%s0 + $0x60] sm:$0xff]
    %v200 = vld [vmem:[%s0 + $0x68] sm:$0xff]
    %v201 = vld [vmem:[%s0 + $0x70] sm:$0xff]
    %v202 = vld [vmem:[%s0 + $0x78] sm:$0xff]
    %v203 = vld [vmem:[%s0 + $0x80] sm:$0xff]
    %v204 = vld [vmem:[%s0 + $0x88] sm:$0xff]
    %v205 = vld [vmem:[%s0 + $0x90] sm:$0xff]
    %v206 = vld [vmem:[%s0 + $0x98] sm:$0xff]
    %v207 = vld [vmem:[%s0 + $0xa0] sm:$0xff]
    %v208 = vld [vmem:[%s0 + $0xa8] sm:$0xff]
    %v209 = vld [vmem:[%s0 + $0xb0] sm:$0xff]
    %v210 = vld [vmem:[%s0 + $0xb8] sm:$0xff]
    %v211 = vld [vmem:[%s0 + $0xc0] sm:$0xff]
    %v212 = vld [vmem:[%s0 + $0xc8] sm:$0xff]
    %v213 = vld [vmem:[%s0 + $0xd0] sm:$0xff]
    %v214 = vld [vmem:[%s0 + $0xd8] sm:$0xff]
    %v215 = vld [vmem:[%s0 + $0xe0] sm:$0xff]
    %v216 = vld [vmem:[%s0 + $0xe8] sm:$0xff]
    %v217 = vld [vmem:[%s0 + $0xf0] sm:$0xff]
    %v218 = vld [vmem:[%s0 + $0xf8] sm:$0xff]
    %v219 = vld [vmem:[%s1] sm:$0xf]
    %v220 = vld [vmem:[%s1 + $0x4] sm:$0xf]
    %v221 = vld [vmem:[%s1 + $0x8] sm:$0xf]
    %v222 = vld [vmem:[%s1 + $0xc] sm:$0xf]
    %v223 = vld [vmem:[%s1 + $0x10] sm:$0xf]
    %v224 = vld [vmem:[%s1 + $0x14] sm:$0xf]
    %v225 = vld [vmem:[%s1 + $0x18] sm:$0xf]
    %v226 = vld [vmem:[%s1 + $0x1c] sm:$0xf]
    %v227 = vpack.c.bf16 %v189, %v187
    %v228 = vpack.c.bf16 %v190, %v188
    %v229 = vpack.c.bf16 %v193, %v191
    %v230 = vpack.c.bf16 %v194, %v192
    %v231 = vpack.c.bf16 %v197, %v195
    %v232 = vpack.c.bf16 %v198, %v196
    %v233 = vpack.c.bf16 %v201, %v199
    %v234 = vpack.c.bf16 %v202, %v200
    %v235 = vpack.c.bf16 %v205, %v203
    %v236 = vpack.c.bf16 %v206, %v204
    %v237 = vpack.c.bf16 %v209, %v207
    %v238 = vpack.c.bf16 %v210, %v208
    %v239 = vpack.c.bf16 %v213, %v211
    %v240 = vpack.c.bf16 %v214, %v212
    %v241 = vpack.c.bf16 %v217, %v215
    %v242 = vpack.c.bf16 %v218, %v216
    %v251 = vunpack.c.l.b16 %v219
    %v252 = vunpack.c.l.b16 %v220
    %v253 = vunpack.c.l.b16 %v221
    %v254 = vunpack.c.l.b16 %v222
    %v255 = vunpack.c.l.b16 %v223
    %v256 = vunpack.c.l.b16 %v224
    %v257 = vunpack.c.l.b16 %v225
    %v258 = vunpack.c.l.b16 %v226
    %v259 = vpack.c.b16 %v252, %v251
    %v260 = vpack.c.b16 %v254, %v253
    %v261 = vpack.c.b16 %v256, %v255
    %v262 = vpack.c.b16 %v258, %v257
    %267 = vmatpush.bf16.msra.mxu0 %v241
    %268 = vmatpush.bf16.msra.mxu0 %v239
    %269 = vmatpush.bf16.msra.mxu0 %v237
    %270 = vmatpush.bf16.msra.mxu0 %v235
    %271 = vmatpush.bf16.msra.mxu0 %v233
    %272 = vmatpush.bf16.msra.mxu0 %v231
    %273 = vmatpush.bf16.msra.mxu0 %v229
    %274 = vmatpush.bf16.msra.mxu0 %v227
    %275 = vmatmul.bf16.gmra.mxu0 %v259
    %v276 = vpop.f32.mrf.mxu0
    %v277 = vadd.f32 0.0, %v276
    %v278 = vpop.f32.mrf.mxu0
    %v279 = vadd.f32 0.0, %v278
    %280 = vmatmul.bf16.gmra.mxu0 %v260
    %v281 = vpop.f32.mrf.mxu0
    %v282 = vadd.f32 0.0, %v281
    %v283 = vpop.f32.mrf.mxu0
    %v284 = vadd.f32 0.0, %v283
    %285 = vmatmul.bf16.gmra.mxu0 %v261
    %v286 = vpop.f32.mrf.mxu0
    %v287 = vadd.f32 0.0, %v286
    %v288 = vpop.f32.mrf.mxu0
    %v289 = vadd.f32 0.0, %v288
    %290 = vmatmul.bf16.gmra.mxu0 %v262
    %v291 = vpop.f32.mrf.mxu0
    %v292 = vadd.f32 0.0, %v291
    %v293 = vpop.f32.mrf.mxu0
    %v294 = vadd.f32 0.0, %v293
    %295 = vdwg.mxu0
    %296 = vmatpush.bf16.msra.mxu0 %v242
    %297 = vmatpush.bf16.msra.mxu0 %v240
    %298 = vmatpush.bf16.msra.mxu0 %v238
    %299 = vmatpush.bf16.msra.mxu0 %v236
    %300 = vmatpush.bf16.msra.mxu0 %v234
    %301 = vmatpush.bf16.msra.mxu0 %v232
    %302 = vmatpush.bf16.msra.mxu0 %v230
    %303 = vmatpush.bf16.msra.mxu0 %v228
    %304 = vmatmul.bf16.gmra.mxu0 %v259
    %v305 = vpop.f32.mrf.mxu0
    %v306 = vadd.f32 0.0, %v305
    %v307 = vpop.f32.mrf.mxu0
    %v308 = vadd.f32 0.0, %v307
    %309 = vmatmul.bf16.gmra.mxu0 %v260
    %v310 = vpop.f32.mrf.mxu0
    %v311 = vadd.f32 0.0, %v310
    %v312 = vpop.f32.mrf.mxu0
    %v313 = vadd.f32 0.0, %v312
    %314 = vmatmul.bf16.gmra.mxu0 %v261
    %v315 = vpop.f32.mrf.mxu0
    %v316 = vadd.f32 0.0, %v315
    %v317 = vpop.f32.mrf.mxu0
    %v318 = vadd.f32 0.0, %v317
    %319 = vmatmul.bf16.gmra.mxu0 %v262
    %v320 = vpop.f32.mrf.mxu0
    %v321 = vadd.f32 0.0, %v320
    %v322 = vpop.f32.mrf.mxu0
    %v323 = vadd.f32 0.0, %v322
    %324 = vdwg.mxu0
    %v325 = vld [vmem:[%s2] sm:$0xf]
    %v326 = vld [vmem:[%s2 + $0x4] sm:$0xf]
    %v327 = vld [vmem:[%s2 + $0x8] sm:$0xf]
    %v328 = vld [vmem:[%s2 + $0xc] sm:$0xf]
    %v329 = vld [vmem:[%s2 + $0x10] sm:$0xf]
    %v330 = vld [vmem:[%s2 + $0x14] sm:$0xf]
    %v331 = vld [vmem:[%s2 + $0x18] sm:$0xf]
    %v332 = vld [vmem:[%s2 + $0x1c] sm:$0xf]
    %v333 = vld [vmem:[%s2 + $0x20] sm:$0xf]
    %v334 = vld [vmem:[%s2 + $0x24] sm:$0xf]
    %v335 = vld [vmem:[%s2 + $0x28] sm:$0xf]
    %v336 = vld [vmem:[%s2 + $0x2c] sm:$0xf]
    %v337 = vld [vmem:[%s2 + $0x30] sm:$0xf]
    %v338 = vld [vmem:[%s2 + $0x34] sm:$0xf]
    %v339 = vld [vmem:[%s2 + $0x38] sm:$0xf]
    %v340 = vld [vmem:[%s2 + $0x3c] sm:$0xf]
    %v341 = vld [vmem:[%s2 + $0x40] sm:$0xf]
    %v342 = vld [vmem:[%s2 + $0x44] sm:$0xf]
    %v343 = vld [vmem:[%s2 + $0x48] sm:$0xf]
    %v344 = vld [vmem:[%s2 + $0x4c] sm:$0xf]
    %v345 = vld [vmem:[%s2 + $0x50] sm:$0xf]
    %v346 = vld [vmem:[%s2 + $0x54] sm:$0xf]
    %v347 = vld [vmem:[%s2 + $0x58] sm:$0xf]
    %v348 = vld [vmem:[%s2 + $0x5c] sm:$0xf]
    %v349 = vpack.c.bf16 %v279, %v277
    %v350 = vpack.c.bf16 %v308, %v306
    %v351 = vpack.c.bf16 %v284, %v282
    %v352 = vpack.c.bf16 %v313, %v311
    %v353 = vpack.c.bf16 %v289, %v287
    %v354 = vpack.c.bf16 %v318, %v316
    %v355 = vpack.c.bf16 %v294, %v292
    %v356 = vpack.c.bf16 %v323, %v321
    %s357 = scalar_lea.vmem %s1, 32
    %v358 = vld [vmem:[%s357] sm:$0xf]
    %v359 = vld [vmem:[%s357 + $0x4] sm:$0xf]
    %v360 = vld [vmem:[%s357 + $0x8] sm:$0xf]
    %v361 = vld [vmem:[%s357 + $0xc] sm:$0xf]
    %v362 = vld [vmem:[%s357 + $0x10] sm:$0xf]
    %v363 = vld [vmem:[%s357 + $0x14] sm:$0xf]
    %v364 = vld [vmem:[%s357 + $0x18] sm:$0xf]
    %v365 = vld [vmem:[%s357 + $0x1c] sm:$0xf]
    %v374 = vunpack.c.l.b16 %v358
    %v375 = vunpack.c.l.b16 %v359
    %v376 = vunpack.c.l.b16 %v360
    %v377 = vunpack.c.l.b16 %v361
    %v378 = vunpack.c.l.b16 %v362
    %v379 = vunpack.c.l.b16 %v363
    %v380 = vunpack.c.l.b16 %v364
    %v381 = vunpack.c.l.b16 %v365
    %v382 = vpack.c.b16 %v375, %v374
    %v383 = vpack.c.b16 %v377, %v376
    %v384 = vpack.c.b16 %v379, %v378
    %v385 = vpack.c.b16 %v381, %v380
    %390 = vmatpush.bf16.msra.mxu0 %v241
    %391 = vmatpush.bf16.msra.mxu0 %v239
    %392 = vmatpush.bf16.msra.mxu0 %v237
    %393 = vmatpush.bf16.msra.mxu0 %v235
    %394 = vmatpush.bf16.msra.mxu0 %v233
    %395 = vmatpush.bf16.msra.mxu0 %v231
    %396 = vmatpush.bf16.msra.mxu0 %v229
    %397 = vmatpush.bf16.msra.mxu0 %v227
    %398 = vmatmul.bf16.gmra.mxu0 %v382
    %v399 = vpop.f32.mrf.mxu0
    %v400 = vadd.f32 0.0, %v399
    %v401 = vpop.f32.mrf.mxu0
    %v402 = vadd.f32 0.0, %v401
    %403 = vmatmul.bf16.gmra.mxu0 %v383
    %v404 = vpop.f32.mrf.mxu0
    %v405 = vadd.f32 0.0, %v404
    %v406 = vpop.f32.mrf.mxu0
    %v407 = vadd.f32 0.0, %v406
    %408 = vmatmul.bf16.gmra.mxu0 %v384
    %v409 = vpop.f32.mrf.mxu0
    %v410 = vadd.f32 0.0, %v409
    %v411 = vpop.f32.mrf.mxu0
    %v412 = vadd.f32 0.0, %v411
    %413 = vmatmul.bf16.gmra.mxu0 %v385
    %v414 = vpop.f32.mrf.mxu0
    %v415 = vadd.f32 0.0, %v414
    %v416 = vpop.f32.mrf.mxu0
    %v417 = vadd.f32 0.0, %v416
    %418 = vdwg.mxu0
    %419 = vmatpush.bf16.msra.mxu0 %v242
    %420 = vmatpush.bf16.msra.mxu0 %v240
    %421 = vmatpush.bf16.msra.mxu0 %v238
    %422 = vmatpush.bf16.msra.mxu0 %v236
    %423 = vmatpush.bf16.msra.mxu0 %v234
    %424 = vmatpush.bf16.msra.mxu0 %v232
    %425 = vmatpush.bf16.msra.mxu0 %v230
    %426 = vmatpush.bf16.msra.mxu0 %v228
    %427 = vmatmul.bf16.gmra.mxu0 %v382
    %v428 = vpop.f32.mrf.mxu0
    %v429 = vadd.f32 0.0, %v428
    %v430 = vpop.f32.mrf.mxu0
    %v431 = vadd.f32 0.0, %v430
    %432 = vmatmul.bf16.gmra.mxu0 %v383
    %v433 = vpop.f32.mrf.mxu0
    %v434 = vadd.f32 0.0, %v433
    %v435 = vpop.f32.mrf.mxu0
    %v436 = vadd.f32 0.0, %v435
    %437 = vmatmul.bf16.gmra.mxu0 %v384
    %v438 = vpop.f32.mrf.mxu0
    %v439 = vadd.f32 0.0, %v438
    %v440 = vpop.f32.mrf.mxu0
    %v441 = vadd.f32 0.0, %v440
    %442 = vmatmul.bf16.gmra.mxu0 %v385
    %v443 = vpop.f32.mrf.mxu0
    %v444 = vadd.f32 0.0, %v443
    %v445 = vpop.f32.mrf.mxu0
    %v446 = vadd.f32 0.0, %v445
    %447 = vdwg.mxu0
    %s448 = scalar_lea.vmem %s2, 96
    %v449 = vld [vmem:[%s448] sm:$0xf]
    %v450 = vld [vmem:[%s448 + $0x4] sm:$0xf]
    %v451 = vld [vmem:[%s448 + $0x8] sm:$0xf]
    %v452 = vld [vmem:[%s448 + $0xc] sm:$0xf]
    %v453 = vld [vmem:[%s448 + $0x10] sm:$0xf]
    %v454 = vld [vmem:[%s448 + $0x14] sm:$0xf]
    %v455 = vld [vmem:[%s448 + $0x18] sm:$0xf]
    %v456 = vld [vmem:[%s448 + $0x1c] sm:$0xf]
    %v457 = vld [vmem:[%s448 + $0x20] sm:$0xf]
    %v458 = vld [vmem:[%s448 + $0x24] sm:$0xf]
    %v459 = vld [vmem:[%s448 + $0x28] sm:$0xf]
    %v460 = vld [vmem:[%s448 + $0x2c] sm:$0xf]
    %v461 = vld [vmem:[%s448 + $0x30] sm:$0xf]
    %v462 = vld [vmem:[%s448 + $0x34] sm:$0xf]
    %v463 = vld [vmem:[%s448 + $0x38] sm:$0xf]
    %v464 = vld [vmem:[%s448 + $0x3c] sm:$0xf]
    %v465 = vld [vmem:[%s448 + $0x40] sm:$0xf]
    %v466 = vld [vmem:[%s448 + $0x44] sm:$0xf]
    %v467 = vld [vmem:[%s448 + $0x48] sm:$0xf]
    %v468 = vld [vmem:[%s448 + $0x4c] sm:$0xf]
    %v469 = vld [vmem:[%s448 + $0x50] sm:$0xf]
    %v470 = vld [vmem:[%s448 + $0x54] sm:$0xf]
    %v471 = vld [vmem:[%s448 + $0x58] sm:$0xf]
    %v472 = vld [vmem:[%s448 + $0x5c] sm:$0xf]
    %v473 = vpack.c.bf16 %v402, %v400
    %v474 = vpack.c.bf16 %v431, %v429
    %v475 = vpack.c.bf16 %v407, %v405
    %v476 = vpack.c.bf16 %v436, %v434
    %v477 = vpack.c.bf16 %v412, %v410
    %v478 = vpack.c.bf16 %v441, %v439
    %v479 = vpack.c.bf16 %v417, %v415
    %v480 = vpack.c.bf16 %v446, %v444
    %v505 = vunpack.c.l.b16 %v449
    %v506 = vunpack.c.l.b16 %v450
    %v507 = vunpack.c.l.b16 %v451
    %v508 = vunpack.c.l.b16 %v452
    %v509 = vunpack.c.l.b16 %v453
    %v510 = vunpack.c.l.b16 %v454
    %v511 = vunpack.c.l.b16 %v455
    %v512 = vunpack.c.l.b16 %v456
    %v513 = vunpack.c.l.b16 %v457
    %v514 = vunpack.c.l.b16 %v458
    %v515 = vunpack.c.l.b16 %v459
    %v516 = vunpack.c.l.b16 %v460
    %v517 = vunpack.c.l.b16 %v461
    %v518 = vunpack.c.l.b16 %v462
    %v519 = vunpack.c.l.b16 %v463
    %v520 = vunpack.c.l.b16 %v464
    %v521 = vunpack.c.l.b16 %v465
    %v522 = vunpack.c.l.b16 %v466
    %v523 = vunpack.c.l.b16 %v467
    %v524 = vunpack.c.l.b16 %v468
    %v525 = vunpack.c.l.b16 %v469
    %v526 = vunpack.c.l.b16 %v470
    %v527 = vunpack.c.l.b16 %v471
    %v528 = vunpack.c.l.b16 %v472
    %v529 = vpack.c.b16 %v506, %v505
    %v530 = vpack.c.b16 %v508, %v507
    %v531 = vpack.c.b16 %v510, %v509
    %v532 = vpack.c.b16 %v512, %v511
    %v533 = vpack.c.b16 %v514, %v513
    %v534 = vpack.c.b16 %v516, %v515
    %v535 = vpack.c.b16 %v518, %v517
    %v536 = vpack.c.b16 %v520, %v519
    %v537 = vpack.c.b16 %v522, %v521
    %v538 = vpack.c.b16 %v524, %v523
    %v539 = vpack.c.b16 %v526, %v525
    %v540 = vpack.c.b16 %v528, %v527
    %vm553 = vcmask 523264
    %v555 = vsel %vm553, %v474, 0
    %v558 = vsel %vm553, %v476, 0
    %v561 = vsel %vm553, %v478, 0
    %v564 = vsel %vm553, %v480, 0
    %566 = vmatpush.bf16.msra.mxu0 %v536
    %567 = vmatpush.bf16.msra.mxu0 %v535
    %568 = vmatpush.bf16.msra.mxu0 %v534
    %569 = vmatpush.bf16.msra.mxu0 %v533
    %570 = vmatpush.bf16.msra.mxu0 %v532
    %571 = vmatpush.bf16.msra.mxu0 %v531
    %572 = vmatpush.bf16.msra.mxu0 %v530
    %573 = vmatpush.bf16.msra.mxu0 %v529
    %574 = vmatmul.bf16.gmra.mxu0 %v473
    %v575 = vpop.f32.mrf.mxu0
    %v576 = vadd.f32 0.0, %v575
    %v577 = vpop.f32.mrf.mxu0
    %v578 = vadd.f32 0.0, %v577
    %579 = vmatmul.bf16.gmra.mxu0 %v475
    %v580 = vpop.f32.mrf.mxu0
    %v581 = vadd.f32 0.0, %v580
    %v582 = vpop.f32.mrf.mxu0
    %v583 = vadd.f32 0.0, %v582
    %584 = vmatmul.bf16.gmra.mxu0 %v477
    %v585 = vpop.f32.mrf.mxu0
    %v586 = vadd.f32 0.0, %v585
    %v587 = vpop.f32.mrf.mxu0
    %v588 = vadd.f32 0.0, %v587
    %589 = vmatmul.bf16.gmra.mxu0 %v479
    %v590 = vpop.f32.mrf.mxu0
    %v591 = vadd.f32 0.0, %v590
    %v592 = vpop.f32.mrf.mxu0
    %v593 = vadd.f32 0.0, %v592
    %594 = vdwg.mxu0
    %595 = vmatpush.bf16.msra.mxu0 0
    %596 = vmatpush.bf16.msra.mxu0 0
    %597 = vmatpush.bf16.msra.mxu0 0
    %598 = vmatpush.bf16.msra.mxu0 0
    %599 = vmatpush.bf16.msra.mxu0 %v540
    %600 = vmatpush.bf16.msra.mxu0 %v539
    %601 = vmatpush.bf16.msra.mxu0 %v538
    %602 = vmatpush.bf16.msra.mxu0 %v537
    %603 = vmatmul.bf16.gmra.mxu0 %v555
    %v604 = vpop.f32.mrf.mxu0
    %v605 = vadd.f32 %v576, %v604
    %v606 = vpop.f32.mrf.mxu0
    %v607 = vadd.f32 %v578, %v606
    %608 = vmatmul.bf16.gmra.mxu0 %v558
    %v609 = vpop.f32.mrf.mxu0
    %v610 = vadd.f32 %v581, %v609
    %v611 = vpop.f32.mrf.mxu0
    %v612 = vadd.f32 %v583, %v611
    %613 = vmatmul.bf16.gmra.mxu0 %v561
    %v614 = vpop.f32.mrf.mxu0
    %v615 = vadd.f32 %v586, %v614
    %v616 = vpop.f32.mrf.mxu0
    %v617 = vadd.f32 %v588, %v616
    %618 = vmatmul.bf16.gmra.mxu0 %v564
    %v619 = vpop.f32.mrf.mxu0
    %v620 = vadd.f32 %v591, %v619
    %v621 = vpop.f32.mrf.mxu0
    %v622 = vadd.f32 %v593, %v621
    %623 = vdwg.mxu0
    %v648 = vunpack.c.l.b16 %v325
    %v649 = vunpack.c.l.b16 %v326
    %v650 = vunpack.c.l.b16 %v327
    %v651 = vunpack.c.l.b16 %v328
    %v652 = vunpack.c.l.b16 %v329
    %v653 = vunpack.c.l.b16 %v330
    %v654 = vunpack.c.l.b16 %v331
    %v655 = vunpack.c.l.b16 %v332
    %v656 = vunpack.c.l.b16 %v333
    %v657 = vunpack.c.l.b16 %v334
    %v658 = vunpack.c.l.b16 %v335
    %v659 = vunpack.c.l.b16 %v336
    %v660 = vunpack.c.l.b16 %v337
    %v661 = vunpack.c.l.b16 %v338
    %v662 = vunpack.c.l.b16 %v339
    %v663 = vunpack.c.l.b16 %v340
    %v664 = vunpack.c.l.b16 %v341
    %v665 = vunpack.c.l.b16 %v342
    %v666 = vunpack.c.l.b16 %v343
    %v667 = vunpack.c.l.b16 %v344
    %v668 = vunpack.c.l.b16 %v345
    %v669 = vunpack.c.l.b16 %v346
    %v670 = vunpack.c.l.b16 %v347
    %v671 = vunpack.c.l.b16 %v348
    %v672 = vpack.c.b16 %v649, %v648
    %v673 = vpack.c.b16 %v651, %v650
    %v674 = vpack.c.b16 %v653, %v652
    %v675 = vpack.c.b16 %v655, %v654
    %v676 = vpack.c.b16 %v657, %v656
    %v677 = vpack.c.b16 %v659, %v658
    %v678 = vpack.c.b16 %v661, %v660
    %v679 = vpack.c.b16 %v663, %v662
    %v680 = vpack.c.b16 %v665, %v664
    %v681 = vpack.c.b16 %v667, %v666
    %v682 = vpack.c.b16 %v669, %v668
    %v683 = vpack.c.b16 %v671, %v670
    %v697 = vsel %vm553, %v350, 0
    %v700 = vsel %vm553, %v352, 0
    %v703 = vsel %vm553, %v354, 0
    %v706 = vsel %vm553, %v356, 0
    %708 = vmatpush.bf16.msra.mxu0 %v679
    %709 = vmatpush.bf16.msra.mxu0 %v678
    %710 = vmatpush.bf16.msra.mxu0 %v677
    %711 = vmatpush.bf16.msra.mxu0 %v676
    %712 = vmatpush.bf16.msra.mxu0 %v675
    %713 = vmatpush.bf16.msra.mxu0 %v674
    %714 = vmatpush.bf16.msra.mxu0 %v673
    %715 = vmatpush.bf16.msra.mxu0 %v672
    %716 = vmatmul.bf16.gmra.mxu0 %v349
    %v717 = vpop.f32.mrf.mxu0
    %v718 = vadd.f32 %v605, %v717
    %v719 = vpop.f32.mrf.mxu0
    %v720 = vadd.f32 %v607, %v719
    %721 = vmatmul.bf16.gmra.mxu0 %v351
    %v722 = vpop.f32.mrf.mxu0
    %v723 = vadd.f32 %v610, %v722
    %v724 = vpop.f32.mrf.mxu0
    %v725 = vadd.f32 %v612, %v724
    %726 = vmatmul.bf16.gmra.mxu0 %v353
    %v727 = vpop.f32.mrf.mxu0
    %v728 = vadd.f32 %v615, %v727
    %v729 = vpop.f32.mrf.mxu0
    %v730 = vadd.f32 %v617, %v729
    %731 = vmatmul.bf16.gmra.mxu0 %v355
    %v732 = vpop.f32.mrf.mxu0
    %v733 = vadd.f32 %v620, %v732
    %v734 = vpop.f32.mrf.mxu0
    %v735 = vadd.f32 %v622, %v734
    %736 = vdwg.mxu0
    %737 = vmatpush.bf16.msra.mxu0 0
    %738 = vmatpush.bf16.msra.mxu0 0
    %739 = vmatpush.bf16.msra.mxu0 0
    %740 = vmatpush.bf16.msra.mxu0 0
    %741 = vmatpush.bf16.msra.mxu0 %v683
    %742 = vmatpush.bf16.msra.mxu0 %v682
    %743 = vmatpush.bf16.msra.mxu0 %v681
    %744 = vmatpush.bf16.msra.mxu0 %v680
    %745 = vmatmul.bf16.gmra.mxu0 %v697
    %v746 = vpop.f32.mrf.mxu0
    %v747 = vadd.f32 %v718, %v746
    %v748 = vpop.f32.mrf.mxu0
    %v749 = vadd.f32 %v720, %v748
    %750 = vmatmul.bf16.gmra.mxu0 %v700
    %v751 = vpop.f32.mrf.mxu0
    %v752 = vadd.f32 %v723, %v751
    %v753 = vpop.f32.mrf.mxu0
    %v754 = vadd.f32 %v725, %v753
    %755 = vmatmul.bf16.gmra.mxu0 %v703
    %v756 = vpop.f32.mrf.mxu0
    %v757 = vadd.f32 %v728, %v756
    %v758 = vpop.f32.mrf.mxu0
    %v759 = vadd.f32 %v730, %v758
    %760 = vmatmul.bf16.gmra.mxu0 %v706
    %v761 = vpop.f32.mrf.mxu0
    %v762 = vadd.f32 %v733, %v761
    %v763 = vpop.f32.mrf.mxu0
    %v764 = vadd.f32 %v735, %v763
    %765 = vdwg.mxu0
    %s766 = scalar_lea.vmem %s1, 64
    %v767 = vld [vmem:[%s766] sm:$0xf]
    %v768 = vld [vmem:[%s766 + $0x4] sm:$0xf]
    %v769 = vld [vmem:[%s766 + $0x8] sm:$0xf]
    %v770 = vld [vmem:[%s766 + $0xc] sm:$0xf]
    %v771 = vld [vmem:[%s766 + $0x10] sm:$0xf]
    %v772 = vld [vmem:[%s766 + $0x14] sm:$0xf]
    %v773 = vld [vmem:[%s766 + $0x18] sm:$0xf]
    %v774 = vld [vmem:[%s766 + $0x1c] sm:$0xf]
    %v783 = vunpack.c.l.b16 %v767
    %v784 = vunpack.c.l.b16 %v768
    %v785 = vunpack.c.l.b16 %v769
    %v786 = vunpack.c.l.b16 %v770
    %v787 = vunpack.c.l.b16 %v771
    %v788 = vunpack.c.l.b16 %v772
    %v789 = vunpack.c.l.b16 %v773
    %v790 = vunpack.c.l.b16 %v774
    %v791 = vpack.c.b16 %v784, %v783
    %v792 = vpack.c.b16 %v786, %v785
    %v793 = vpack.c.b16 %v788, %v787
    %v794 = vpack.c.b16 %v790, %v789
    %799 = vmatpush.bf16.msra.mxu0 %v241
    %800 = vmatpush.bf16.msra.mxu0 %v239
    %801 = vmatpush.bf16.msra.mxu0 %v237
    %802 = vmatpush.bf16.msra.mxu0 %v235
    %803 = vmatpush.bf16.msra.mxu0 %v233
    %804 = vmatpush.bf16.msra.mxu0 %v231
    %805 = vmatpush.bf16.msra.mxu0 %v229
    %806 = vmatpush.bf16.msra.mxu0 %v227
    %807 = vmatmul.bf16.gmra.mxu0 %v791
    %v808 = vpop.f32.mrf.mxu0
    %v809 = vadd.f32 0.0, %v808
    %v810 = vpop.f32.mrf.mxu0
    %v811 = vadd.f32 0.0, %v810
    %812 = vmatmul.bf16.gmra.mxu0 %v792
    %v813 = vpop.f32.mrf.mxu0
    %v814 = vadd.f32 0.0, %v813
    %v815 = vpop.f32.mrf.mxu0
    %v816 = vadd.f32 0.0, %v815
    %817 = vmatmul.bf16.gmra.mxu0 %v793
    %v818 = vpop.f32.mrf.mxu0
    %v819 = vadd.f32 0.0, %v818
    %v820 = vpop.f32.mrf.mxu0
    %v821 = vadd.f32 0.0, %v820
    %822 = vmatmul.bf16.gmra.mxu0 %v794
    %v823 = vpop.f32.mrf.mxu0
    %v824 = vadd.f32 0.0, %v823
    %v825 = vpop.f32.mrf.mxu0
    %v826 = vadd.f32 0.0, %v825
    %827 = vdwg.mxu0
    %828 = vmatpush.bf16.msra.mxu0 %v242
    %829 = vmatpush.bf16.msra.mxu0 %v240
    %830 = vmatpush.bf16.msra.mxu0 %v238
    %831 = vmatpush.bf16.msra.mxu0 %v236
    %832 = vmatpush.bf16.msra.mxu0 %v234
    %833 = vmatpush.bf16.msra.mxu0 %v232
    %834 = vmatpush.bf16.msra.mxu0 %v230
    %835 = vmatpush.bf16.msra.mxu0 %v228
    %836 = vmatmul.bf16.gmra.mxu0 %v791
    %v837 = vpop.f32.mrf.mxu0
    %v838 = vadd.f32 0.0, %v837
    %v839 = vpop.f32.mrf.mxu0
    %v840 = vadd.f32 0.0, %v839
    %841 = vmatmul.bf16.gmra.mxu0 %v792
    %v842 = vpop.f32.mrf.mxu0
    %v843 = vadd.f32 0.0, %v842
    %v844 = vpop.f32.mrf.mxu0
    %v845 = vadd.f32 0.0, %v844
    %846 = vmatmul.bf16.gmra.mxu0 %v793
    %v847 = vpop.f32.mrf.mxu0
    %v848 = vadd.f32 0.0, %v847
    %v849 = vpop.f32.mrf.mxu0
    %v850 = vadd.f32 0.0, %v849
    %851 = vmatmul.bf16.gmra.mxu0 %v794
    %v852 = vpop.f32.mrf.mxu0
    %v853 = vadd.f32 0.0, %v852
    %v854 = vpop.f32.mrf.mxu0
    %v855 = vadd.f32 0.0, %v854
    %856 = vdwg.mxu0
    %s857 = scalar_lea.vmem %s2, 192
    %v858 = vld [vmem:[%s857] sm:$0xf]
    %v859 = vld [vmem:[%s857 + $0x4] sm:$0xf]
    %v860 = vld [vmem:[%s857 + $0x8] sm:$0xf]
    %v861 = vld [vmem:[%s857 + $0xc] sm:$0xf]
    %v862 = vld [vmem:[%s857 + $0x10] sm:$0xf]
    %v863 = vld [vmem:[%s857 + $0x14] sm:$0xf]
    %v864 = vld [vmem:[%s857 + $0x18] sm:$0xf]
    %v865 = vld [vmem:[%s857 + $0x1c] sm:$0xf]
    %v866 = vld [vmem:[%s857 + $0x20] sm:$0xf]
    %v867 = vld [vmem:[%s857 + $0x24] sm:$0xf]
    %v868 = vld [vmem:[%s857 + $0x28] sm:$0xf]
    %v869 = vld [vmem:[%s857 + $0x2c] sm:$0xf]
    %v870 = vld [vmem:[%s857 + $0x30] sm:$0xf]
    %v871 = vld [vmem:[%s857 + $0x34] sm:$0xf]
    %v872 = vld [vmem:[%s857 + $0x38] sm:$0xf]
    %v873 = vld [vmem:[%s857 + $0x3c] sm:$0xf]
    %v874 = vld [vmem:[%s857 + $0x40] sm:$0xf]
    %v875 = vld [vmem:[%s857 + $0x44] sm:$0xf]
    %v876 = vld [vmem:[%s857 + $0x48] sm:$0xf]
    %v877 = vld [vmem:[%s857 + $0x4c] sm:$0xf]
    %v878 = vld [vmem:[%s857 + $0x50] sm:$0xf]
    %v879 = vld [vmem:[%s857 + $0x54] sm:$0xf]
    %v880 = vld [vmem:[%s857 + $0x58] sm:$0xf]
    %v881 = vld [vmem:[%s857 + $0x5c] sm:$0xf]
    %v882 = vpack.c.bf16 %v811, %v809
    %v883 = vpack.c.bf16 %v840, %v838
    %v884 = vpack.c.bf16 %v816, %v814
    %v885 = vpack.c.bf16 %v845, %v843
    %v886 = vpack.c.bf16 %v821, %v819
    %v887 = vpack.c.bf16 %v850, %v848
    %v888 = vpack.c.bf16 %v826, %v824
    %v889 = vpack.c.bf16 %v855, %v853
    %v914 = vunpack.c.l.b16 %v858
    %v915 = vunpack.c.l.b16 %v859
    %v916 = vunpack.c.l.b16 %v860
    %v917 = vunpack.c.l.b16 %v861
    %v918 = vunpack.c.l.b16 %v862
    %v919 = vunpack.c.l.b16 %v863
    %v920 = vunpack.c.l.b16 %v864
    %v921 = vunpack.c.l.b16 %v865
    %v922 = vunpack.c.l.b16 %v866
    %v923 = vunpack.c.l.b16 %v867
    %v924 = vunpack.c.l.b16 %v868
    %v925 = vunpack.c.l.b16 %v869
    %v926 = vunpack.c.l.b16 %v870
    %v927 = vunpack.c.l.b16 %v871
    %v928 = vunpack.c.l.b16 %v872
    %v929 = vunpack.c.l.b16 %v873
    %v930 = vunpack.c.l.b16 %v874
    %v931 = vunpack.c.l.b16 %v875
    %v932 = vunpack.c.l.b16 %v876
    %v933 = vunpack.c.l.b16 %v877
    %v934 = vunpack.c.l.b16 %v878
    %v935 = vunpack.c.l.b16 %v879
    %v936 = vunpack.c.l.b16 %v880
    %v937 = vunpack.c.l.b16 %v881
    %v938 = vpack.c.b16 %v915, %v914
    %v939 = vpack.c.b16 %v917, %v916
    %v940 = vpack.c.b16 %v919, %v918
    %v941 = vpack.c.b16 %v921, %v920
    %v942 = vpack.c.b16 %v923, %v922
    %v943 = vpack.c.b16 %v925, %v924
    %v944 = vpack.c.b16 %v927, %v926
    %v945 = vpack.c.b16 %v929, %v928
    %v946 = vpack.c.b16 %v931, %v930
    %v947 = vpack.c.b16 %v933, %v932
    %v948 = vpack.c.b16 %v935, %v934
    %v949 = vpack.c.b16 %v937, %v936
    %v963 = vsel %vm553, %v883, 0
    %v966 = vsel %vm553, %v885, 0
    %v969 = vsel %vm553, %v887, 0
    %v972 = vsel %vm553, %v889, 0
    %974 = vmatpush.bf16.msra.mxu0 %v945
    %975 = vmatpush.bf16.msra.mxu0 %v944
    %976 = vmatpush.bf16.msra.mxu0 %v943
    %977 = vmatpush.bf16.msra.mxu0 %v942
    %978 = vmatpush.bf16.msra.mxu0 %v941
    %979 = vmatpush.bf16.msra.mxu0 %v940
    %980 = vmatpush.bf16.msra.mxu0 %v939
    %981 = vmatpush.bf16.msra.mxu0 %v938
    %982 = vmatmul.bf16.gmra.mxu0 %v882
    %v983 = vpop.f32.mrf.mxu0
    %v984 = vadd.f32 0.0, %v983
    %v985 = vpop.f32.mrf.mxu0
    %v986 = vadd.f32 0.0, %v985
    %987 = vmatmul.bf16.gmra.mxu0 %v884
    %v988 = vpop.f32.mrf.mxu0
    %v989 = vadd.f32 0.0, %v988
    %v990 = vpop.f32.mrf.mxu0
    %v991 = vadd.f32 0.0, %v990
    %992 = vmatmul.bf16.gmra.mxu0 %v886
    %v993 = vpop.f32.mrf.mxu0
    %v994 = vadd.f32 0.0, %v993
    %v995 = vpop.f32.mrf.mxu0
    %v996 = vadd.f32 0.0, %v995
    %997 = vmatmul.bf16.gmra.mxu0 %v888
    %v998 = vpop.f32.mrf.mxu0
    %v999 = vadd.f32 0.0, %v998
    %v1000 = vpop.f32.mrf.mxu0
    %v1001 = vadd.f32 0.0, %v1000
    %1002 = vdwg.mxu0
    %1003 = vmatpush.bf16.msra.mxu0 0
    %1004 = vmatpush.bf16.msra.mxu0 0
    %1005 = vmatpush.bf16.msra.mxu0 0
    %1006 = vmatpush.bf16.msra.mxu0 0
    %1007 = vmatpush.bf16.msra.mxu0 %v949
    %1008 = vmatpush.bf16.msra.mxu0 %v948
    %1009 = vmatpush.bf16.msra.mxu0 %v947
    %1010 = vmatpush.bf16.msra.mxu0 %v946
    %1011 = vmatmul.bf16.gmra.mxu0 %v963
    %v1012 = vpop.f32.mrf.mxu0
    %v1013 = vadd.f32 %v984, %v1012
    %v1014 = vpop.f32.mrf.mxu0
    %v1015 = vadd.f32 %v986, %v1014
    %1016 = vmatmul.bf16.gmra.mxu0 %v966
    %v1017 = vpop.f32.mrf.mxu0
    %v1018 = vadd.f32 %v989, %v1017
    %v1019 = vpop.f32.mrf.mxu0
    %v1020 = vadd.f32 %v991, %v1019
    %1021 = vmatmul.bf16.gmra.mxu0 %v969
    %v1022 = vpop.f32.mrf.mxu0
    %v1023 = vadd.f32 %v994, %v1022
    %v1024 = vpop.f32.mrf.mxu0
    %v1025 = vadd.f32 %v996, %v1024
    %1026 = vmatmul.bf16.gmra.mxu0 %v972
    %v1027 = vpop.f32.mrf.mxu0
    %v1028 = vadd.f32 %v999, %v1027
    %v1029 = vpop.f32.mrf.mxu0
    %v1030 = vadd.f32 %v1001, %v1029
    %1031 = vdwg.mxu0
    %v1032 = vadd.f32 %v747, %v1013
    %v1033 = vadd.f32 %v749, %v1015
    %v1034 = vadd.f32 %v752, %v1018
    %v1035 = vadd.f32 %v754, %v1020
    %v1036 = vadd.f32 %v757, %v1023
    %v1037 = vadd.f32 %v759, %v1025
    %v1038 = vadd.f32 %v762, %v1028
    %v1039 = vadd.f32 %v764, %v1030
    %s1040 = scalar_lea.vmem %s1, 96
    %v1041 = vld [vmem:[%s1040] sm:$0xf]
    %v1042 = vld [vmem:[%s1040 + $0x4] sm:$0xf]
    %v1043 = vld [vmem:[%s1040 + $0x8] sm:$0xf]
    %v1044 = vld [vmem:[%s1040 + $0xc] sm:$0xf]
    %v1045 = vld [vmem:[%s1040 + $0x10] sm:$0xf]
    %v1046 = vld [vmem:[%s1040 + $0x14] sm:$0xf]
    %v1047 = vld [vmem:[%s1040 + $0x18] sm:$0xf]
    %v1048 = vld [vmem:[%s1040 + $0x1c] sm:$0xf]
    %v1057 = vunpack.c.l.b16 %v1041
    %v1058 = vunpack.c.l.b16 %v1042
    %v1059 = vunpack.c.l.b16 %v1043
    %v1060 = vunpack.c.l.b16 %v1044
    %v1061 = vunpack.c.l.b16 %v1045
    %v1062 = vunpack.c.l.b16 %v1046
    %v1063 = vunpack.c.l.b16 %v1047
    %v1064 = vunpack.c.l.b16 %v1048
    %v1065 = vpack.c.b16 %v1058, %v1057
    %v1066 = vpack.c.b16 %v1060, %v1059
    %v1067 = vpack.c.b16 %v1062, %v1061
    %v1068 = vpack.c.b16 %v1064, %v1063
    %1073 = vmatpush.bf16.msra.mxu0 %v241
    %1074 = vmatpush.bf16.msra.mxu0 %v239
    %1075 = vmatpush.bf16.msra.mxu0 %v237
    %1076 = vmatpush.bf16.msra.mxu0 %v235
    %1077 = vmatpush.bf16.msra.mxu0 %v233
    %1078 = vmatpush.bf16.msra.mxu0 %v231
    %1079 = vmatpush.bf16.msra.mxu0 %v229
    %1080 = vmatpush.bf16.msra.mxu0 %v227
    %1081 = vmatmul.bf16.gmra.mxu0 %v1065
    %v1082 = vpop.f32.mrf.mxu0
    %v1083 = vadd.f32 0.0, %v1082
    %v1084 = vpop.f32.mrf.mxu0
    %v1085 = vadd.f32 0.0, %v1084
    %1086 = vmatmul.bf16.gmra.mxu0 %v1066
    %v1087 = vpop.f32.mrf.mxu0
    %v1088 = vadd.f32 0.0, %v1087
    %v1089 = vpop.f32.mrf.mxu0
    %v1090 = vadd.f32 0.0, %v1089
    %1091 = vmatmul.bf16.gmra.mxu0 %v1067
    %v1092 = vpop.f32.mrf.mxu0
    %v1093 = vadd.f32 0.0, %v1092
    %v1094 = vpop.f32.mrf.mxu0
    %v1095 = vadd.f32 0.0, %v1094
    %1096 = vmatmul.bf16.gmra.mxu0 %v1068
    %v1097 = vpop.f32.mrf.mxu0
    %v1098 = vadd.f32 0.0, %v1097
    %v1099 = vpop.f32.mrf.mxu0
    %v1100 = vadd.f32 0.0, %v1099
    %1101 = vdwg.mxu0
    %1102 = vmatpush.bf16.msra.mxu0 %v242
    %1103 = vmatpush.bf16.msra.mxu0 %v240
    %1104 = vmatpush.bf16.msra.mxu0 %v238
    %1105 = vmatpush.bf16.msra.mxu0 %v236
    %1106 = vmatpush.bf16.msra.mxu0 %v234
    %1107 = vmatpush.bf16.msra.mxu0 %v232
    %1108 = vmatpush.bf16.msra.mxu0 %v230
    %1109 = vmatpush.bf16.msra.mxu0 %v228
    %1110 = vmatmul.bf16.gmra.mxu0 %v1065
    %v1111 = vpop.f32.mrf.mxu0
    %v1112 = vadd.f32 0.0, %v1111
    %v1113 = vpop.f32.mrf.mxu0
    %v1114 = vadd.f32 0.0, %v1113
    %1115 = vmatmul.bf16.gmra.mxu0 %v1066
    %v1116 = vpop.f32.mrf.mxu0
    %v1117 = vadd.f32 0.0, %v1116
    %v1118 = vpop.f32.mrf.mxu0
    %v1119 = vadd.f32 0.0, %v1118
    %1120 = vmatmul.bf16.gmra.mxu0 %v1067
    %v1121 = vpop.f32.mrf.mxu0
    %v1122 = vadd.f32 0.0, %v1121
    %v1123 = vpop.f32.mrf.mxu0
    %v1124 = vadd.f32 0.0, %v1123
    %1125 = vmatmul.bf16.gmra.mxu0 %v1068
    %v1126 = vpop.f32.mrf.mxu0
    %v1127 = vadd.f32 0.0, %v1126
    %v1128 = vpop.f32.mrf.mxu0
    %v1129 = vadd.f32 0.0, %v1128
    %1130 = vdwg.mxu0
    %s1131 = scalar_lea.vmem %s2, 288
    %v1132 = vld [vmem:[%s1131] sm:$0xf]
    %v1133 = vld [vmem:[%s1131 + $0x4] sm:$0xf]
    %v1134 = vld [vmem:[%s1131 + $0x8] sm:$0xf]
    %v1135 = vld [vmem:[%s1131 + $0xc] sm:$0xf]
    %v1136 = vld [vmem:[%s1131 + $0x10] sm:$0xf]
    %v1137 = vld [vmem:[%s1131 + $0x14] sm:$0xf]
    %v1138 = vld [vmem:[%s1131 + $0x18] sm:$0xf]
    %v1139 = vld [vmem:[%s1131 + $0x1c] sm:$0xf]
    %v1140 = vld [vmem:[%s1131 + $0x20] sm:$0xf]
    %v1141 = vld [vmem:[%s1131 + $0x24] sm:$0xf]
    %v1142 = vld [vmem:[%s1131 + $0x28] sm:$0xf]
    %v1143 = vld [vmem:[%s1131 + $0x2c] sm:$0xf]
    %v1144 = vld [vmem:[%s1131 + $0x30] sm:$0xf]
    %v1145 = vld [vmem:[%s1131 + $0x34] sm:$0xf]
    %v1146 = vld [vmem:[%s1131 + $0x38] sm:$0xf]
    %v1147 = vld [vmem:[%s1131 + $0x3c] sm:$0xf]
    %v1148 = vld [vmem:[%s1131 + $0x40] sm:$0xf]
    %v1149 = vld [vmem:[%s1131 + $0x44] sm:$0xf]
    %v1150 = vld [vmem:[%s1131 + $0x48] sm:$0xf]
    %v1151 = vld [vmem:[%s1131 + $0x4c] sm:$0xf]
    %v1152 = vld [vmem:[%s1131 + $0x50] sm:$0xf]
    %v1153 = vld [vmem:[%s1131 + $0x54] sm:$0xf]
    %v1154 = vld [vmem:[%s1131 + $0x58] sm:$0xf]
    %v1155 = vld [vmem:[%s1131 + $0x5c] sm:$0xf]
    %v1156 = vpack.c.bf16 %v1085, %v1083
    %v1157 = vpack.c.bf16 %v1114, %v1112
    %v1158 = vpack.c.bf16 %v1090, %v1088
    %v1159 = vpack.c.bf16 %v1119, %v1117
    %v1160 = vpack.c.bf16 %v1095, %v1093
    %v1161 = vpack.c.bf16 %v1124, %v1122
    %v1162 = vpack.c.bf16 %v1100, %v1098
    %v1163 = vpack.c.bf16 %v1129, %v1127
    %v1188 = vunpack.c.l.b16 %v1132
    %v1189 = vunpack.c.l.b16 %v1133
    %v1190 = vunpack.c.l.b16 %v1134
    %v1191 = vunpack.c.l.b16 %v1135
    %v1192 = vunpack.c.l.b16 %v1136
    %v1193 = vunpack.c.l.b16 %v1137
    %v1194 = vunpack.c.l.b16 %v1138
    %v1195 = vunpack.c.l.b16 %v1139
    %v1196 = vunpack.c.l.b16 %v1140
    %v1197 = vunpack.c.l.b16 %v1141
    %v1198 = vunpack.c.l.b16 %v1142
    %v1199 = vunpack.c.l.b16 %v1143
    %v1200 = vunpack.c.l.b16 %v1144
    %v1201 = vunpack.c.l.b16 %v1145
    %v1202 = vunpack.c.l.b16 %v1146
    %v1203 = vunpack.c.l.b16 %v1147
    %v1204 = vunpack.c.l.b16 %v1148
    %v1205 = vunpack.c.l.b16 %v1149
    %v1206 = vunpack.c.l.b16 %v1150
    %v1207 = vunpack.c.l.b16 %v1151
    %v1208 = vunpack.c.l.b16 %v1152
    %v1209 = vunpack.c.l.b16 %v1153
    %v1210 = vunpack.c.l.b16 %v1154
    %v1211 = vunpack.c.l.b16 %v1155
    %v1212 = vpack.c.b16 %v1189, %v1188
    %v1213 = vpack.c.b16 %v1191, %v1190
    %v1214 = vpack.c.b16 %v1193, %v1192
    %v1215 = vpack.c.b16 %v1195, %v1194
    %v1216 = vpack.c.b16 %v1197, %v1196
    %v1217 = vpack.c.b16 %v1199, %v1198
    %v1218 = vpack.c.b16 %v1201, %v1200
    %v1219 = vpack.c.b16 %v1203, %v1202
    %v1220 = vpack.c.b16 %v1205, %v1204
    %v1221 = vpack.c.b16 %v1207, %v1206
    %v1222 = vpack.c.b16 %v1209, %v1208
    %v1223 = vpack.c.b16 %v1211, %v1210
    %v1237 = vsel %vm553, %v1157, 0
    %v1240 = vsel %vm553, %v1159, 0
    %v1243 = vsel %vm553, %v1161, 0
    %v1246 = vsel %vm553, %v1163, 0
    %1248 = vmatpush.bf16.msra.mxu0 %v1219
    %1249 = vmatpush.bf16.msra.mxu0 %v1218
    %1250 = vmatpush.bf16.msra.mxu0 %v1217
    %1251 = vmatpush.bf16.msra.mxu0 %v1216
    %1252 = vmatpush.bf16.msra.mxu0 %v1215
    %1253 = vmatpush.bf16.msra.mxu0 %v1214
    %1254 = vmatpush.bf16.msra.mxu0 %v1213
    %1255 = vmatpush.bf16.msra.mxu0 %v1212
    %1256 = vmatmul.bf16.gmra.mxu0 %v1156
    %v1257 = vpop.f32.mrf.mxu0
    %v1258 = vadd.f32 0.0, %v1257
    %v1259 = vpop.f32.mrf.mxu0
    %v1260 = vadd.f32 0.0, %v1259
    %1261 = vmatmul.bf16.gmra.mxu0 %v1158
    %v1262 = vpop.f32.mrf.mxu0
    %v1263 = vadd.f32 0.0, %v1262
    %v1264 = vpop.f32.mrf.mxu0
    %v1265 = vadd.f32 0.0, %v1264
    %1266 = vmatmul.bf16.gmra.mxu0 %v1160
    %v1267 = vpop.f32.mrf.mxu0
    %v1268 = vadd.f32 0.0, %v1267
    %v1269 = vpop.f32.mrf.mxu0
    %v1270 = vadd.f32 0.0, %v1269
    %1271 = vmatmul.bf16.gmra.mxu0 %v1162
    %v1272 = vpop.f32.mrf.mxu0
    %v1273 = vadd.f32 0.0, %v1272
    %v1274 = vpop.f32.mrf.mxu0
    %v1275 = vadd.f32 0.0, %v1274
    %1276 = vdwg.mxu0
    %1277 = vmatpush.bf16.msra.mxu0 0
    %1278 = vmatpush.bf16.msra.mxu0 0
    %1279 = vmatpush.bf16.msra.mxu0 0
    %1280 = vmatpush.bf16.msra.mxu0 0
    %1281 = vmatpush.bf16.msra.mxu0 %v1223
    %1282 = vmatpush.bf16.msra.mxu0 %v1222
    %1283 = vmatpush.bf16.msra.mxu0 %v1221
    %1284 = vmatpush.bf16.msra.mxu0 %v1220
    %1285 = vmatmul.bf16.gmra.mxu0 %v1237
    %v1286 = vpop.f32.mrf.mxu0
    %v1287 = vadd.f32 %v1258, %v1286
    %v1288 = vpop.f32.mrf.mxu0
    %v1289 = vadd.f32 %v1260, %v1288
    %1290 = vmatmul.bf16.gmra.mxu0 %v1240
    %v1291 = vpop.f32.mrf.mxu0
    %v1292 = vadd.f32 %v1263, %v1291
    %v1293 = vpop.f32.mrf.mxu0
    %v1294 = vadd.f32 %v1265, %v1293
    %1295 = vmatmul.bf16.gmra.mxu0 %v1243
    %v1296 = vpop.f32.mrf.mxu0
    %v1297 = vadd.f32 %v1268, %v1296
    %v1298 = vpop.f32.mrf.mxu0
    %v1299 = vadd.f32 %v1270, %v1298
    %1300 = vmatmul.bf16.gmra.mxu0 %v1246
    %v1301 = vpop.f32.mrf.mxu0
    %v1302 = vadd.f32 %v1273, %v1301
    %v1303 = vpop.f32.mrf.mxu0
    %v1304 = vadd.f32 %v1275, %v1303
    %1305 = vdwg.mxu0
    %v1306 = vadd.f32 %v1032, %v1287
    %v1307 = vadd.f32 %v1033, %v1289
    %v1308 = vadd.f32 %v1034, %v1292
    %v1309 = vadd.f32 %v1035, %v1294
    %v1310 = vadd.f32 %v1036, %v1297
    %v1311 = vadd.f32 %v1037, %v1299
    %v1312 = vadd.f32 %v1038, %v1302
    %v1313 = vadd.f32 %v1039, %v1304
    %v1314 = vmul.f32 %v1306, 0.2
    %v1315 = vmul.f32 %v1307, 0.2
    %v1316 = vmul.f32 %v1308, 0.2
    %v1317 = vmul.f32 %v1309, 0.2
    %v1318 = vmul.f32 %v1310, 0.2
    %v1319 = vmul.f32 %v1311, 0.2
    %v1320 = vmul.f32 %v1312, 0.2
    %v1321 = vmul.f32 %v1313, 0.2
    %v1322 = vmax.f32 %v1306, %v1314
    %v1323 = vmax.f32 %v1307, %v1315
    %v1324 = vmax.f32 %v1308, %v1316
    %v1325 = vmax.f32 %v1309, %v1317
    %v1326 = vmax.f32 %v1310, %v1318
    %v1327 = vmax.f32 %v1311, %v1319
    %v1328 = vmax.f32 %v1312, %v1320
    %v1329 = vmax.f32 %v1313, %v1321
    %v1330 = vld [vmem:[%s8] sm:$0xf]
    %v1331 = vld [vmem:[%s8 + $0x4] sm:$0xf]
    %v1332 = vld [vmem:[%s8 + $0x8] sm:$0xf]
    %v1333 = vld [vmem:[%s8 + $0xc] sm:$0xf]
    %v1334 = vld [vmem:[%s8 + $0x10] sm:$0xf]
    %v1335 = vld [vmem:[%s8 + $0x14] sm:$0xf]
    %v1336 = vld [vmem:[%s8 + $0x18] sm:$0xf]
    %v1337 = vld [vmem:[%s8 + $0x1c] sm:$0xf]
    %v1338 = vld [vmem:[%s8 + $0x20] sm:$0xf]
    %v1339 = vld [vmem:[%s8 + $0x24] sm:$0xf]
    %v1340 = vld [vmem:[%s8 + $0x28] sm:$0xf]
    %v1341 = vld [vmem:[%s8 + $0x2c] sm:$0xf]
    %v1342 = vld [vmem:[%s8 + $0x30] sm:$0xf]
    %v1343 = vld [vmem:[%s8 + $0x34] sm:$0xf]
    %v1344 = vld [vmem:[%s8 + $0x38] sm:$0xf]
    %v1345 = vld [vmem:[%s8 + $0x3c] sm:$0xf]
    %v1346 = vld [vmem:[%s8 + $0x40] sm:$0xf]
    %v1347 = vld [vmem:[%s8 + $0x44] sm:$0xf]
    %v1348 = vld [vmem:[%s8 + $0x48] sm:$0xf]
    %v1349 = vld [vmem:[%s8 + $0x4c] sm:$0xf]
    %v1350 = vld [vmem:[%s8 + $0x50] sm:$0xf]
    %v1351 = vld [vmem:[%s8 + $0x54] sm:$0xf]
    %v1352 = vld [vmem:[%s8 + $0x58] sm:$0xf]
    %v1353 = vld [vmem:[%s8 + $0x5c] sm:$0xf]
    %v1354 = vld [vmem:[%s8 + $0x60] sm:$0xf]
    %v1355 = vld [vmem:[%s8 + $0x64] sm:$0xf]
    %v1356 = vld [vmem:[%s8 + $0x68] sm:$0xf]
    %v1357 = vld [vmem:[%s8 + $0x6c] sm:$0xf]
    %v1358 = vld [vmem:[%s8 + $0x70] sm:$0xf]
    %v1359 = vld [vmem:[%s8 + $0x74] sm:$0xf]
    %v1360 = vld [vmem:[%s8 + $0x78] sm:$0xf]
    %v1361 = vld [vmem:[%s8 + $0x7c] sm:$0xf]
    %v1362 = vld [vmem:[%s8 + $0x80] sm:$0xf]
    %v1363 = vld [vmem:[%s8 + $0x84] sm:$0xf]
    %v1364 = vld [vmem:[%s8 + $0x88] sm:$0xf]
    %v1365 = vld [vmem:[%s8 + $0x8c] sm:$0xf]
    %v1366 = vld [vmem:[%s8 + $0x90] sm:$0xf]
    %v1367 = vld [vmem:[%s8 + $0x94] sm:$0xf]
    %v1368 = vld [vmem:[%s8 + $0x98] sm:$0xf]
    %v1369 = vld [vmem:[%s8 + $0x9c] sm:$0xf]
    %v1370 = vld [vmem:[%s8 + $0xa0] sm:$0xf]
    %v1371 = vld [vmem:[%s8 + $0xa4] sm:$0xf]
    %v1372 = vld [vmem:[%s8 + $0xa8] sm:$0xf]
    %v1373 = vld [vmem:[%s8 + $0xac] sm:$0xf]
    %v1374 = vld [vmem:[%s8 + $0xb0] sm:$0xf]
    %v1375 = vld [vmem:[%s8 + $0xb4] sm:$0xf]
    %v1376 = vld [vmem:[%s8 + $0xb8] sm:$0xf]
    %v1377 = vld [vmem:[%s8 + $0xbc] sm:$0xf]
    %v1378 = vld [vmem:[%s8 + $0xc0] sm:$0xf]
    %v1379 = vld [vmem:[%s8 + $0xc4] sm:$0xf]
    %v1380 = vld [vmem:[%s8 + $0xc8] sm:$0xf]
    %v1381 = vld [vmem:[%s8 + $0xcc] sm:$0xf]
    %v1382 = vld [vmem:[%s8 + $0xd0] sm:$0xf]
    %v1383 = vld [vmem:[%s8 + $0xd4] sm:$0xf]
    %v1384 = vld [vmem:[%s8 + $0xd8] sm:$0xf]
    %v1385 = vld [vmem:[%s8 + $0xdc] sm:$0xf]
    %v1386 = vld [vmem:[%s8 + $0xe0] sm:$0xf]
    %v1387 = vld [vmem:[%s8 + $0xe4] sm:$0xf]
    %v1388 = vld [vmem:[%s8 + $0xe8] sm:$0xf]
    %v1389 = vld [vmem:[%s8 + $0xec] sm:$0xf]
    %v1390 = vld [vmem:[%s8 + $0xf0] sm:$0xf]
    %v1391 = vld [vmem:[%s8 + $0xf4] sm:$0xf]
    %v1392 = vld [vmem:[%s8 + $0xf8] sm:$0xf]
    %v1393 = vld [vmem:[%s8 + $0xfc] sm:$0xf]
    %v1394 = vld [vmem:[#allocation2] sm:$0xf]
    %v1395 = vld [vmem:[#allocation2 + $0x4] sm:$0xf]
    %v1396 = vld [vmem:[#allocation2 + $0x8] sm:$0xf]
    %v1397 = vld [vmem:[#allocation2 + $0xc] sm:$0xf]
    %v1398 = vpack.c.bf16 %v1323, %v1322
    %v1399 = vpack.c.bf16 %v1325, %v1324
    %v1400 = vpack.c.bf16 %v1327, %v1326
    %v1401 = vpack.c.bf16 %v1329, %v1328
    %v1406 = vunpack.c.l.b16 %v1394
    %v1407 = vunpack.c.l.b16 %v1395
    %v1408 = vunpack.c.l.b16 %v1396
    %v1409 = vunpack.c.l.b16 %v1397
    %v1410 = vpack.c.b16 %v1407, %v1406
    %v1411 = vpack.c.b16 %v1409, %v1408
    %v1413 = vsel %vm553, %v1410, 0
    %v1416 = vsel %vm553, %v1411, 0
    %1418 = vmatpush.bf16.msra.mxu0 0
    %1419 = vmatpush.bf16.msra.mxu0 0
    %1420 = vmatpush.bf16.msra.mxu0 0
    %1421 = vmatpush.bf16.msra.mxu0 0
    %1422 = vmatpush.bf16.msra.mxu0 %v1401
    %1423 = vmatpush.bf16.msra.mxu0 %v1400
    %1424 = vmatpush.bf16.msra.mxu0 %v1399
    %1425 = vmatpush.bf16.msra.mxu0 %v1398
    %1426 = vmatmul.bf16.gmra.mxu0 %v1413
    %v1427 = vpop.f32.mrf.mxu0
    %v1428 = vadd.f32 0.0, %v1427
    %v1429 = vpop.f32.mrf.mxu0
    %v1430 = vadd.f32 0.0, %v1429
    %1431 = vmatmul.bf16.gmra.mxu0 %v1416
    %v1432 = vpop.f32.mrf.mxu0
    %v1433 = vadd.f32 0.0, %v1432
    %v1434 = vpop.f32.mrf.mxu0
    %v1435 = vadd.f32 0.0, %v1434
    %1436 = vdwg.mxu0
    %s1437 = scalar_lea.vmem [#allocation2], 16
    %v1438 = vld [vmem:[%s1437] sm:$0xf]
    %v1439 = vld [vmem:[%s1437 + $0x4] sm:$0xf]
    %v1440 = vld [vmem:[%s1437 + $0x8] sm:$0xf]
    %v1441 = vld [vmem:[%s1437 + $0xc] sm:$0xf]
    %v1446 = vunpack.c.l.b16 %v1438
    %v1447 = vunpack.c.l.b16 %v1439
    %v1448 = vunpack.c.l.b16 %v1440
    %v1449 = vunpack.c.l.b16 %v1441
    %v1450 = vpack.c.b16 %v1447, %v1446
    %v1451 = vpack.c.b16 %v1449, %v1448
    %v1453 = vsel %vm553, %v1450, 0
    %v1456 = vsel %vm553, %v1451, 0
    %1458 = vmatpush.bf16.msra.mxu0 0
    %1459 = vmatpush.bf16.msra.mxu0 0
    %1460 = vmatpush.bf16.msra.mxu0 0
    %1461 = vmatpush.bf16.msra.mxu0 0
    %1462 = vmatpush.bf16.msra.mxu0 %v1401
    %1463 = vmatpush.bf16.msra.mxu0 %v1400
    %1464 = vmatpush.bf16.msra.mxu0 %v1399
    %1465 = vmatpush.bf16.msra.mxu0 %v1398
    %1466 = vmatmul.bf16.gmra.mxu0 %v1453
    %v1467 = vpop.f32.mrf.mxu0
    %v1468 = vadd.f32 0.0, %v1467
    %v1469 = vpop.f32.mrf.mxu0
    %v1470 = vadd.f32 0.0, %v1469
    %1471 = vmatmul.bf16.gmra.mxu0 %v1456
    %v1472 = vpop.f32.mrf.mxu0
    %v1473 = vadd.f32 0.0, %v1472
    %v1474 = vpop.f32.mrf.mxu0
    %v1475 = vadd.f32 0.0, %v1474
    %1476 = vdwg.mxu0
    %s1477 = scalar_lea.vmem [#allocation2], 32
    %v1478 = vld [vmem:[%s1477] sm:$0xf]
    %v1479 = vld [vmem:[%s1477 + $0x4] sm:$0xf]
    %v1480 = vld [vmem:[%s1477 + $0x8] sm:$0xf]
    %v1481 = vld [vmem:[%s1477 + $0xc] sm:$0xf]
    %v1486 = vunpack.c.l.b16 %v1478
    %v1487 = vunpack.c.l.b16 %v1479
    %v1488 = vunpack.c.l.b16 %v1480
    %v1489 = vunpack.c.l.b16 %v1481
    %v1490 = vpack.c.b16 %v1487, %v1486
    %v1491 = vpack.c.b16 %v1489, %v1488
    %v1493 = vsel %vm553, %v1490, 0
    %v1496 = vsel %vm553, %v1491, 0
    %1498 = vmatpush.bf16.msra.mxu0 0
    %1499 = vmatpush.bf16.msra.mxu0 0
    %1500 = vmatpush.bf16.msra.mxu0 0
    %1501 = vmatpush.bf16.msra.mxu0 0
    %1502 = vmatpush.bf16.msra.mxu0 %v1401
    %1503 = vmatpush.bf16.msra.mxu0 %v1400
    %1504 = vmatpush.bf16.msra.mxu0 %v1399
    %1505 = vmatpush.bf16.msra.mxu0 %v1398
    %1506 = vmatmul.bf16.gmra.mxu0 %v1493
    %v1507 = vpop.f32.mrf.mxu0
    %v1508 = vadd.f32 0.0, %v1507
    %v1509 = vpop.f32.mrf.mxu0
    %v1510 = vadd.f32 0.0, %v1509
    %1511 = vmatmul.bf16.gmra.mxu0 %v1496
    %v1512 = vpop.f32.mrf.mxu0
    %v1513 = vadd.f32 0.0, %v1512
    %v1514 = vpop.f32.mrf.mxu0
    %v1515 = vadd.f32 0.0, %v1514
    %1516 = vdwg.mxu0
    %s1517 = scalar_lea.vmem [#allocation2], 48
    %v1518 = vld [vmem:[%s1517] sm:$0xf]
    %v1519 = vld [vmem:[%s1517 + $0x4] sm:$0xf]
    %v1520 = vld [vmem:[%s1517 + $0x8] sm:$0xf]
    %v1521 = vld [vmem:[%s1517 + $0xc] sm:$0xf]
    %v1526 = vunpack.c.l.b16 %v1518
    %v1527 = vunpack.c.l.b16 %v1519
    %v1528 = vunpack.c.l.b16 %v1520
    %v1529 = vunpack.c.l.b16 %v1521
    %v1530 = vpack.c.b16 %v1527, %v1526
    %v1531 = vpack.c.b16 %v1529, %v1528
    %v1533 = vsel %vm553, %v1530, 0
    %v1536 = vsel %vm553, %v1531, 0
    %1538 = vmatpush.bf16.msra.mxu0 0
    %1539 = vmatpush.bf16.msra.mxu0 0
    %1540 = vmatpush.bf16.msra.mxu0 0
    %1541 = vmatpush.bf16.msra.mxu0 0
    %1542 = vmatpush.bf16.msra.mxu0 %v1401
    %1543 = vmatpush.bf16.msra.mxu0 %v1400
    %1544 = vmatpush.bf16.msra.mxu0 %v1399
    %1545 = vmatpush.bf16.msra.mxu0 %v1398
    %1546 = vmatmul.bf16.gmra.mxu0 %v1533
    %v1547 = vpop.f32.mrf.mxu0
    %v1548 = vadd.f32 0.0, %v1547
    %v1549 = vpop.f32.mrf.mxu0
    %v1550 = vadd.f32 0.0, %v1549
    %1551 = vmatmul.bf16.gmra.mxu0 %v1536
    %v1552 = vpop.f32.mrf.mxu0
    %v1553 = vadd.f32 0.0, %v1552
    %v1554 = vpop.f32.mrf.mxu0
    %v1555 = vadd.f32 0.0, %v1554
    %1556 = vdwg.mxu0
    %v1557 = vpack.c.bf16 %v1430, %v1428
    %v1558 = vpack.c.bf16 %v1470, %v1468
    %v1559 = vpack.c.bf16 %v1510, %v1508
    %v1560 = vpack.c.bf16 %v1550, %v1548
    %v1561 = vpack.c.bf16 %v1435, %v1433
    %v1562 = vpack.c.bf16 %v1475, %v1473
    %v1563 = vpack.c.bf16 %v1515, %v1513
    %v1564 = vpack.c.bf16 %v1555, %v1553
    %v1629 = vunpack.c.l.b16 %v1330
    %v1630 = vunpack.c.l.b16 %v1331
    %v1631 = vunpack.c.l.b16 %v1332
    %v1632 = vunpack.c.l.b16 %v1333
    %v1633 = vunpack.c.l.b16 %v1334
    %v1634 = vunpack.c.l.b16 %v1335
    %v1635 = vunpack.c.l.b16 %v1336
    %v1636 = vunpack.c.l.b16 %v1337
    %v1637 = vunpack.c.l.b16 %v1338
    %v1638 = vunpack.c.l.b16 %v1339
    %v1639 = vunpack.c.l.b16 %v1340
    %v1640 = vunpack.c.l.b16 %v1341
    %v1641 = vunpack.c.l.b16 %v1342
    %v1642 = vunpack.c.l.b16 %v1343
    %v1643 = vunpack.c.l.b16 %v1344
    %v1644 = vunpack.c.l.b16 %v1345
    %v1645 = vunpack.c.l.b16 %v1346
    %v1646 = vunpack.c.l.b16 %v1347
    %v1647 = vunpack.c.l.b16 %v1348
    %v1648 = vunpack.c.l.b16 %v1349
    %v1649 = vunpack.c.l.b16 %v1350
    %v1650 = vunpack.c.l.b16 %v1351
    %v1651 = vunpack.c.l.b16 %v1352
    %v1652 = vunpack.c.l.b16 %v1353
    %v1653 = vunpack.c.l.b16 %v1354
    %v1654 = vunpack.c.l.b16 %v1355
    %v1655 = vunpack.c.l.b16 %v1356
    %v1656 = vunpack.c.l.b16 %v1357
    %v1657 = vunpack.c.l.b16 %v1358
    %v1658 = vunpack.c.l.b16 %v1359
    %v1659 = vunpack.c.l.b16 %v1360
    %v1660 = vunpack.c.l.b16 %v1361
    %v1661 = vunpack.c.l.b16 %v1362
    %v1662 = vunpack.c.l.b16 %v1363
    %v1663 = vunpack.c.l.b16 %v1364
    %v1664 = vunpack.c.l.b16 %v1365
    %v1665 = vunpack.c.l.b16 %v1366
    %v1666 = vunpack.c.l.b16 %v1367
    %v1667 = vunpack.c.l.b16 %v1368
    %v1668 = vunpack.c.l.b16 %v1369
    %v1669 = vunpack.c.l.b16 %v1370
    %v1670 = vunpack.c.l.b16 %v1371
    %v1671 = vunpack.c.l.b16 %v1372
    %v1672 = vunpack.c.l.b16 %v1373
    %v1673 = vunpack.c.l.b16 %v1374
    %v1674 = vunpack.c.l.b16 %v1375
    %v1675 = vunpack.c.l.b16 %v1376
    %v1676 = vunpack.c.l.b16 %v1377
    %v1677 = vunpack.c.l.b16 %v1378
    %v1678 = vunpack.c.l.b16 %v1379
    %v1679 = vunpack.c.l.b16 %v1380
    %v1680 = vunpack.c.l.b16 %v1381
    %v1681 = vunpack.c.l.b16 %v1382
    %v1682 = vunpack.c.l.b16 %v1383
    %v1683 = vunpack.c.l.b16 %v1384
    %v1684 = vunpack.c.l.b16 %v1385
    %v1685 = vunpack.c.l.b16 %v1386
    %v1686 = vunpack.c.l.b16 %v1387
    %v1687 = vunpack.c.l.b16 %v1388
    %v1688 = vunpack.c.l.b16 %v1389
    %v1689 = vunpack.c.l.b16 %v1390
    %v1690 = vunpack.c.l.b16 %v1391
    %v1691 = vunpack.c.l.b16 %v1392
    %v1692 = vunpack.c.l.b16 %v1393
    %v1693 = vpack.c.b16 %v1630, %v1629
    %v1694 = vpack.c.b16 %v1632, %v1631
    %v1695 = vpack.c.b16 %v1634, %v1633
    %v1696 = vpack.c.b16 %v1636, %v1635
    %v1697 = vpack.c.b16 %v1638, %v1637
    %v1698 = vpack.c.b16 %v1640, %v1639
    %v1699 = vpack.c.b16 %v1642, %v1641
    %v1700 = vpack.c.b16 %v1644, %v1643
    %v1701 = vpack.c.b16 %v1646, %v1645
    %v1702 = vpack.c.b16 %v1648, %v1647
    %v1703 = vpack.c.b16 %v1650, %v1649
    %v1704 = vpack.c.b16 %v1652, %v1651
    %v1705 = vpack.c.b16 %v1654, %v1653
    %v1706 = vpack.c.b16 %v1656, %v1655
    %v1707 = vpack.c.b16 %v1658, %v1657
    %v1708 = vpack.c.b16 %v1660, %v1659
    %v1709 = vpack.c.b16 %v1662, %v1661
    %v1710 = vpack.c.b16 %v1664, %v1663
    %v1711 = vpack.c.b16 %v1666, %v1665
    %v1712 = vpack.c.b16 %v1668, %v1667
    %v1713 = vpack.c.b16 %v1670, %v1669
    %v1714 = vpack.c.b16 %v1672, %v1671
    %v1715 = vpack.c.b16 %v1674, %v1673
    %v1716 = vpack.c.b16 %v1676, %v1675
    %v1717 = vpack.c.b16 %v1678, %v1677
    %v1718 = vpack.c.b16 %v1680, %v1679
    %v1719 = vpack.c.b16 %v1682, %v1681
    %v1720 = vpack.c.b16 %v1684, %v1683
    %v1721 = vpack.c.b16 %v1686, %v1685
    %v1722 = vpack.c.b16 %v1688, %v1687
    %v1723 = vpack.c.b16 %v1690, %v1689
    %v1724 = vpack.c.b16 %v1692, %v1691
    %1757 = vmatpush.bf16.msra.mxu0 %v1700
    %1758 = vmatpush.bf16.msra.mxu0 %v1699
    %1759 = vmatpush.bf16.msra.mxu0 %v1698
    %1760 = vmatpush.bf16.msra.mxu0 %v1697
    %1761 = vmatpush.bf16.msra.mxu0 %v1696
    %1762 = vmatpush.bf16.msra.mxu0 %v1695
    %1763 = vmatpush.bf16.msra.mxu0 %v1694
    %1764 = vmatpush.bf16.msra.mxu0 %v1693
    %1765 = vmatmul.bf16.gmra.mxu0 %v1557
    %v1766 = vpop.f32.mrf.mxu0
    %v1767 = vadd.f32 0.0, %v1766
    %v1768 = vpop.f32.mrf.mxu0
    %v1769 = vadd.f32 0.0, %v1768
    %1770 = vmatmul.bf16.gmra.mxu0 %v1561
    %v1771 = vpop.f32.mrf.mxu0
    %v1772 = vadd.f32 0.0, %v1771
    %v1773 = vpop.f32.mrf.mxu0
    %v1774 = vadd.f32 0.0, %v1773
    %1775 = vdwg.mxu0
    %1776 = vmatpush.bf16.msra.mxu0 %v1708
    %1777 = vmatpush.bf16.msra.mxu0 %v1707
    %1778 = vmatpush.bf16.msra.mxu0 %v1706
    %1779 = vmatpush.bf16.msra.mxu0 %v1705
    %1780 = vmatpush.bf16.msra.mxu0 %v1704
    %1781 = vmatpush.bf16.msra.mxu0 %v1703
    %1782 = vmatpush.bf16.msra.mxu0 %v1702
    %1783 = vmatpush.bf16.msra.mxu0 %v1701
    %1784 = vmatmul.bf16.gmra.mxu0 %v1558
    %v1785 = vpop.f32.mrf.mxu0
    %v1786 = vadd.f32 %v1767, %v1785
    %v1787 = vpop.f32.mrf.mxu0
    %v1788 = vadd.f32 %v1769, %v1787
    %1789 = vmatmul.bf16.gmra.mxu0 %v1562
    %v1790 = vpop.f32.mrf.mxu0
    %v1791 = vadd.f32 %v1772, %v1790
    %v1792 = vpop.f32.mrf.mxu0
    %v1793 = vadd.f32 %v1774, %v1792
    %1794 = vdwg.mxu0
    %1795 = vmatpush.bf16.msra.mxu0 %v1716
    %1796 = vmatpush.bf16.msra.mxu0 %v1715
    %1797 = vmatpush.bf16.msra.mxu0 %v1714
    %1798 = vmatpush.bf16.msra.mxu0 %v1713
    %1799 = vmatpush.bf16.msra.mxu0 %v1712
    %1800 = vmatpush.bf16.msra.mxu0 %v1711
    %1801 = vmatpush.bf16.msra.mxu0 %v1710
    %1802 = vmatpush.bf16.msra.mxu0 %v1709
    %1803 = vmatmul.bf16.gmra.mxu0 %v1559
    %v1804 = vpop.f32.mrf.mxu0
    %v1805 = vadd.f32 %v1786, %v1804
    %v1806 = vpop.f32.mrf.mxu0
    %v1807 = vadd.f32 %v1788, %v1806
    %1808 = vmatmul.bf16.gmra.mxu0 %v1563
    %v1809 = vpop.f32.mrf.mxu0
    %v1810 = vadd.f32 %v1791, %v1809
    %v1811 = vpop.f32.mrf.mxu0
    %v1812 = vadd.f32 %v1793, %v1811
    %1813 = vdwg.mxu0
    %1814 = vmatpush.bf16.msra.mxu0 %v1724
    %1815 = vmatpush.bf16.msra.mxu0 %v1723
    %1816 = vmatpush.bf16.msra.mxu0 %v1722
    %1817 = vmatpush.bf16.msra.mxu0 %v1721
    %1818 = vmatpush.bf16.msra.mxu0 %v1720
    %1819 = vmatpush.bf16.msra.mxu0 %v1719
    %1820 = vmatpush.bf16.msra.mxu0 %v1718
    %1821 = vmatpush.bf16.msra.mxu0 %v1717
    %1822 = vmatmul.bf16.gmra.mxu0 %v1560
    %v1823 = vpop.f32.mrf.mxu0
    %v1824 = vadd.f32 %v1805, %v1823
    %v1825 = vpop.f32.mrf.mxu0
    %v1826 = vadd.f32 %v1807, %v1825
    %1827 = vmatmul.bf16.gmra.mxu0 %v1564
    %v1828 = vpop.f32.mrf.mxu0
    %v1829 = vadd.f32 %v1810, %v1828
    %v1830 = vpop.f32.mrf.mxu0
    %v1831 = vadd.f32 %v1812, %v1830
    %1832 = vdwg.mxu0
    %v1833 = vld [vmem:[#allocation11] sm:$0x1]
    %v1834 = vld [vmem:[#allocation13] sm:$0x1]
    %v1835 = vld [vmem:[%s9] sm:$0xff]
    %v1836 = vld [vmem:[%s9 + $0x8] sm:$0xff]
    %v1837 = vld [vmem:[%s9 + $0x10] sm:$0xff]
    %v1838 = vld [vmem:[%s9 + $0x18] sm:$0xff]
    %v1839 = vld [vmem:[%s9 + $0x20] sm:$0xff]
    %v1840 = vld [vmem:[%s9 + $0x28] sm:$0xff]
    %v1841 = vld [vmem:[%s9 + $0x30] sm:$0xff]
    %v1842 = vld [vmem:[%s9 + $0x38] sm:$0xff]
    %v1843 = vld [vmem:[%s9 + $0x40] sm:$0xff]
    %v1844 = vld [vmem:[%s9 + $0x48] sm:$0xff]
    %v1845 = vld [vmem:[%s9 + $0x50] sm:$0xff]
    %v1846 = vld [vmem:[%s9 + $0x58] sm:$0xff]
    %v1847 = vld [vmem:[%s9 + $0x60] sm:$0xff]
    %v1848 = vld [vmem:[%s9 + $0x68] sm:$0xff]
    %v1849 = vld [vmem:[%s9 + $0x70] sm:$0xff]
    %v1850 = vld [vmem:[%s9 + $0x78] sm:$0xff]
    %v1851 = vld [vmem:[%s10] sm:$0xff]
    %v1852 = vld [vmem:[%s10 + $0x8] sm:$0xff]
    %v1853 = vld [vmem:[%s10 + $0x10] sm:$0xff]
    %v1854 = vld [vmem:[%s10 + $0x18] sm:$0xff]
    %v1855 = vld [vmem:[%s10 + $0x20] sm:$0xff]
    %v1856 = vld [vmem:[%s10 + $0x28] sm:$0xff]
    %v1857 = vld [vmem:[%s10 + $0x30] sm:$0xff]
    %v1858 = vld [vmem:[%s10 + $0x38] sm:$0xff]
    %v1859 = vadd.f32 %v1824, %v1826
    %v1860 = vadd.f32 %v1859, %v1829
    %v1861 = vadd.f32 %v1860, %v1831
    %v1862 = vrot.slane %v1861, 4
    %v1863 = vadd.f32 %v1861, %v1862
    %v1864 = vrot.slane %v1863, 2
    %v1865 = vadd.f32 %v1863, %v1864
    %v1866 = vrot.slane %v1865, 1
    %v1867 = vadd.f32 %v1865, %v1866
    %1868 = vmatpush.msra.mxu0 %v1850
    %1869 = vmatpush.msra.mxu0 %v1849
    %1870 = vmatpush.msra.mxu0 %v1848
    %1871 = vmatpush.msra.mxu0 %v1847
    %1872 = vmatpush.msra.mxu0 %v1846
    %1873 = vmatpush.msra.mxu0 %v1845
    %1874 = vmatpush.msra.mxu0 %v1844
    %1875 = vmatpush.msra.mxu0 %v1843
    %1876 = vmatpush.msra.mxu0 %v1842
    %1877 = vmatpush.msra.mxu0 %v1841
    %1878 = vmatpush.msra.mxu0 %v1840
    %1879 = vmatpush.msra.mxu0 %v1839
    %1880 = vmatpush.msra.mxu0 %v1838
    %1881 = vmatpush.msra.mxu0 %v1837
    %1882 = vmatpush.msra.mxu0 %v1836
    %1883 = vmatpush.msra.mxu0 %v1835
    %1884 = vmatmul.f32.gmra.mxu0 %v1867
    %v1885 = vpop.f32.mrf.mxu0
    %v1886 = vadd.f32 0.0, %v1885
    %1887 = vdwg.mxu0
    %v1888 = vmul.f32 %v1886, 0.001953125
    %v1890 = vsel %vm553, %v1888, 0
    %1892 = vmatpush.msra.mxu0 0.0
    %1893 = vmatpush.msra.mxu0 0.0
    %1894 = vmatpush.msra.mxu0 0.0
    %1895 = vmatpush.msra.mxu0 0.0
    %1896 = vmatpush.msra.mxu0 0.0
    %1897 = vmatpush.msra.mxu0 0.0
    %1898 = vmatpush.msra.mxu0 0.0
    %1899 = vmatpush.msra.mxu0 0.0
    %1900 = vmatpush.msra.mxu0 %v1858
    %1901 = vmatpush.msra.mxu0 %v1857
    %1902 = vmatpush.msra.mxu0 %v1856
    %1903 = vmatpush.msra.mxu0 %v1855
    %1904 = vmatpush.msra.mxu0 %v1854
    %1905 = vmatpush.msra.mxu0 %v1853
    %1906 = vmatpush.msra.mxu0 %v1852
    %1907 = vmatpush.msra.mxu0 %v1851
    %1908 = vmatmul.f32.gmra.mxu0 %v1890
    %v1909 = vpop.f32.mrf.mxu0
    %v1910 = vadd.f32 0.0, %v1909
    %1911 = vdwg.mxu0
    %v1912 = vperm.slane %v1910, 0
    %v1913 = vsub.f32 %v1824, %v1912
    %v1914 = vsub.f32 %v1826, %v1912
    %v1915 = vsub.f32 %v1829, %v1912
    %v1916 = vsub.f32 %v1831, %v1912
    %v1917 = vmul.f32 %v1913, %v1913
    %v1918 = vmul.f32 %v1914, %v1914
    %v1919 = vmul.f32 %v1915, %v1915
    %v1920 = vmul.f32 %v1916, %v1916
    %v1921 = vadd.f32 %v1917, %v1918
    %v1922 = vadd.f32 %v1921, %v1919
    %v1923 = vadd.f32 %v1922, %v1920
    %v1924 = vrot.slane %v1923, 4
    %v1925 = vadd.f32 %v1923, %v1924
    %v1926 = vrot.slane %v1925, 2
    %v1927 = vadd.f32 %v1925, %v1926
    %v1928 = vrot.slane %v1927, 1
    %v1929 = vadd.f32 %v1927, %v1928
    %1930 = vmatpush.msra.mxu0 %v1850
    %1931 = vmatpush.msra.mxu0 %v1849
    %1932 = vmatpush.msra.mxu0 %v1848
    %1933 = vmatpush.msra.mxu0 %v1847
    %1934 = vmatpush.msra.mxu0 %v1846
    %1935 = vmatpush.msra.mxu0 %v1845
    %1936 = vmatpush.msra.mxu0 %v1844
    %1937 = vmatpush.msra.mxu0 %v1843
    %1938 = vmatpush.msra.mxu0 %v1842
    %1939 = vmatpush.msra.mxu0 %v1841
    %1940 = vmatpush.msra.mxu0 %v1840
    %1941 = vmatpush.msra.mxu0 %v1839
    %1942 = vmatpush.msra.mxu0 %v1838
    %1943 = vmatpush.msra.mxu0 %v1837
    %1944 = vmatpush.msra.mxu0 %v1836
    %1945 = vmatpush.msra.mxu0 %v1835
    %1946 = vmatmul.f32.gmra.mxu0 %v1929
    %v1947 = vpop.f32.mrf.mxu0
    %v1948 = vadd.f32 0.0, %v1947
    %1949 = vdwg.mxu0
    %v1950 = vmul.f32 %v1948, 0.001953125
    %v1951 = vadd.f32 %v1950, 1e-05
    %v1952 = vrsqrt.pop %v1951
    %v1953 = vmul.f32 %v1952, %v1951
    %v1954 = vmul.f32 %v1953, %v1952
    %v1955 = vmul.f32 0.5, %v1954
    %v1956 = vsub.f32 1.5, %v1955
    %v1957 = vmul.f32 %v1952, %v1956
    %vm1958 = vweird.f32 %v1951
    %vm1959 = vweird.f32 %v1952
    %vm1960 = vmor %vm1958, %vm1959
    %v1961 = vsel %vm1960, %v1952, %v1957
    %v1963 = vsel %vm553, %v1961, 0
    %1965 = vmatpush.msra.mxu0 0.0
    %1966 = vmatpush.msra.mxu0 0.0
    %1967 = vmatpush.msra.mxu0 0.0
    %1968 = vmatpush.msra.mxu0 0.0
    %1969 = vmatpush.msra.mxu0 0.0
    %1970 = vmatpush.msra.mxu0 0.0
    %1971 = vmatpush.msra.mxu0 0.0
    %1972 = vmatpush.msra.mxu0 0.0
    %1973 = vmatpush.msra.mxu0 %v1858
    %1974 = vmatpush.msra.mxu0 %v1857
    %1975 = vmatpush.msra.mxu0 %v1856
    %1976 = vmatpush.msra.mxu0 %v1855
    %1977 = vmatpush.msra.mxu0 %v1854
    %1978 = vmatpush.msra.mxu0 %v1853
    %1979 = vmatpush.msra.mxu0 %v1852
    %1980 = vmatpush.msra.mxu0 %v1851
    %1981 = vmatmul.f32.gmra.mxu0 %v1963
    %v1982 = vpop.f32.mrf.mxu0
    %v1983 = vadd.f32 0.0, %v1982
    %1984 = vdwg.mxu0
    %v1985 = vperm.slane %v1983, 0
    %v1986 = vmul.f32 %v1913, %v1985
    %v1987 = vmul.f32 %v1914, %v1985
    %v1988 = vmul.f32 %v1915, %v1985
    %v1989 = vmul.f32 %v1916, %v1985
    %v1990 = vperm.slane %v1833, 0
    %v1991 = vmul.f32 %v1986, %v1990
    %v1992 = vmul.f32 %v1987, %v1990
    %v1993 = vmul.f32 %v1988, %v1990
    %v1994 = vmul.f32 %v1989, %v1990
    %v1995 = vperm.slane %v1834, 0
    %v1996 = vadd.f32 %v1991, %v1995
    %v1997 = vadd.f32 %v1992, %v1995
    %v1998 = vadd.f32 %v1993, %v1995
    %v1999 = vadd.f32 %v1994, %v1995
    %v2000 = vmul.f32 %v1996, 0.2
    %v2001 = vmul.f32 %v1997, 0.2
    %v2002 = vmul.f32 %v1998, 0.2
    %v2003 = vmul.f32 %v1999, 0.2
    %v2004 = vmax.f32 %v1996, %v2000
    %v2005 = vmax.f32 %v1997, %v2001
    %v2006 = vmax.f32 %v1998, %v2002
    %v2007 = vmax.f32 %v1999, %v2003
    %s2008 = scalar_lea.vmem %s8, 256
    %v2009 = vld [vmem:[%s2008] sm:$0xf]
    %v2010 = vld [vmem:[%s2008 + $0x4] sm:$0xf]
    %v2011 = vld [vmem:[%s2008 + $0x8] sm:$0xf]
    %v2012 = vld [vmem:[%s2008 + $0xc] sm:$0xf]
    %v2013 = vld [vmem:[%s2008 + $0x10] sm:$0xf]
    %v2014 = vld [vmem:[%s2008 + $0x14] sm:$0xf]
    %v2015 = vld [vmem:[%s2008 + $0x18] sm:$0xf]
    %v2016 = vld [vmem:[%s2008 + $0x1c] sm:$0xf]
    %v2017 = vld [vmem:[%s2008 + $0x20] sm:$0xf]
    %v2018 = vld [vmem:[%s2008 + $0x24] sm:$0xf]
    %v2019 = vld [vmem:[%s2008 + $0x28] sm:$0xf]
    %v2020 = vld [vmem:[%s2008 + $0x2c] sm:$0xf]
    %v2021 = vld [vmem:[%s2008 + $0x30] sm:$0xf]
    %v2022 = vld [vmem:[%s2008 + $0x34] sm:$0xf]
    %v2023 = vld [vmem:[%s2008 + $0x38] sm:$0xf]
    %v2024 = vld [vmem:[%s2008 + $0x3c] sm:$0xf]
    %v2025 = vld [vmem:[%s2008 + $0x40] sm:$0xf]
    %v2026 = vld [vmem:[%s2008 + $0x44] sm:$0xf]
    %v2027 = vld [vmem:[%s2008 + $0x48] sm:$0xf]
    %v2028 = vld [vmem:[%s2008 + $0x4c] sm:$0xf]
    %v2029 = vld [vmem:[%s2008 + $0x50] sm:$0xf]
    %v2030 = vld [vmem:[%s2008 + $0x54] sm:$0xf]
    %v2031 = vld [vmem:[%s2008 + $0x58] sm:$0xf]
    %v2032 = vld [vmem:[%s2008 + $0x5c] sm:$0xf]
    %v2033 = vld [vmem:[%s2008 + $0x60] sm:$0xf]
    %v2034 = vld [vmem:[%s2008 + $0x64] sm:$0xf]
    %v2035 = vld [vmem:[%s2008 + $0x68] sm:$0xf]
    %v2036 = vld [vmem:[%s2008 + $0x6c] sm:$0xf]
    %v2037 = vld [vmem:[%s2008 + $0x70] sm:$0xf]
    %v2038 = vld [vmem:[%s2008 + $0x74] sm:$0xf]
    %v2039 = vld [vmem:[%s2008 + $0x78] sm:$0xf]
    %v2040 = vld [vmem:[%s2008 + $0x7c] sm:$0xf]
    %v2041 = vld [vmem:[%s2008 + $0x80] sm:$0xf]
    %v2042 = vld [vmem:[%s2008 + $0x84] sm:$0xf]
    %v2043 = vld [vmem:[%s2008 + $0x88] sm:$0xf]
    %v2044 = vld [vmem:[%s2008 + $0x8c] sm:$0xf]
    %v2045 = vld [vmem:[%s2008 + $0x90] sm:$0xf]
    %v2046 = vld [vmem:[%s2008 + $0x94] sm:$0xf]
    %v2047 = vld [vmem:[%s2008 + $0x98] sm:$0xf]
    %v2048 = vld [vmem:[%s2008 + $0x9c] sm:$0xf]
    %v2049 = vld [vmem:[%s2008 + $0xa0] sm:$0xf]
    %v2050 = vld [vmem:[%s2008 + $0xa4] sm:$0xf]
    %v2051 = vld [vmem:[%s2008 + $0xa8] sm:$0xf]
    %v2052 = vld [vmem:[%s2008 + $0xac] sm:$0xf]
    %v2053 = vld [vmem:[%s2008 + $0xb0] sm:$0xf]
    %v2054 = vld [vmem:[%s2008 + $0xb4] sm:$0xf]
    %v2055 = vld [vmem:[%s2008 + $0xb8] sm:$0xf]
    %v2056 = vld [vmem:[%s2008 + $0xbc] sm:$0xf]
    %v2057 = vld [vmem:[%s2008 + $0xc0] sm:$0xf]
    %v2058 = vld [vmem:[%s2008 + $0xc4] sm:$0xf]
    %v2059 = vld [vmem:[%s2008 + $0xc8] sm:$0xf]
    %v2060 = vld [vmem:[%s2008 + $0xcc] sm:$0xf]
    %v2061 = vld [vmem:[%s2008 + $0xd0] sm:$0xf]
    %v2062 = vld [vmem:[%s2008 + $0xd4] sm:$0xf]
    %v2063 = vld [vmem:[%s2008 + $0xd8] sm:$0xf]
    %v2064 = vld [vmem:[%s2008 + $0xdc] sm:$0xf]
    %v2065 = vld [vmem:[%s2008 + $0xe0] sm:$0xf]
    %v2066 = vld [vmem:[%s2008 + $0xe4] sm:$0xf]
    %v2067 = vld [vmem:[%s2008 + $0xe8] sm:$0xf]
    %v2068 = vld [vmem:[%s2008 + $0xec] sm:$0xf]
    %v2069 = vld [vmem:[%s2008 + $0xf0] sm:$0xf]
    %v2070 = vld [vmem:[%s2008 + $0xf4] sm:$0xf]
    %v2071 = vld [vmem:[%s2008 + $0xf8] sm:$0xf]
    %v2072 = vld [vmem:[%s2008 + $0xfc] sm:$0xf]
    %v2073 = vld [vmem:[#allocation5] sm:$0xf]
    %v2074 = vld [vmem:[#allocation5 + $0x4] sm:$0xf]
    %v2075 = vpack.c.bf16 %v2005, %v2004
    %v2076 = vpack.c.bf16 %v2007, %v2006
    %v2079 = vunpack.c.l.b16 %v2073
    %v2080 = vunpack.c.l.b16 %v2074
    %v2081 = vpack.c.b16 %v2080, %v2079
    %vm2082 = vcmask 261120
    %v2084 = vsel %vm2082, %v2081, 0
    %2086 = vmatpush.bf16.msra.mxu0 0
    %2087 = vmatpush.bf16.msra.mxu0 0
    %2088 = vmatpush.bf16.msra.mxu0 0
    %2089 = vmatpush.bf16.msra.mxu0 0
    %2090 = vmatpush.bf16.msra.mxu0 0
    %2091 = vmatpush.bf16.msra.mxu0 0
    %2092 = vmatpush.bf16.msra.mxu0 %v2076
    %2093 = vmatpush.bf16.msra.mxu0 %v2075
    %2094 = vmatmul.bf16.gmra.mxu0 %v2084
    %v2095 = vpop.f32.mrf.mxu0
    %v2096 = vadd.f32 0.0, %v2095
    %v2097 = vpop.f32.mrf.mxu0
    %v2098 = vadd.f32 0.0, %v2097
    %2099 = vdwg.mxu0
    %s2100 = scalar_lea.vmem [#allocation5], 8
    %v2101 = vld [vmem:[%s2100] sm:$0xf]
    %v2102 = vld [vmem:[%s2100 + $0x4] sm:$0xf]
    %v2105 = vunpack.c.l.b16 %v2101
    %v2106 = vunpack.c.l.b16 %v2102
    %v2107 = vpack.c.b16 %v2106, %v2105
    %v2109 = vsel %vm2082, %v2107, 0
    %2111 = vmatpush.bf16.msra.mxu0 0
    %2112 = vmatpush.bf16.msra.mxu0 0
    %2113 = vmatpush.bf16.msra.mxu0 0
    %2114 = vmatpush.bf16.msra.mxu0 0
    %2115 = vmatpush.bf16.msra.mxu0 0
    %2116 = vmatpush.bf16.msra.mxu0 0
    %2117 = vmatpush.bf16.msra.mxu0 %v2076
    %2118 = vmatpush.bf16.msra.mxu0 %v2075
    %2119 = vmatmul.bf16.gmra.mxu0 %v2109
    %v2120 = vpop.f32.mrf.mxu0
    %v2121 = vadd.f32 0.0, %v2120
    %v2122 = vpop.f32.mrf.mxu0
    %v2123 = vadd.f32 0.0, %v2122
    %2124 = vdwg.mxu0
    %s2125 = scalar_lea.vmem [#allocation5], 16
    %v2126 = vld [vmem:[%s2125] sm:$0xf]
    %v2127 = vld [vmem:[%s2125 + $0x4] sm:$0xf]
    %v2130 = vunpack.c.l.b16 %v2126
    %v2131 = vunpack.c.l.b16 %v2127
    %v2132 = vpack.c.b16 %v2131, %v2130
    %v2134 = vsel %vm2082, %v2132, 0
    %2136 = vmatpush.bf16.msra.mxu0 0
    %2137 = vmatpush.bf16.msra.mxu0 0
    %2138 = vmatpush.bf16.msra.mxu0 0
    %2139 = vmatpush.bf16.msra.mxu0 0
    %2140 = vmatpush.bf16.msra.mxu0 0
    %2141 = vmatpush.bf16.msra.mxu0 0
    %2142 = vmatpush.bf16.msra.mxu0 %v2076
    %2143 = vmatpush.bf16.msra.mxu0 %v2075
    %2144 = vmatmul.bf16.gmra.mxu0 %v2134
    %v2145 = vpop.f32.mrf.mxu0
    %v2146 = vadd.f32 0.0, %v2145
    %v2147 = vpop.f32.mrf.mxu0
    %v2148 = vadd.f32 0.0, %v2147
    %2149 = vdwg.mxu0
    %s2150 = scalar_lea.vmem [#allocation5], 24
    %v2151 = vld [vmem:[%s2150] sm:$0xf]
    %v2152 = vld [vmem:[%s2150 + $0x4] sm:$0xf]
    %v2155 = vunpack.c.l.b16 %v2151
    %v2156 = vunpack.c.l.b16 %v2152
    %v2157 = vpack.c.b16 %v2156, %v2155
    %v2159 = vsel %vm2082, %v2157, 0
    %2161 = vmatpush.bf16.msra.mxu0 0
    %2162 = vmatpush.bf16.msra.mxu0 0
    %2163 = vmatpush.bf16.msra.mxu0 0
    %2164 = vmatpush.bf16.msra.mxu0 0
    %2165 = vmatpush.bf16.msra.mxu0 0
    %2166 = vmatpush.bf16.msra.mxu0 0
    %2167 = vmatpush.bf16.msra.mxu0 %v2076
    %2168 = vmatpush.bf16.msra.mxu0 %v2075
    %2169 = vmatmul.bf16.gmra.mxu0 %v2159
    %v2170 = vpop.f32.mrf.mxu0
    %v2171 = vadd.f32 0.0, %v2170
    %v2172 = vpop.f32.mrf.mxu0
    %v2173 = vadd.f32 0.0, %v2172
    %2174 = vdwg.mxu0
    %v2175 = vpack.c.bf16 %v2098, %v2096
    %v2176 = vpack.c.bf16 %v2123, %v2121
    %v2177 = vpack.c.bf16 %v2148, %v2146
    %v2178 = vpack.c.bf16 %v2173, %v2171
    %v2243 = vunpack.c.l.b16 %v2009
    %v2244 = vunpack.c.l.b16 %v2010
    %v2245 = vunpack.c.l.b16 %v2011
    %v2246 = vunpack.c.l.b16 %v2012
    %v2247 = vunpack.c.l.b16 %v2013
    %v2248 = vunpack.c.l.b16 %v2014
    %v2249 = vunpack.c.l.b16 %v2015
    %v2250 = vunpack.c.l.b16 %v2016
    %v2251 = vunpack.c.l.b16 %v2017
    %v2252 = vunpack.c.l.b16 %v2018
    %v2253 = vunpack.c.l.b16 %v2019
    %v2254 = vunpack.c.l.b16 %v2020
    %v2255 = vunpack.c.l.b16 %v2021
    %v2256 = vunpack.c.l.b16 %v2022
    %v2257 = vunpack.c.l.b16 %v2023
    %v2258 = vunpack.c.l.b16 %v2024
    %v2259 = vunpack.c.l.b16 %v2025
    %v2260 = vunpack.c.l.b16 %v2026
    %v2261 = vunpack.c.l.b16 %v2027
    %v2262 = vunpack.c.l.b16 %v2028
    %v2263 = vunpack.c.l.b16 %v2029
    %v2264 = vunpack.c.l.b16 %v2030
    %v2265 = vunpack.c.l.b16 %v2031
    %v2266 = vunpack.c.l.b16 %v2032
    %v2267 = vunpack.c.l.b16 %v2033
    %v2268 = vunpack.c.l.b16 %v2034
    %v2269 = vunpack.c.l.b16 %v2035
    %v2270 = vunpack.c.l.b16 %v2036
    %v2271 = vunpack.c.l.b16 %v2037
    %v2272 = vunpack.c.l.b16 %v2038
    %v2273 = vunpack.c.l.b16 %v2039
    %v2274 = vunpack.c.l.b16 %v2040
    %v2275 = vunpack.c.l.b16 %v2041
    %v2276 = vunpack.c.l.b16 %v2042
    %v2277 = vunpack.c.l.b16 %v2043
    %v2278 = vunpack.c.l.b16 %v2044
    %v2279 = vunpack.c.l.b16 %v2045
    %v2280 = vunpack.c.l.b16 %v2046
    %v2281 = vunpack.c.l.b16 %v2047
    %v2282 = vunpack.c.l.b16 %v2048
    %v2283 = vunpack.c.l.b16 %v2049
    %v2284 = vunpack.c.l.b16 %v2050
    %v2285 = vunpack.c.l.b16 %v2051
    %v2286 = vunpack.c.l.b16 %v2052
    %v2287 = vunpack.c.l.b16 %v2053
    %v2288 = vunpack.c.l.b16 %v2054
    %v2289 = vunpack.c.l.b16 %v2055
    %v2290 = vunpack.c.l.b16 %v2056
    %v2291 = vunpack.c.l.b16 %v2057
    %v2292 = vunpack.c.l.b16 %v2058
    %v2293 = vunpack.c.l.b16 %v2059
    %v2294 = vunpack.c.l.b16 %v2060
    %v2295 = vunpack.c.l.b16 %v2061
    %v2296 = vunpack.c.l.b16 %v2062
    %v2297 = vunpack.c.l.b16 %v2063
    %v2298 = vunpack.c.l.b16 %v2064
    %v2299 = vunpack.c.l.b16 %v2065
    %v2300 = vunpack.c.l.b16 %v2066
    %v2301 = vunpack.c.l.b16 %v2067
    %v2302 = vunpack.c.l.b16 %v2068
    %v2303 = vunpack.c.l.b16 %v2069
    %v2304 = vunpack.c.l.b16 %v2070
    %v2305 = vunpack.c.l.b16 %v2071
    %v2306 = vunpack.c.l.b16 %v2072
    %v2307 = vpack.c.b16 %v2244, %v2243
    %v2308 = vpack.c.b16 %v2246, %v2245
    %v2309 = vpack.c.b16 %v2248, %v2247
    %v2310 = vpack.c.b16 %v2250, %v2249
    %v2311 = vpack.c.b16 %v2252, %v2251
    %v2312 = vpack.c.b16 %v2254, %v2253
    %v2313 = vpack.c.b16 %v2256, %v2255
    %v2314 = vpack.c.b16 %v2258, %v2257
    %v2315 = vpack.c.b16 %v2260, %v2259
    %v2316 = vpack.c.b16 %v2262, %v2261
    %v2317 = vpack.c.b16 %v2264, %v2263
    %v2318 = vpack.c.b16 %v2266, %v2265
    %v2319 = vpack.c.b16 %v2268, %v2267
    %v2320 = vpack.c.b16 %v2270, %v2269
    %v2321 = vpack.c.b16 %v2272, %v2271
    %v2322 = vpack.c.b16 %v2274, %v2273
    %v2323 = vpack.c.b16 %v2276, %v2275
    %v2324 = vpack.c.b16 %v2278, %v2277
    %v2325 = vpack.c.b16 %v2280, %v2279
    %v2326 = vpack.c.b16 %v2282, %v2281
    %v2327 = vpack.c.b16 %v2284, %v2283
    %v2328 = vpack.c.b16 %v2286, %v2285
    %v2329 = vpack.c.b16 %v2288, %v2287
    %v2330 = vpack.c.b16 %v2290, %v2289
    %v2331 = vpack.c.b16 %v2292, %v2291
    %v2332 = vpack.c.b16 %v2294, %v2293
    %v2333 = vpack.c.b16 %v2296, %v2295
    %v2334 = vpack.c.b16 %v2298, %v2297
    %v2335 = vpack.c.b16 %v2300, %v2299
    %v2336 = vpack.c.b16 %v2302, %v2301
    %v2337 = vpack.c.b16 %v2304, %v2303
    %v2338 = vpack.c.b16 %v2306, %v2305
    %2371 = vmatpush.bf16.msra.mxu0 %v2314
    %2372 = vmatpush.bf16.msra.mxu0 %v2313
    %2373 = vmatpush.bf16.msra.mxu0 %v2312
    %2374 = vmatpush.bf16.msra.mxu0 %v2311
    %2375 = vmatpush.bf16.msra.mxu0 %v2310
    %2376 = vmatpush.bf16.msra.mxu0 %v2309
    %2377 = vmatpush.bf16.msra.mxu0 %v2308
    %2378 = vmatpush.bf16.msra.mxu0 %v2307
    %2379 = vmatmul.bf16.gmra.mxu0 %v2175
    %v2380 = vpop.f32.mrf.mxu0
    %v2381 = vadd.f32 0.0, %v2380
    %v2382 = vpop.f32.mrf.mxu0
    %v2383 = vadd.f32 0.0, %v2382
    %2384 = vdwg.mxu0
    %2385 = vmatpush.bf16.msra.mxu0 %v2322
    %2386 = vmatpush.bf16.msra.mxu0 %v2321
    %2387 = vmatpush.bf16.msra.mxu0 %v2320
    %2388 = vmatpush.bf16.msra.mxu0 %v2319
    %2389 = vmatpush.bf16.msra.mxu0 %v2318
    %2390 = vmatpush.bf16.msra.mxu0 %v2317
    %2391 = vmatpush.bf16.msra.mxu0 %v2316
    %2392 = vmatpush.bf16.msra.mxu0 %v2315
    %2393 = vmatmul.bf16.gmra.mxu0 %v2176
    %v2394 = vpop.f32.mrf.mxu0
    %v2395 = vadd.f32 %v2381, %v2394
    %v2396 = vpop.f32.mrf.mxu0
    %v2397 = vadd.f32 %v2383, %v2396
    %2398 = vdwg.mxu0
    %2399 = vmatpush.bf16.msra.mxu0 %v2330
    %2400 = vmatpush.bf16.msra.mxu0 %v2329
    %2401 = vmatpush.bf16.msra.mxu0 %v2328
    %2402 = vmatpush.bf16.msra.mxu0 %v2327
    %2403 = vmatpush.bf16.msra.mxu0 %v2326
    %2404 = vmatpush.bf16.msra.mxu0 %v2325
    %2405 = vmatpush.bf16.msra.mxu0 %v2324
    %2406 = vmatpush.bf16.msra.mxu0 %v2323
    %2407 = vmatmul.bf16.gmra.mxu0 %v2177
    %v2408 = vpop.f32.mrf.mxu0
    %v2409 = vadd.f32 %v2395, %v2408
    %v2410 = vpop.f32.mrf.mxu0
    %v2411 = vadd.f32 %v2397, %v2410
    %2412 = vdwg.mxu0
    %2413 = vmatpush.bf16.msra.mxu0 %v2338
    %2414 = vmatpush.bf16.msra.mxu0 %v2337
    %2415 = vmatpush.bf16.msra.mxu0 %v2336
    %2416 = vmatpush.bf16.msra.mxu0 %v2335
    %2417 = vmatpush.bf16.msra.mxu0 %v2334
    %2418 = vmatpush.bf16.msra.mxu0 %v2333
    %2419 = vmatpush.bf16.msra.mxu0 %v2332
    %2420 = vmatpush.bf16.msra.mxu0 %v2331
    %2421 = vmatmul.bf16.gmra.mxu0 %v2178
    %v2422 = vpop.f32.mrf.mxu0
    %v2423 = vadd.f32 %v2409, %v2422
    %v2424 = vpop.f32.mrf.mxu0
    %v2425 = vadd.f32 %v2411, %v2424
    %2426 = vdwg.mxu0
    %v2427 = vld [vmem:[#allocation11 + $0x1] sm:$0x1]
    %v2428 = vld [vmem:[#allocation13 + $0x1] sm:$0x1]
    %s2429 = scalar_lea.vmem %s9, 128
    %v2430 = vld [vmem:[%s2429] sm:$0xff]
    %v2431 = vld [vmem:[%s2429 + $0x8] sm:$0xff]
    %v2432 = vld [vmem:[%s2429 + $0x10] sm:$0xff]
    %v2433 = vld [vmem:[%s2429 + $0x18] sm:$0xff]
    %v2434 = vld [vmem:[%s2429 + $0x20] sm:$0xff]
    %v2435 = vld [vmem:[%s2429 + $0x28] sm:$0xff]
    %v2436 = vld [vmem:[%s2429 + $0x30] sm:$0xff]
    %v2437 = vld [vmem:[%s2429 + $0x38] sm:$0xff]
    %v2438 = vld [vmem:[%s2429 + $0x40] sm:$0xff]
    %v2439 = vld [vmem:[%s2429 + $0x48] sm:$0xff]
    %v2440 = vld [vmem:[%s2429 + $0x50] sm:$0xff]
    %v2441 = vld [vmem:[%s2429 + $0x58] sm:$0xff]
    %v2442 = vld [vmem:[%s2429 + $0x60] sm:$0xff]
    %v2443 = vld [vmem:[%s2429 + $0x68] sm:$0xff]
    %v2444 = vld [vmem:[%s2429 + $0x70] sm:$0xff]
    %v2445 = vld [vmem:[%s2429 + $0x78] sm:$0xff]
    %s2446 = scalar_lea.vmem %s10, 64
    %v2447 = vld [vmem:[%s2446] sm:$0xff]
    %v2448 = vld [vmem:[%s2446 + $0x8] sm:$0xff]
    %v2449 = vld [vmem:[%s2446 + $0x10] sm:$0xff]
    %v2450 = vld [vmem:[%s2446 + $0x18] sm:$0xff]
    %v2451 = vld [vmem:[%s2446 + $0x20] sm:$0xff]
    %v2452 = vld [vmem:[%s2446 + $0x28] sm:$0xff]
    %v2453 = vld [vmem:[%s2446 + $0x30] sm:$0xff]
    %v2454 = vld [vmem:[%s2446 + $0x38] sm:$0xff]
    %v2455 = vadd.f32 %v2423, %v2425
    %v2456 = vrot.slane %v2455, 4
    %v2457 = vadd.f32 %v2455, %v2456
    %v2458 = vrot.slane %v2457, 2
    %v2459 = vadd.f32 %v2457, %v2458
    %v2460 = vrot.slane %v2459, 1
    %v2461 = vadd.f32 %v2459, %v2460
    %2462 = vmatpush.msra.mxu0 %v2445
    %2463 = vmatpush.msra.mxu0 %v2444
    %2464 = vmatpush.msra.mxu0 %v2443
    %2465 = vmatpush.msra.mxu0 %v2442
    %2466 = vmatpush.msra.mxu0 %v2441
    %2467 = vmatpush.msra.mxu0 %v2440
    %2468 = vmatpush.msra.mxu0 %v2439
    %2469 = vmatpush.msra.mxu0 %v2438
    %2470 = vmatpush.msra.mxu0 %v2437
    %2471 = vmatpush.msra.mxu0 %v2436
    %2472 = vmatpush.msra.mxu0 %v2435
    %2473 = vmatpush.msra.mxu0 %v2434
    %2474 = vmatpush.msra.mxu0 %v2433
    %2475 = vmatpush.msra.mxu0 %v2432
    %2476 = vmatpush.msra.mxu0 %v2431
    %2477 = vmatpush.msra.mxu0 %v2430
    %2478 = vmatmul.f32.gmra.mxu0 %v2461
    %v2479 = vpop.f32.mrf.mxu0
    %v2480 = vadd.f32 0.0, %v2479
    %2481 = vdwg.mxu0
    %v2482 = vmul.f32 %v2480, 0.0078125
    %v2484 = vsel %vm553, %v2482, 0
    %2486 = vmatpush.msra.mxu0 0.0
    %2487 = vmatpush.msra.mxu0 0.0
    %2488 = vmatpush.msra.mxu0 0.0
    %2489 = vmatpush.msra.mxu0 0.0
    %2490 = vmatpush.msra.mxu0 0.0
    %2491 = vmatpush.msra.mxu0 0.0
    %2492 = vmatpush.msra.mxu0 0.0
    %2493 = vmatpush.msra.mxu0 0.0
    %2494 = vmatpush.msra.mxu0 %v2454
    %2495 = vmatpush.msra.mxu0 %v2453
    %2496 = vmatpush.msra.mxu0 %v2452
    %2497 = vmatpush.msra.mxu0 %v2451
    %2498 = vmatpush.msra.mxu0 %v2450
    %2499 = vmatpush.msra.mxu0 %v2449
    %2500 = vmatpush.msra.mxu0 %v2448
    %2501 = vmatpush.msra.mxu0 %v2447
    %2502 = vmatmul.f32.gmra.mxu0 %v2484
    %v2503 = vpop.f32.mrf.mxu0
    %v2504 = vadd.f32 0.0, %v2503
    %2505 = vdwg.mxu0
    %v2506 = vperm.slane %v2504, 0
    %v2507 = vsub.f32 %v2423, %v2506
    %v2508 = vsub.f32 %v2425, %v2506
    %v2509 = vmul.f32 %v2507, %v2507
    %v2510 = vmul.f32 %v2508, %v2508
    %v2511 = vadd.f32 %v2509, %v2510
    %v2512 = vrot.slane %v2511, 4
    %v2513 = vadd.f32 %v2511, %v2512
    %v2514 = vrot.slane %v2513, 2
    %v2515 = vadd.f32 %v2513, %v2514
    %v2516 = vrot.slane %v2515, 1
    %v2517 = vadd.f32 %v2515, %v2516
    %2518 = vmatpush.msra.mxu0 %v2445
    %2519 = vmatpush.msra.mxu0 %v2444
    %2520 = vmatpush.msra.mxu0 %v2443
    %2521 = vmatpush.msra.mxu0 %v2442
    %2522 = vmatpush.msra.mxu0 %v2441
    %2523 = vmatpush.msra.mxu0 %v2440
    %2524 = vmatpush.msra.mxu0 %v2439
    %2525 = vmatpush.msra.mxu0 %v2438
    %2526 = vmatpush.msra.mxu0 %v2437
    %2527 = vmatpush.msra.mxu0 %v2436
    %2528 = vmatpush.msra.mxu0 %v2435
    %2529 = vmatpush.msra.mxu0 %v2434
    %2530 = vmatpush.msra.mxu0 %v2433
    %2531 = vmatpush.msra.mxu0 %v2432
    %2532 = vmatpush.msra.mxu0 %v2431
    %2533 = vmatpush.msra.mxu0 %v2430
    %2534 = vmatmul.f32.gmra.mxu0 %v2517
    %v2535 = vpop.f32.mrf.mxu0
    %v2536 = vadd.f32 0.0, %v2535
    %2537 = vdwg.mxu0
    %v2538 = vmul.f32 %v2536, 0.0078125
    %v2539 = vadd.f32 %v2538, 1e-05
    %v2540 = vrsqrt.pop %v2539
    %v2541 = vmul.f32 %v2540, %v2539
    %v2542 = vmul.f32 %v2541, %v2540
    %v2543 = vmul.f32 0.5, %v2542
    %v2544 = vsub.f32 1.5, %v2543
    %v2545 = vmul.f32 %v2540, %v2544
    %vm2546 = vweird.f32 %v2539
    %vm2547 = vweird.f32 %v2540
    %vm2548 = vmor %vm2546, %vm2547
    %v2549 = vsel %vm2548, %v2540, %v2545
    %v2551 = vsel %vm553, %v2549, 0
    %2553 = vmatpush.msra.mxu0 0.0
    %2554 = vmatpush.msra.mxu0 0.0
    %2555 = vmatpush.msra.mxu0 0.0
    %2556 = vmatpush.msra.mxu0 0.0
    %2557 = vmatpush.msra.mxu0 0.0
    %2558 = vmatpush.msra.mxu0 0.0
    %2559 = vmatpush.msra.mxu0 0.0
    %2560 = vmatpush.msra.mxu0 0.0
    %2561 = vmatpush.msra.mxu0 %v2454
    %2562 = vmatpush.msra.mxu0 %v2453
    %2563 = vmatpush.msra.mxu0 %v2452
    %2564 = vmatpush.msra.mxu0 %v2451
    %2565 = vmatpush.msra.mxu0 %v2450
    %2566 = vmatpush.msra.mxu0 %v2449
    %2567 = vmatpush.msra.mxu0 %v2448
    %2568 = vmatpush.msra.mxu0 %v2447
    %2569 = vmatmul.f32.gmra.mxu0 %v2551
    %v2570 = vpop.f32.mrf.mxu0
    %v2571 = vadd.f32 0.0, %v2570
    %2572 = vdwg.mxu0
    %v2573 = vperm.slane %v2571, 0
    %v2574 = vmul.f32 %v2507, %v2573
    %v2575 = vmul.f32 %v2508, %v2573
    %v2576 = vperm.slane %v2427, 0
    %v2577 = vmul.f32 %v2574, %v2576
    %v2578 = vmul.f32 %v2575, %v2576
    %v2579 = vperm.slane %v2428, 0
    %v2580 = vadd.f32 %v2577, %v2579
    %v2581 = vadd.f32 %v2578, %v2579
    %v2582 = vmul.f32 %v2580, 0.2
    %v2583 = vmul.f32 %v2581, 0.2
    %v2584 = vmax.f32 %v2580, %v2582
    %v2585 = vmax.f32 %v2581, %v2583
    %s2586 = scalar_lea.vmem %s8, 512
    %v2587 = vld [vmem:[%s2586] sm:$0xf]
    %v2588 = vld [vmem:[%s2586 + $0x4] sm:$0xf]
    %v2589 = vld [vmem:[%s2586 + $0x8] sm:$0xf]
    %v2590 = vld [vmem:[%s2586 + $0xc] sm:$0xf]
    %v2591 = vld [vmem:[%s2586 + $0x10] sm:$0xf]
    %v2592 = vld [vmem:[%s2586 + $0x14] sm:$0xf]
    %v2593 = vld [vmem:[%s2586 + $0x18] sm:$0xf]
    %v2594 = vld [vmem:[%s2586 + $0x1c] sm:$0xf]
    %v2595 = vld [vmem:[%s2586 + $0x20] sm:$0xf]
    %v2596 = vld [vmem:[%s2586 + $0x24] sm:$0xf]
    %v2597 = vld [vmem:[%s2586 + $0x28] sm:$0xf]
    %v2598 = vld [vmem:[%s2586 + $0x2c] sm:$0xf]
    %v2599 = vld [vmem:[%s2586 + $0x30] sm:$0xf]
    %v2600 = vld [vmem:[%s2586 + $0x34] sm:$0xf]
    %v2601 = vld [vmem:[%s2586 + $0x38] sm:$0xf]
    %v2602 = vld [vmem:[%s2586 + $0x3c] sm:$0xf]
    %v2603 = vld [vmem:[%s2586 + $0x40] sm:$0xf]
    %v2604 = vld [vmem:[%s2586 + $0x44] sm:$0xf]
    %v2605 = vld [vmem:[%s2586 + $0x48] sm:$0xf]
    %v2606 = vld [vmem:[%s2586 + $0x4c] sm:$0xf]
    %v2607 = vld [vmem:[%s2586 + $0x50] sm:$0xf]
    %v2608 = vld [vmem:[%s2586 + $0x54] sm:$0xf]
    %v2609 = vld [vmem:[%s2586 + $0x58] sm:$0xf]
    %v2610 = vld [vmem:[%s2586 + $0x5c] sm:$0xf]
    %v2611 = vld [vmem:[%s2586 + $0x60] sm:$0xf]
    %v2612 = vld [vmem:[%s2586 + $0x64] sm:$0xf]
    %v2613 = vld [vmem:[%s2586 + $0x68] sm:$0xf]
    %v2614 = vld [vmem:[%s2586 + $0x6c] sm:$0xf]
    %v2615 = vld [vmem:[%s2586 + $0x70] sm:$0xf]
    %v2616 = vld [vmem:[%s2586 + $0x74] sm:$0xf]
    %v2617 = vld [vmem:[%s2586 + $0x78] sm:$0xf]
    %v2618 = vld [vmem:[%s2586 + $0x7c] sm:$0xf]
    %v2619 = vld [vmem:[%s2586 + $0x80] sm:$0xf]
    %v2620 = vld [vmem:[%s2586 + $0x84] sm:$0xf]
    %v2621 = vld [vmem:[%s2586 + $0x88] sm:$0xf]
    %v2622 = vld [vmem:[%s2586 + $0x8c] sm:$0xf]
    %v2623 = vld [vmem:[%s2586 + $0x90] sm:$0xf]
    %v2624 = vld [vmem:[%s2586 + $0x94] sm:$0xf]
    %v2625 = vld [vmem:[%s2586 + $0x98] sm:$0xf]
    %v2626 = vld [vmem:[%s2586 + $0x9c] sm:$0xf]
    %v2627 = vld [vmem:[%s2586 + $0xa0] sm:$0xf]
    %v2628 = vld [vmem:[%s2586 + $0xa4] sm:$0xf]
    %v2629 = vld [vmem:[%s2586 + $0xa8] sm:$0xf]
    %v2630 = vld [vmem:[%s2586 + $0xac] sm:$0xf]
    %v2631 = vld [vmem:[%s2586 + $0xb0] sm:$0xf]
    %v2632 = vld [vmem:[%s2586 + $0xb4] sm:$0xf]
    %v2633 = vld [vmem:[%s2586 + $0xb8] sm:$0xf]
    %v2634 = vld [vmem:[%s2586 + $0xbc] sm:$0xf]
    %v2635 = vld [vmem:[%s2586 + $0xc0] sm:$0xf]
    %v2636 = vld [vmem:[%s2586 + $0xc4] sm:$0xf]
    %v2637 = vld [vmem:[%s2586 + $0xc8] sm:$0xf]
    %v2638 = vld [vmem:[%s2586 + $0xcc] sm:$0xf]
    %v2639 = vld [vmem:[%s2586 + $0xd0] sm:$0xf]
    %v2640 = vld [vmem:[%s2586 + $0xd4] sm:$0xf]
    %v2641 = vld [vmem:[%s2586 + $0xd8] sm:$0xf]
    %v2642 = vld [vmem:[%s2586 + $0xdc] sm:$0xf]
    %v2643 = vld [vmem:[%s2586 + $0xe0] sm:$0xf]
    %v2644 = vld [vmem:[%s2586 + $0xe4] sm:$0xf]
    %v2645 = vld [vmem:[%s2586 + $0xe8] sm:$0xf]
    %v2646 = vld [vmem:[%s2586 + $0xec] sm:$0xf]
    %v2647 = vld [vmem:[%s2586 + $0xf0] sm:$0xf]
    %v2648 = vld [vmem:[%s2586 + $0xf4] sm:$0xf]
    %v2649 = vld [vmem:[%s2586 + $0xf8] sm:$0xf]
    %v2650 = vld [vmem:[%s2586 + $0xfc] sm:$0xf]
    %v2651 = vld [vmem:[#allocation7] sm:$0xf]
    %v2652 = vpack.c.bf16 %v2585, %v2584
    %vm2653 = vcmask 130048
    %v2655 = vsel %vm2653, %v2651, 0
    %2657 = vmatpush.bf16.msra.mxu0 0
    %2658 = vmatpush.bf16.msra.mxu0 0
    %2659 = vmatpush.bf16.msra.mxu0 0
    %2660 = vmatpush.bf16.msra.mxu0 0
    %2661 = vmatpush.bf16.msra.mxu0 0
    %2662 = vmatpush.bf16.msra.mxu0 0
    %2663 = vmatpush.bf16.msra.mxu0 0
    %2664 = vmatpush.bf16.msra.mxu0 %v2652
    %2665 = vmatmul.bf16.gmra.mxu0 %v2655
    %v2666 = vpop.f32.mrf.mxu0
    %v2667 = vadd.f32 0.0, %v2666
    %v2668 = vpop.f32.mrf.mxu0
    %2669 = vdwg.mxu0
    %s2670 = scalar_lea.vmem [#allocation7], 4
    %v2671 = vld [vmem:[%s2670] sm:$0xf]
    %v2673 = vsel %vm2653, %v2671, 0
    %2675 = vmatpush.bf16.msra.mxu0 0
    %2676 = vmatpush.bf16.msra.mxu0 0
    %2677 = vmatpush.bf16.msra.mxu0 0
    %2678 = vmatpush.bf16.msra.mxu0 0
    %2679 = vmatpush.bf16.msra.mxu0 0
    %2680 = vmatpush.bf16.msra.mxu0 0
    %2681 = vmatpush.bf16.msra.mxu0 0
    %2682 = vmatpush.bf16.msra.mxu0 %v2652
    %2683 = vmatmul.bf16.gmra.mxu0 %v2673
    %v2684 = vpop.f32.mrf.mxu0
    %v2685 = vadd.f32 0.0, %v2684
    %v2686 = vpop.f32.mrf.mxu0
    %2687 = vdwg.mxu0
    %s2688 = scalar_lea.vmem [#allocation7], 8
    %v2689 = vld [vmem:[%s2688] sm:$0xf]
    %v2691 = vsel %vm2653, %v2689, 0
    %2693 = vmatpush.bf16.msra.mxu0 0
    %2694 = vmatpush.bf16.msra.mxu0 0
    %2695 = vmatpush.bf16.msra.mxu0 0
    %2696 = vmatpush.bf16.msra.mxu0 0
    %2697 = vmatpush.bf16.msra.mxu0 0
    %2698 = vmatpush.bf16.msra.mxu0 0
    %2699 = vmatpush.bf16.msra.mxu0 0
    %2700 = vmatpush.bf16.msra.mxu0 %v2652
    %2701 = vmatmul.bf16.gmra.mxu0 %v2691
    %v2702 = vpop.f32.mrf.mxu0
    %v2703 = vadd.f32 0.0, %v2702
    %v2704 = vpop.f32.mrf.mxu0
    %2705 = vdwg.mxu0
    %s2706 = scalar_lea.vmem [#allocation7], 12
    %v2707 = vld [vmem:[%s2706] sm:$0xf]
    %v2709 = vsel %vm2653, %v2707, 0
    %2711 = vmatpush.bf16.msra.mxu0 0
    %2712 = vmatpush.bf16.msra.mxu0 0
    %2713 = vmatpush.bf16.msra.mxu0 0
    %2714 = vmatpush.bf16.msra.mxu0 0
    %2715 = vmatpush.bf16.msra.mxu0 0
    %2716 = vmatpush.bf16.msra.mxu0 0
    %2717 = vmatpush.bf16.msra.mxu0 0
    %2718 = vmatpush.bf16.msra.mxu0 %v2652
    %2719 = vmatmul.bf16.gmra.mxu0 %v2709
    %v2720 = vpop.f32.mrf.mxu0
    %v2721 = vadd.f32 0.0, %v2720
    %v2722 = vpop.f32.mrf.mxu0
    %2723 = vdwg.mxu0
    %v2724 = vpack.c.bf16 %v2667, %v2667
    %v2725 = vpack.c.bf16 %v2685, %v2685
    %v2726 = vpack.c.bf16 %v2703, %v2703
    %v2727 = vpack.c.bf16 %v2721, %v2721
    %v2792 = vunpack.c.l.b16 %v2587
    %v2793 = vunpack.c.l.b16 %v2588
    %v2794 = vunpack.c.l.b16 %v2589
    %v2795 = vunpack.c.l.b16 %v2590
    %v2796 = vunpack.c.l.b16 %v2591
    %v2797 = vunpack.c.l.b16 %v2592
    %v2798 = vunpack.c.l.b16 %v2593
    %v2799 = vunpack.c.l.b16 %v2594
    %v2800 = vunpack.c.l.b16 %v2595
    %v2801 = vunpack.c.l.b16 %v2596
    %v2802 = vunpack.c.l.b16 %v2597
    %v2803 = vunpack.c.l.b16 %v2598
    %v2804 = vunpack.c.l.b16 %v2599
    %v2805 = vunpack.c.l.b16 %v2600
    %v2806 = vunpack.c.l.b16 %v2601
    %v2807 = vunpack.c.l.b16 %v2602
    %v2808 = vunpack.c.l.b16 %v2603
    %v2809 = vunpack.c.l.b16 %v2604
    %v2810 = vunpack.c.l.b16 %v2605
    %v2811 = vunpack.c.l.b16 %v2606
    %v2812 = vunpack.c.l.b16 %v2607
    %v2813 = vunpack.c.l.b16 %v2608
    %v2814 = vunpack.c.l.b16 %v2609
    %v2815 = vunpack.c.l.b16 %v2610
    %v2816 = vunpack.c.l.b16 %v2611
    %v2817 = vunpack.c.l.b16 %v2612
    %v2818 = vunpack.c.l.b16 %v2613
    %v2819 = vunpack.c.l.b16 %v2614
    %v2820 = vunpack.c.l.b16 %v2615
    %v2821 = vunpack.c.l.b16 %v2616
    %v2822 = vunpack.c.l.b16 %v2617
    %v2823 = vunpack.c.l.b16 %v2618
    %v2824 = vunpack.c.l.b16 %v2619
    %v2825 = vunpack.c.l.b16 %v2620
    %v2826 = vunpack.c.l.b16 %v2621
    %v2827 = vunpack.c.l.b16 %v2622
    %v2828 = vunpack.c.l.b16 %v2623
    %v2829 = vunpack.c.l.b16 %v2624
    %v2830 = vunpack.c.l.b16 %v2625
    %v2831 = vunpack.c.l.b16 %v2626
    %v2832 = vunpack.c.l.b16 %v2627
    %v2833 = vunpack.c.l.b16 %v2628
    %v2834 = vunpack.c.l.b16 %v2629
    %v2835 = vunpack.c.l.b16 %v2630
    %v2836 = vunpack.c.l.b16 %v2631
    %v2837 = vunpack.c.l.b16 %v2632
    %v2838 = vunpack.c.l.b16 %v2633
    %v2839 = vunpack.c.l.b16 %v2634
    %v2840 = vunpack.c.l.b16 %v2635
    %v2841 = vunpack.c.l.b16 %v2636
    %v2842 = vunpack.c.l.b16 %v2637
    %v2843 = vunpack.c.l.b16 %v2638
    %v2844 = vunpack.c.l.b16 %v2639
    %v2845 = vunpack.c.l.b16 %v2640
    %v2846 = vunpack.c.l.b16 %v2641
    %v2847 = vunpack.c.l.b16 %v2642
    %v2848 = vunpack.c.l.b16 %v2643
    %v2849 = vunpack.c.l.b16 %v2644
    %v2850 = vunpack.c.l.b16 %v2645
    %v2851 = vunpack.c.l.b16 %v2646
    %v2852 = vunpack.c.l.b16 %v2647
    %v2853 = vunpack.c.l.b16 %v2648
    %v2854 = vunpack.c.l.b16 %v2649
    %v2855 = vunpack.c.l.b16 %v2650
    %v2856 = vpack.c.b16 %v2793, %v2792
    %v2857 = vpack.c.b16 %v2795, %v2794
    %v2858 = vpack.c.b16 %v2797, %v2796
    %v2859 = vpack.c.b16 %v2799, %v2798
    %v2860 = vpack.c.b16 %v2801, %v2800
    %v2861 = vpack.c.b16 %v2803, %v2802
    %v2862 = vpack.c.b16 %v2805, %v2804
    %v2863 = vpack.c.b16 %v2807, %v2806
    %v2864 = vpack.c.b16 %v2809, %v2808
    %v2865 = vpack.c.b16 %v2811, %v2810
    %v2866 = vpack.c.b16 %v2813, %v2812
    %v2867 = vpack.c.b16 %v2815, %v2814
    %v2868 = vpack.c.b16 %v2817, %v2816
    %v2869 = vpack.c.b16 %v2819, %v2818
    %v2870 = vpack.c.b16 %v2821, %v2820
    %v2871 = vpack.c.b16 %v2823, %v2822
    %v2872 = vpack.c.b16 %v2825, %v2824
    %v2873 = vpack.c.b16 %v2827, %v2826
    %v2874 = vpack.c.b16 %v2829, %v2828
    %v2875 = vpack.c.b16 %v2831, %v2830
    %v2876 = vpack.c.b16 %v2833, %v2832
    %v2877 = vpack.c.b16 %v2835, %v2834
    %v2878 = vpack.c.b16 %v2837, %v2836
    %v2879 = vpack.c.b16 %v2839, %v2838
    %v2880 = vpack.c.b16 %v2841, %v2840
    %v2881 = vpack.c.b16 %v2843, %v2842
    %v2882 = vpack.c.b16 %v2845, %v2844
    %v2883 = vpack.c.b16 %v2847, %v2846
    %v2884 = vpack.c.b16 %v2849, %v2848
    %v2885 = vpack.c.b16 %v2851, %v2850
    %v2886 = vpack.c.b16 %v2853, %v2852
    %v2887 = vpack.c.b16 %v2855, %v2854
    %2920 = vmatpush.bf16.msra.mxu0 %v2863
    %2921 = vmatpush.bf16.msra.mxu0 %v2862
    %2922 = vmatpush.bf16.msra.mxu0 %v2861
    %2923 = vmatpush.bf16.msra.mxu0 %v2860
    %2924 = vmatpush.bf16.msra.mxu0 %v2859
    %2925 = vmatpush.bf16.msra.mxu0 %v2858
    %2926 = vmatpush.bf16.msra.mxu0 %v2857
    %2927 = vmatpush.bf16.msra.mxu0 %v2856
    %2928 = vmatmul.bf16.gmra.mxu0 %v2724
    %v2929 = vpop.f32.mrf.mxu0
    %v2930 = vadd.f32 0.0, %v2929
    %v2931 = vpop.f32.mrf.mxu0
    %2932 = vdwg.mxu0
    %2933 = vmatpush.bf16.msra.mxu0 %v2871
    %2934 = vmatpush.bf16.msra.mxu0 %v2870
    %2935 = vmatpush.bf16.msra.mxu0 %v2869
    %2936 = vmatpush.bf16.msra.mxu0 %v2868
    %2937 = vmatpush.bf16.msra.mxu0 %v2867
    %2938 = vmatpush.bf16.msra.mxu0 %v2866
    %2939 = vmatpush.bf16.msra.mxu0 %v2865
    %2940 = vmatpush.bf16.msra.mxu0 %v2864
    %2941 = vmatmul.bf16.gmra.mxu0 %v2725
    %v2942 = vpop.f32.mrf.mxu0
    %v2943 = vadd.f32 %v2930, %v2942
    %v2944 = vpop.f32.mrf.mxu0
    %2945 = vdwg.mxu0
    %2946 = vmatpush.bf16.msra.mxu0 %v2879
    %2947 = vmatpush.bf16.msra.mxu0 %v2878
    %2948 = vmatpush.bf16.msra.mxu0 %v2877
    %2949 = vmatpush.bf16.msra.mxu0 %v2876
    %2950 = vmatpush.bf16.msra.mxu0 %v2875
    %2951 = vmatpush.bf16.msra.mxu0 %v2874
    %2952 = vmatpush.bf16.msra.mxu0 %v2873
    %2953 = vmatpush.bf16.msra.mxu0 %v2872
    %2954 = vmatmul.bf16.gmra.mxu0 %v2726
    %v2955 = vpop.f32.mrf.mxu0
    %v2956 = vadd.f32 %v2943, %v2955
    %v2957 = vpop.f32.mrf.mxu0
    %2958 = vdwg.mxu0
    %2959 = vmatpush.bf16.msra.mxu0 %v2887
    %2960 = vmatpush.bf16.msra.mxu0 %v2886
    %2961 = vmatpush.bf16.msra.mxu0 %v2885
    %2962 = vmatpush.bf16.msra.mxu0 %v2884
    %2963 = vmatpush.bf16.msra.mxu0 %v2883
    %2964 = vmatpush.bf16.msra.mxu0 %v2882
    %2965 = vmatpush.bf16.msra.mxu0 %v2881
    %2966 = vmatpush.bf16.msra.mxu0 %v2880
    %2967 = vmatmul.bf16.gmra.mxu0 %v2727
    %v2968 = vpop.f32.mrf.mxu0
    %v2969 = vadd.f32 %v2956, %v2968
    %v2970 = vpop.f32.mrf.mxu0
    %2971 = vdwg.mxu0
    %v2972 = vld [vmem:[#allocation11 + $0x2] sm:$0x1]
    %v2973 = vld [vmem:[#allocation13 + $0x2] sm:$0x1]
    %s2974 = scalar_lea.vmem %s9, 256
    %v2975 = vld [vmem:[%s2974] sm:$0xff]
    %v2976 = vld [vmem:[%s2974 + $0x8] sm:$0xff]
    %v2977 = vld [vmem:[%s2974 + $0x10] sm:$0xff]
    %v2978 = vld [vmem:[%s2974 + $0x18] sm:$0xff]
    %v2979 = vld [vmem:[%s2974 + $0x20] sm:$0xff]
    %v2980 = vld [vmem:[%s2974 + $0x28] sm:$0xff]
    %v2981 = vld [vmem:[%s2974 + $0x30] sm:$0xff]
    %v2982 = vld [vmem:[%s2974 + $0x38] sm:$0xff]
    %v2983 = vld [vmem:[%s2974 + $0x40] sm:$0xff]
    %v2984 = vld [vmem:[%s2974 + $0x48] sm:$0xff]
    %v2985 = vld [vmem:[%s2974 + $0x50] sm:$0xff]
    %v2986 = vld [vmem:[%s2974 + $0x58] sm:$0xff]
    %v2987 = vld [vmem:[%s2974 + $0x60] sm:$0xff]
    %v2988 = vld [vmem:[%s2974 + $0x68] sm:$0xff]
    %v2989 = vld [vmem:[%s2974 + $0x70] sm:$0xff]
    %v2990 = vld [vmem:[%s2974 + $0x78] sm:$0xff]
    %s2991 = scalar_lea.vmem %s10, 128
    %v2992 = vld [vmem:[%s2991] sm:$0xff]
    %v2993 = vld [vmem:[%s2991 + $0x8] sm:$0xff]
    %v2994 = vld [vmem:[%s2991 + $0x10] sm:$0xff]
    %v2995 = vld [vmem:[%s2991 + $0x18] sm:$0xff]
    %v2996 = vld [vmem:[%s2991 + $0x20] sm:$0xff]
    %v2997 = vld [vmem:[%s2991 + $0x28] sm:$0xff]
    %v2998 = vld [vmem:[%s2991 + $0x30] sm:$0xff]
    %v2999 = vld [vmem:[%s2991 + $0x38] sm:$0xff]
    %v3000 = vrot.slane %v2969, 4
    %v3001 = vadd.f32 %v2969, %v3000
    %v3002 = vrot.slane %v3001, 2
    %v3003 = vadd.f32 %v3001, %v3002
    %v3004 = vrot.slane %v3003, 1
    %v3005 = vadd.f32 %v3003, %v3004
    %3006 = vmatpush.msra.mxu0 %v2990
    %3007 = vmatpush.msra.mxu0 %v2989
    %3008 = vmatpush.msra.mxu0 %v2988
    %3009 = vmatpush.msra.mxu0 %v2987
    %3010 = vmatpush.msra.mxu0 %v2986
    %3011 = vmatpush.msra.mxu0 %v2985
    %3012 = vmatpush.msra.mxu0 %v2984
    %3013 = vmatpush.msra.mxu0 %v2983
    %3014 = vmatpush.msra.mxu0 %v2982
    %3015 = vmatpush.msra.mxu0 %v2981
    %3016 = vmatpush.msra.mxu0 %v2980
    %3017 = vmatpush.msra.mxu0 %v2979
    %3018 = vmatpush.msra.mxu0 %v2978
    %3019 = vmatpush.msra.mxu0 %v2977
    %3020 = vmatpush.msra.mxu0 %v2976
    %3021 = vmatpush.msra.mxu0 %v2975
    %3022 = vmatmul.f32.gmra.mxu0 %v3005
    %v3023 = vpop.f32.mrf.mxu0
    %v3024 = vadd.f32 0.0, %v3023
    %3025 = vdwg.mxu0
    %v3026 = vmul.f32 %v3024, 0.03125
    %v3028 = vsel %vm553, %v3026, 0
    %3030 = vmatpush.msra.mxu0 0.0
    %3031 = vmatpush.msra.mxu0 0.0
    %3032 = vmatpush.msra.mxu0 0.0
    %3033 = vmatpush.msra.mxu0 0.0
    %3034 = vmatpush.msra.mxu0 0.0
    %3035 = vmatpush.msra.mxu0 0.0
    %3036 = vmatpush.msra.mxu0 0.0
    %3037 = vmatpush.msra.mxu0 0.0
    %3038 = vmatpush.msra.mxu0 %v2999
    %3039 = vmatpush.msra.mxu0 %v2998
    %3040 = vmatpush.msra.mxu0 %v2997
    %3041 = vmatpush.msra.mxu0 %v2996
    %3042 = vmatpush.msra.mxu0 %v2995
    %3043 = vmatpush.msra.mxu0 %v2994
    %3044 = vmatpush.msra.mxu0 %v2993
    %3045 = vmatpush.msra.mxu0 %v2992
    %3046 = vmatmul.f32.gmra.mxu0 %v3028
    %v3047 = vpop.f32.mrf.mxu0
    %v3048 = vadd.f32 0.0, %v3047
    %3049 = vdwg.mxu0
    %v3050 = vperm.slane %v3048, 0
    %v3051 = vsub.f32 %v2969, %v3050
    %v3052 = vmul.f32 %v3051, %v3051
    %v3053 = vrot.slane %v3052, 4
    %v3054 = vadd.f32 %v3052, %v3053
    %v3055 = vrot.slane %v3054, 2
    %v3056 = vadd.f32 %v3054, %v3055
    %v3057 = vrot.slane %v3056, 1
    %v3058 = vadd.f32 %v3056, %v3057
    %3059 = vmatpush.msra.mxu0 %v2990
    %3060 = vmatpush.msra.mxu0 %v2989
    %3061 = vmatpush.msra.mxu0 %v2988
    %3062 = vmatpush.msra.mxu0 %v2987
    %3063 = vmatpush.msra.mxu0 %v2986
    %3064 = vmatpush.msra.mxu0 %v2985
    %3065 = vmatpush.msra.mxu0 %v2984
    %3066 = vmatpush.msra.mxu0 %v2983
    %3067 = vmatpush.msra.mxu0 %v2982
    %3068 = vmatpush.msra.mxu0 %v2981
    %3069 = vmatpush.msra.mxu0 %v2980
    %3070 = vmatpush.msra.mxu0 %v2979
    %3071 = vmatpush.msra.mxu0 %v2978
    %3072 = vmatpush.msra.mxu0 %v2977
    %3073 = vmatpush.msra.mxu0 %v2976
    %3074 = vmatpush.msra.mxu0 %v2975
    %3075 = vmatmul.f32.gmra.mxu0 %v3058
    %v3076 = vpop.f32.mrf.mxu0
    %v3077 = vadd.f32 0.0, %v3076
    %3078 = vdwg.mxu0
    %v3079 = vmul.f32 %v3077, 0.03125
    %v3080 = vadd.f32 %v3079, 1e-05
    %v3081 = vrsqrt.pop %v3080
    %v3082 = vmul.f32 %v3081, %v3080
    %v3083 = vmul.f32 %v3082, %v3081
    %v3084 = vmul.f32 0.5, %v3083
    %v3085 = vsub.f32 1.5, %v3084
    %v3086 = vmul.f32 %v3081, %v3085
    %vm3087 = vweird.f32 %v3080
    %vm3088 = vweird.f32 %v3081
    %vm3089 = vmor %vm3087, %vm3088
    %v3090 = vsel %vm3089, %v3081, %v3086
    %v3092 = vsel %vm553, %v3090, 0
    %3094 = vmatpush.msra.mxu0 0.0
    %3095 = vmatpush.msra.mxu0 0.0
    %3096 = vmatpush.msra.mxu0 0.0
    %3097 = vmatpush.msra.mxu0 0.0
    %3098 = vmatpush.msra.mxu0 0.0
    %3099 = vmatpush.msra.mxu0 0.0
    %3100 = vmatpush.msra.mxu0 0.0
    %3101 = vmatpush.msra.mxu0 0.0
    %3102 = vmatpush.msra.mxu0 %v2999
    %3103 = vmatpush.msra.mxu0 %v2998
    %3104 = vmatpush.msra.mxu0 %v2997
    %3105 = vmatpush.msra.mxu0 %v2996
    %3106 = vmatpush.msra.mxu0 %v2995
    %3107 = vmatpush.msra.mxu0 %v2994
    %3108 = vmatpush.msra.mxu0 %v2993
    %3109 = vmatpush.msra.mxu0 %v2992
    %3110 = vmatmul.f32.gmra.mxu0 %v3092
    %v3111 = vpop.f32.mrf.mxu0
    %v3112 = vadd.f32 0.0, %v3111
    %3113 = vdwg.mxu0
    %v3114 = vperm.slane %v3112, 0
    %v3115 = vmul.f32 %v3051, %v3114
    %v3116 = vperm.slane %v2972, 0
    %v3117 = vmul.f32 %v3115, %v3116
    %v3118 = vperm.slane %v2973, 0
    %v3119 = vadd.f32 %v3117, %v3118
    %v3120 = vmul.f32 %v3119, 0.2
    %v3121 = vmax.f32 %v3119, %v3120
    %s3122 = scalar_lea.vmem %s8, 768
    %v3123 = vld [vmem:[%s3122] sm:$0xf]
    %v3124 = vld [vmem:[%s3122 + $0x4] sm:$0xf]
    %v3125 = vld [vmem:[%s3122 + $0x8] sm:$0xf]
    %v3126 = vld [vmem:[%s3122 + $0xc] sm:$0xf]
    %v3127 = vld [vmem:[%s3122 + $0x10] sm:$0xf]
    %v3128 = vld [vmem:[%s3122 + $0x14] sm:$0xf]
    %v3129 = vld [vmem:[%s3122 + $0x18] sm:$0xf]
    %v3130 = vld [vmem:[%s3122 + $0x1c] sm:$0xf]
    %v3131 = vld [vmem:[%s3122 + $0x20] sm:$0xf]
    %v3132 = vld [vmem:[%s3122 + $0x24] sm:$0xf]
    %v3133 = vld [vmem:[%s3122 + $0x28] sm:$0xf]
    %v3134 = vld [vmem:[%s3122 + $0x2c] sm:$0xf]
    %v3135 = vld [vmem:[%s3122 + $0x30] sm:$0xf]
    %v3136 = vld [vmem:[%s3122 + $0x34] sm:$0xf]
    %v3137 = vld [vmem:[%s3122 + $0x38] sm:$0xf]
    %v3138 = vld [vmem:[%s3122 + $0x3c] sm:$0xf]
    %v3139 = vld [vmem:[%s3122 + $0x40] sm:$0xf]
    %v3140 = vld [vmem:[%s3122 + $0x44] sm:$0xf]
    %v3141 = vld [vmem:[%s3122 + $0x48] sm:$0xf]
    %v3142 = vld [vmem:[%s3122 + $0x4c] sm:$0xf]
    %v3143 = vld [vmem:[%s3122 + $0x50] sm:$0xf]
    %v3144 = vld [vmem:[%s3122 + $0x54] sm:$0xf]
    %v3145 = vld [vmem:[%s3122 + $0x58] sm:$0xf]
    %v3146 = vld [vmem:[%s3122 + $0x5c] sm:$0xf]
    %v3147 = vld [vmem:[%s3122 + $0x60] sm:$0xf]
    %v3148 = vld [vmem:[%s3122 + $0x64] sm:$0xf]
    %v3149 = vld [vmem:[%s3122 + $0x68] sm:$0xf]
    %v3150 = vld [vmem:[%s3122 + $0x6c] sm:$0xf]
    %v3151 = vld [vmem:[%s3122 + $0x70] sm:$0xf]
    %v3152 = vld [vmem:[%s3122 + $0x74] sm:$0xf]
    %v3153 = vld [vmem:[%s3122 + $0x78] sm:$0xf]
    %v3154 = vld [vmem:[%s3122 + $0x7c] sm:$0xf]
    %v3155 = vld [vmem:[%s3122 + $0x80] sm:$0xf]
    %v3156 = vld [vmem:[%s3122 + $0x84] sm:$0xf]
    %v3157 = vld [vmem:[%s3122 + $0x88] sm:$0xf]
    %v3158 = vld [vmem:[%s3122 + $0x8c] sm:$0xf]
    %v3159 = vld [vmem:[%s3122 + $0x90] sm:$0xf]
    %v3160 = vld [vmem:[%s3122 + $0x94] sm:$0xf]
    %v3161 = vld [vmem:[%s3122 + $0x98] sm:$0xf]
    %v3162 = vld [vmem:[%s3122 + $0x9c] sm:$0xf]
    %v3163 = vld [vmem:[%s3122 + $0xa0] sm:$0xf]
    %v3164 = vld [vmem:[%s3122 + $0xa4] sm:$0xf]
    %v3165 = vld [vmem:[%s3122 + $0xa8] sm:$0xf]
    %v3166 = vld [vmem:[%s3122 + $0xac] sm:$0xf]
    %v3167 = vld [vmem:[%s3122 + $0xb0] sm:$0xf]
    %v3168 = vld [vmem:[%s3122 + $0xb4] sm:$0xf]
    %v3169 = vld [vmem:[%s3122 + $0xb8] sm:$0xf]
    %v3170 = vld [vmem:[%s3122 + $0xbc] sm:$0xf]
    %v3171 = vld [vmem:[%s3122 + $0xc0] sm:$0xf]
    %v3172 = vld [vmem:[%s3122 + $0xc4] sm:$0xf]
    %v3173 = vld [vmem:[%s3122 + $0xc8] sm:$0xf]
    %v3174 = vld [vmem:[%s3122 + $0xcc] sm:$0xf]
    %v3175 = vld [vmem:[%s3122 + $0xd0] sm:$0xf]
    %v3176 = vld [vmem:[%s3122 + $0xd4] sm:$0xf]
    %v3177 = vld [vmem:[%s3122 + $0xd8] sm:$0xf]
    %v3178 = vld [vmem:[%s3122 + $0xdc] sm:$0xf]
    %v3179 = vld [vmem:[%s3122 + $0xe0] sm:$0xf]
    %v3180 = vld [vmem:[%s3122 + $0xe4] sm:$0xf]
    %v3181 = vld [vmem:[%s3122 + $0xe8] sm:$0xf]
    %v3182 = vld [vmem:[%s3122 + $0xec] sm:$0xf]
    %v3183 = vld [vmem:[%s3122 + $0xf0] sm:$0xf]
    %v3184 = vld [vmem:[%s3122 + $0xf4] sm:$0xf]
    %v3185 = vld [vmem:[%s3122 + $0xf8] sm:$0xf]
    %v3186 = vld [vmem:[%s3122 + $0xfc] sm:$0xf]
    %v3187 = vld [vmem:[#allocation8] sm:$0x3]
    %v3188 = vpack.c.bf16 %v3121, %v3121
    %vm3189 = vcmask 64512
    %v3191 = vsel %vm3189, %v3187, 0
    %vm3193 = vcmask 1043456
    %v3195 = vsel %vm3193, %v3188, 0
    %3197 = vmatpush.bf16.msra.mxu0 0
    %3198 = vmatpush.bf16.msra.mxu0 0
    %3199 = vmatpush.bf16.msra.mxu0 0
    %3200 = vmatpush.bf16.msra.mxu0 0
    %3201 = vmatpush.bf16.msra.mxu0 0
    %3202 = vmatpush.bf16.msra.mxu0 0
    %3203 = vmatpush.bf16.msra.mxu0 0
    %3204 = vmatpush.bf16.msra.mxu0 %v3195
    %3205 = vmatmul.bf16.gmra.mxu0 %v3191
    %v3206 = vpop.f32.mrf.mxu0
    %v3207 = vadd.f32 0.0, %v3206
    %v3208 = vpop.f32.mrf.mxu0
    %3209 = vdwg.mxu0
    %s3210 = scalar_lea.vmem [#allocation8], 2
    %v3211 = vld [vmem:[%s3210] sm:$0x3]
    %v3213 = vsel %vm3189, %v3211, 0
    %3215 = vmatpush.bf16.msra.mxu0 0
    %3216 = vmatpush.bf16.msra.mxu0 0
    %3217 = vmatpush.bf16.msra.mxu0 0
    %3218 = vmatpush.bf16.msra.mxu0 0
    %3219 = vmatpush.bf16.msra.mxu0 0
    %3220 = vmatpush.bf16.msra.mxu0 0
    %3221 = vmatpush.bf16.msra.mxu0 0
    %3222 = vmatpush.bf16.msra.mxu0 %v3195
    %3223 = vmatmul.bf16.gmra.mxu0 %v3213
    %v3224 = vpop.f32.mrf.mxu0
    %v3225 = vadd.f32 0.0, %v3224
    %v3226 = vpop.f32.mrf.mxu0
    %3227 = vdwg.mxu0
    %s3228 = scalar_lea.vmem [#allocation8], 4
    %v3229 = vld [vmem:[%s3228] sm:$0x3]
    %v3231 = vsel %vm3189, %v3229, 0
    %3233 = vmatpush.bf16.msra.mxu0 0
    %3234 = vmatpush.bf16.msra.mxu0 0
    %3235 = vmatpush.bf16.msra.mxu0 0
    %3236 = vmatpush.bf16.msra.mxu0 0
    %3237 = vmatpush.bf16.msra.mxu0 0
    %3238 = vmatpush.bf16.msra.mxu0 0
    %3239 = vmatpush.bf16.msra.mxu0 0
    %3240 = vmatpush.bf16.msra.mxu0 %v3195
    %3241 = vmatmul.bf16.gmra.mxu0 %v3231
    %v3242 = vpop.f32.mrf.mxu0
    %v3243 = vadd.f32 0.0, %v3242
    %v3244 = vpop.f32.mrf.mxu0
    %3245 = vdwg.mxu0
    %s3246 = scalar_lea.vmem [#allocation8], 6
    %v3247 = vld [vmem:[%s3246] sm:$0x3]
    %v3249 = vsel %vm3189, %v3247, 0
    %3251 = vmatpush.bf16.msra.mxu0 0
    %3252 = vmatpush.bf16.msra.mxu0 0
    %3253 = vmatpush.bf16.msra.mxu0 0
    %3254 = vmatpush.bf16.msra.mxu0 0
    %3255 = vmatpush.bf16.msra.mxu0 0
    %3256 = vmatpush.bf16.msra.mxu0 0
    %3257 = vmatpush.bf16.msra.mxu0 0
    %3258 = vmatpush.bf16.msra.mxu0 %v3195
    %3259 = vmatmul.bf16.gmra.mxu0 %v3249
    %v3260 = vpop.f32.mrf.mxu0
    %v3261 = vadd.f32 0.0, %v3260
    %v3262 = vpop.f32.mrf.mxu0
    %3263 = vdwg.mxu0
    %v3264 = vpack.c.bf16 %v3207, %v3207
    %v3265 = vpack.c.bf16 %v3225, %v3225
    %v3266 = vpack.c.bf16 %v3243, %v3243
    %v3267 = vpack.c.bf16 %v3261, %v3261
    %v3332 = vunpack.c.l.b16 %v3123
    %v3333 = vunpack.c.l.b16 %v3124
    %v3334 = vunpack.c.l.b16 %v3125
    %v3335 = vunpack.c.l.b16 %v3126
    %v3336 = vunpack.c.l.b16 %v3127
    %v3337 = vunpack.c.l.b16 %v3128
    %v3338 = vunpack.c.l.b16 %v3129
    %v3339 = vunpack.c.l.b16 %v3130
    %v3340 = vunpack.c.l.b16 %v3131
    %v3341 = vunpack.c.l.b16 %v3132
    %v3342 = vunpack.c.l.b16 %v3133
    %v3343 = vunpack.c.l.b16 %v3134
    %v3344 = vunpack.c.l.b16 %v3135
    %v3345 = vunpack.c.l.b16 %v3136
    %v3346 = vunpack.c.l.b16 %v3137
    %v3347 = vunpack.c.l.b16 %v3138
    %v3348 = vunpack.c.l.b16 %v3139
    %v3349 = vunpack.c.l.b16 %v3140
    %v3350 = vunpack.c.l.b16 %v3141
    %v3351 = vunpack.c.l.b16 %v3142
    %v3352 = vunpack.c.l.b16 %v3143
    %v3353 = vunpack.c.l.b16 %v3144
    %v3354 = vunpack.c.l.b16 %v3145
    %v3355 = vunpack.c.l.b16 %v3146
    %v3356 = vunpack.c.l.b16 %v3147
    %v3357 = vunpack.c.l.b16 %v3148
    %v3358 = vunpack.c.l.b16 %v3149
    %v3359 = vunpack.c.l.b16 %v3150
    %v3360 = vunpack.c.l.b16 %v3151
    %v3361 = vunpack.c.l.b16 %v3152
    %v3362 = vunpack.c.l.b16 %v3153
    %v3363 = vunpack.c.l.b16 %v3154
    %v3364 = vunpack.c.l.b16 %v3155
    %v3365 = vunpack.c.l.b16 %v3156
    %v3366 = vunpack.c.l.b16 %v3157
    %v3367 = vunpack.c.l.b16 %v3158
    %v3368 = vunpack.c.l.b16 %v3159
    %v3369 = vunpack.c.l.b16 %v3160
    %v3370 = vunpack.c.l.b16 %v3161
    %v3371 = vunpack.c.l.b16 %v3162
    %v3372 = vunpack.c.l.b16 %v3163
    %v3373 = vunpack.c.l.b16 %v3164
    %v3374 = vunpack.c.l.b16 %v3165
    %v3375 = vunpack.c.l.b16 %v3166
    %v3376 = vunpack.c.l.b16 %v3167
    %v3377 = vunpack.c.l.b16 %v3168
    %v3378 = vunpack.c.l.b16 %v3169
    %v3379 = vunpack.c.l.b16 %v3170
    %v3380 = vunpack.c.l.b16 %v3171
    %v3381 = vunpack.c.l.b16 %v3172
    %v3382 = vunpack.c.l.b16 %v3173
    %v3383 = vunpack.c.l.b16 %v3174
    %v3384 = vunpack.c.l.b16 %v3175
    %v3385 = vunpack.c.l.b16 %v3176
    %v3386 = vunpack.c.l.b16 %v3177
    %v3387 = vunpack.c.l.b16 %v3178
    %v3388 = vunpack.c.l.b16 %v3179
    %v3389 = vunpack.c.l.b16 %v3180
    %v3390 = vunpack.c.l.b16 %v3181
    %v3391 = vunpack.c.l.b16 %v3182
    %v3392 = vunpack.c.l.b16 %v3183
    %v3393 = vunpack.c.l.b16 %v3184
    %v3394 = vunpack.c.l.b16 %v3185
    %v3395 = vunpack.c.l.b16 %v3186
    %v3396 = vpack.c.b16 %v3333, %v3332
    %v3397 = vpack.c.b16 %v3335, %v3334
    %v3398 = vpack.c.b16 %v3337, %v3336
    %v3399 = vpack.c.b16 %v3339, %v3338
    %v3400 = vpack.c.b16 %v3341, %v3340
    %v3401 = vpack.c.b16 %v3343, %v3342
    %v3402 = vpack.c.b16 %v3345, %v3344
    %v3403 = vpack.c.b16 %v3347, %v3346
    %v3404 = vpack.c.b16 %v3349, %v3348
    %v3405 = vpack.c.b16 %v3351, %v3350
    %v3406 = vpack.c.b16 %v3353, %v3352
    %v3407 = vpack.c.b16 %v3355, %v3354
    %v3408 = vpack.c.b16 %v3357, %v3356
    %v3409 = vpack.c.b16 %v3359, %v3358
    %v3410 = vpack.c.b16 %v3361, %v3360
    %v3411 = vpack.c.b16 %v3363, %v3362
    %v3412 = vpack.c.b16 %v3365, %v3364
    %v3413 = vpack.c.b16 %v3367, %v3366
    %v3414 = vpack.c.b16 %v3369, %v3368
    %v3415 = vpack.c.b16 %v3371, %v3370
    %v3416 = vpack.c.b16 %v3373, %v3372
    %v3417 = vpack.c.b16 %v3375, %v3374
    %v3418 = vpack.c.b16 %v3377, %v3376
    %v3419 = vpack.c.b16 %v3379, %v3378
    %v3420 = vpack.c.b16 %v3381, %v3380
    %v3421 = vpack.c.b16 %v3383, %v3382
    %v3422 = vpack.c.b16 %v3385, %v3384
    %v3423 = vpack.c.b16 %v3387, %v3386
    %v3424 = vpack.c.b16 %v3389, %v3388
    %v3425 = vpack.c.b16 %v3391, %v3390
    %v3426 = vpack.c.b16 %v3393, %v3392
    %v3427 = vpack.c.b16 %v3395, %v3394
    %3460 = vmatpush.bf16.msra.mxu0 %v3403
    %3461 = vmatpush.bf16.msra.mxu0 %v3402
    %3462 = vmatpush.bf16.msra.mxu0 %v3401
    %3463 = vmatpush.bf16.msra.mxu0 %v3400
    %3464 = vmatpush.bf16.msra.mxu0 %v3399
    %3465 = vmatpush.bf16.msra.mxu0 %v3398
    %3466 = vmatpush.bf16.msra.mxu0 %v3397
    %3467 = vmatpush.bf16.msra.mxu0 %v3396
    %3468 = vmatmul.bf16.gmra.mxu0 %v3264
    %v3469 = vpop.f32.mrf.mxu0
    %v3470 = vadd.f32 0.0, %v3469
    %v3471 = vpop.f32.mrf.mxu0
    %3472 = vdwg.mxu0
    %3473 = vmatpush.bf16.msra.mxu0 %v3411
    %3474 = vmatpush.bf16.msra.mxu0 %v3410
    %3475 = vmatpush.bf16.msra.mxu0 %v3409
    %3476 = vmatpush.bf16.msra.mxu0 %v3408
    %3477 = vmatpush.bf16.msra.mxu0 %v3407
    %3478 = vmatpush.bf16.msra.mxu0 %v3406
    %3479 = vmatpush.bf16.msra.mxu0 %v3405
    %3480 = vmatpush.bf16.msra.mxu0 %v3404
    %3481 = vmatmul.bf16.gmra.mxu0 %v3265
    %v3482 = vpop.f32.mrf.mxu0
    %v3483 = vadd.f32 %v3470, %v3482
    %v3484 = vpop.f32.mrf.mxu0
    %3485 = vdwg.mxu0
    %3486 = vmatpush.bf16.msra.mxu0 %v3419
    %3487 = vmatpush.bf16.msra.mxu0 %v3418
    %3488 = vmatpush.bf16.msra.mxu0 %v3417
    %3489 = vmatpush.bf16.msra.mxu0 %v3416
    %3490 = vmatpush.bf16.msra.mxu0 %v3415
    %3491 = vmatpush.bf16.msra.mxu0 %v3414
    %3492 = vmatpush.bf16.msra.mxu0 %v3413
    %3493 = vmatpush.bf16.msra.mxu0 %v3412
    %3494 = vmatmul.bf16.gmra.mxu0 %v3266
    %v3495 = vpop.f32.mrf.mxu0
    %v3496 = vadd.f32 %v3483, %v3495
    %v3497 = vpop.f32.mrf.mxu0
    %3498 = vdwg.mxu0
    %3499 = vmatpush.bf16.msra.mxu0 %v3427
    %3500 = vmatpush.bf16.msra.mxu0 %v3426
    %3501 = vmatpush.bf16.msra.mxu0 %v3425
    %3502 = vmatpush.bf16.msra.mxu0 %v3424
    %3503 = vmatpush.bf16.msra.mxu0 %v3423
    %3504 = vmatpush.bf16.msra.mxu0 %v3422
    %3505 = vmatpush.bf16.msra.mxu0 %v3421
    %3506 = vmatpush.bf16.msra.mxu0 %v3420
    %3507 = vmatmul.bf16.gmra.mxu0 %v3267
    %v3508 = vpop.f32.mrf.mxu0
    %v3509 = vadd.f32 %v3496, %v3508
    %v3510 = vpop.f32.mrf.mxu0
    %3511 = vdwg.mxu0
    %v3512 = vld [vmem:[#allocation11 + $0x3] sm:$0x1]
    %v3513 = vld [vmem:[#allocation13 + $0x3] sm:$0x1]
    %s3514 = scalar_lea.vmem %s9, 384
    %v3515 = vld [vmem:[%s3514] sm:$0xff]
    %v3516 = vld [vmem:[%s3514 + $0x8] sm:$0xff]
    %v3517 = vld [vmem:[%s3514 + $0x10] sm:$0xff]
    %v3518 = vld [vmem:[%s3514 + $0x18] sm:$0xff]
    %v3519 = vld [vmem:[%s3514 + $0x20] sm:$0xff]
    %v3520 = vld [vmem:[%s3514 + $0x28] sm:$0xff]
    %v3521 = vld [vmem:[%s3514 + $0x30] sm:$0xff]
    %v3522 = vld [vmem:[%s3514 + $0x38] sm:$0xff]
    %v3523 = vld [vmem:[%s3514 + $0x40] sm:$0xff]
    %v3524 = vld [vmem:[%s3514 + $0x48] sm:$0xff]
    %v3525 = vld [vmem:[%s3514 + $0x50] sm:$0xff]
    %v3526 = vld [vmem:[%s3514 + $0x58] sm:$0xff]
    %v3527 = vld [vmem:[%s3514 + $0x60] sm:$0xff]
    %v3528 = vld [vmem:[%s3514 + $0x68] sm:$0xff]
    %v3529 = vld [vmem:[%s3514 + $0x70] sm:$0xff]
    %v3530 = vld [vmem:[%s3514 + $0x78] sm:$0xff]
    %s3531 = scalar_lea.vmem %s10, 192
    %v3532 = vld [vmem:[%s3531] sm:$0xff]
    %v3533 = vld [vmem:[%s3531 + $0x8] sm:$0xff]
    %v3534 = vld [vmem:[%s3531 + $0x10] sm:$0xff]
    %v3535 = vld [vmem:[%s3531 + $0x18] sm:$0xff]
    %v3536 = vld [vmem:[%s3531 + $0x20] sm:$0xff]
    %v3537 = vld [vmem:[%s3531 + $0x28] sm:$0xff]
    %v3538 = vld [vmem:[%s3531 + $0x30] sm:$0xff]
    %v3539 = vld [vmem:[%s3531 + $0x38] sm:$0xff]
    %v3540 = vsel %vm3193, %v3509, 0.0
    %v3541 = vrot.slane %v3540, 4
    %v3542 = vadd.f32 %v3540, %v3541
    %v3543 = vrot.slane %v3542, 2
    %v3544 = vadd.f32 %v3542, %v3543
    %v3545 = vrot.slane %v3544, 1
    %v3546 = vadd.f32 %v3544, %v3545
    %3547 = vmatpush.msra.mxu0 %v3530
    %3548 = vmatpush.msra.mxu0 %v3529
    %3549 = vmatpush.msra.mxu0 %v3528
    %3550 = vmatpush.msra.mxu0 %v3527
    %3551 = vmatpush.msra.mxu0 %v3526
    %3552 = vmatpush.msra.mxu0 %v3525
    %3553 = vmatpush.msra.mxu0 %v3524
    %3554 = vmatpush.msra.mxu0 %v3523
    %3555 = vmatpush.msra.mxu0 %v3522
    %3556 = vmatpush.msra.mxu0 %v3521
    %3557 = vmatpush.msra.mxu0 %v3520
    %3558 = vmatpush.msra.mxu0 %v3519
    %3559 = vmatpush.msra.mxu0 %v3518
    %3560 = vmatpush.msra.mxu0 %v3517
    %3561 = vmatpush.msra.mxu0 %v3516
    %3562 = vmatpush.msra.mxu0 %v3515
    %3563 = vmatmul.f32.gmra.mxu0 %v3546
    %v3564 = vpop.f32.mrf.mxu0
    %v3565 = vadd.f32 0.0, %v3564
    %3566 = vdwg.mxu0
    %v3567 = vmul.f32 %v3565, 0.125
    %v3569 = vsel %vm553, %v3567, 0
    %3571 = vmatpush.msra.mxu0 0.0
    %3572 = vmatpush.msra.mxu0 0.0
    %3573 = vmatpush.msra.mxu0 0.0
    %3574 = vmatpush.msra.mxu0 0.0
    %3575 = vmatpush.msra.mxu0 0.0
    %3576 = vmatpush.msra.mxu0 0.0
    %3577 = vmatpush.msra.mxu0 0.0
    %3578 = vmatpush.msra.mxu0 0.0
    %3579 = vmatpush.msra.mxu0 %v3539
    %3580 = vmatpush.msra.mxu0 %v3538
    %3581 = vmatpush.msra.mxu0 %v3537
    %3582 = vmatpush.msra.mxu0 %v3536
    %3583 = vmatpush.msra.mxu0 %v3535
    %3584 = vmatpush.msra.mxu0 %v3534
    %3585 = vmatpush.msra.mxu0 %v3533
    %3586 = vmatpush.msra.mxu0 %v3532
    %3587 = vmatmul.f32.gmra.mxu0 %v3569
    %v3588 = vpop.f32.mrf.mxu0
    %v3589 = vadd.f32 0.0, %v3588
    %3590 = vdwg.mxu0
    %v3591 = vperm.slane %v3589, 0
    %v3592 = vsub.f32 %v3509, %v3591
    %v3593 = vmul.f32 %v3592, %v3592
    %v3594 = vsel %vm3193, %v3593, 0.0
    %v3595 = vrot.slane %v3594, 4
    %v3596 = vadd.f32 %v3594, %v3595
    %v3597 = vrot.slane %v3596, 2
    %v3598 = vadd.f32 %v3596, %v3597
    %v3599 = vrot.slane %v3598, 1
    %v3600 = vadd.f32 %v3598, %v3599
    %3601 = vmatpush.msra.mxu0 %v3530
    %3602 = vmatpush.msra.mxu0 %v3529
    %3603 = vmatpush.msra.mxu0 %v3528
    %3604 = vmatpush.msra.mxu0 %v3527
    %3605 = vmatpush.msra.mxu0 %v3526
    %3606 = vmatpush.msra.mxu0 %v3525
    %3607 = vmatpush.msra.mxu0 %v3524
    %3608 = vmatpush.msra.mxu0 %v3523
    %3609 = vmatpush.msra.mxu0 %v3522
    %3610 = vmatpush.msra.mxu0 %v3521
    %3611 = vmatpush.msra.mxu0 %v3520
    %3612 = vmatpush.msra.mxu0 %v3519
    %3613 = vmatpush.msra.mxu0 %v3518
    %3614 = vmatpush.msra.mxu0 %v3517
    %3615 = vmatpush.msra.mxu0 %v3516
    %3616 = vmatpush.msra.mxu0 %v3515
    %3617 = vmatmul.f32.gmra.mxu0 %v3600
    %v3618 = vpop.f32.mrf.mxu0
    %v3619 = vadd.f32 0.0, %v3618
    %3620 = vdwg.mxu0
    %v3621 = vmul.f32 %v3619, 0.125
    %v3622 = vadd.f32 %v3621, 1e-05
    %v3623 = vrsqrt.pop %v3622
    %v3624 = vmul.f32 %v3623, %v3622
    %v3625 = vmul.f32 %v3624, %v3623
    %v3626 = vmul.f32 0.5, %v3625
    %v3627 = vsub.f32 1.5, %v3626
    %v3628 = vmul.f32 %v3623, %v3627
    %vm3629 = vweird.f32 %v3622
    %vm3630 = vweird.f32 %v3623
    %vm3631 = vmor %vm3629, %vm3630
    %v3632 = vsel %vm3631, %v3623, %v3628
    %v3634 = vsel %vm553, %v3632, 0
    %3636 = vmatpush.msra.mxu0 0.0
    %3637 = vmatpush.msra.mxu0 0.0
    %3638 = vmatpush.msra.mxu0 0.0
    %3639 = vmatpush.msra.mxu0 0.0
    %3640 = vmatpush.msra.mxu0 0.0
    %3641 = vmatpush.msra.mxu0 0.0
    %3642 = vmatpush.msra.mxu0 0.0
    %3643 = vmatpush.msra.mxu0 0.0
    %3644 = vmatpush.msra.mxu0 %v3539
    %3645 = vmatpush.msra.mxu0 %v3538
    %3646 = vmatpush.msra.mxu0 %v3537
    %3647 = vmatpush.msra.mxu0 %v3536
    %3648 = vmatpush.msra.mxu0 %v3535
    %3649 = vmatpush.msra.mxu0 %v3534
    %3650 = vmatpush.msra.mxu0 %v3533
    %3651 = vmatpush.msra.mxu0 %v3532
    %3652 = vmatmul.f32.gmra.mxu0 %v3634
    %v3653 = vpop.f32.mrf.mxu0
    %v3654 = vadd.f32 0.0, %v3653
    %3655 = vdwg.mxu0
    %v3656 = vperm.slane %v3654, 0
    %v3657 = vmul.f32 %v3592, %v3656
    %v3658 = vperm.slane %v3512, 0
    %v3659 = vmul.f32 %v3657, %v3658
    %v3660 = vperm.slane %v3513, 0
    %v3661 = vadd.f32 %v3659, %v3660
    %v3662 = vmul.f32 %v3661, 0.2
    %v3663 = vmax.f32 %v3661, %v3662
    %s3664 = scalar_lea.vmem %s8, 1024
    %v3665 = vld [vmem:[%s3664] sm:$0xf]
    %v3666 = vld [vmem:[%s3664 + $0x4] sm:$0xf]
    %v3667 = vld [vmem:[%s3664 + $0x8] sm:$0xf]
    %v3668 = vld [vmem:[%s3664 + $0xc] sm:$0xf]
    %v3669 = vld [vmem:[%s3664 + $0x10] sm:$0xf]
    %v3670 = vld [vmem:[%s3664 + $0x14] sm:$0xf]
    %v3671 = vld [vmem:[%s3664 + $0x18] sm:$0xf]
    %v3672 = vld [vmem:[%s3664 + $0x1c] sm:$0xf]
    %v3673 = vld [vmem:[%s3664 + $0x20] sm:$0xf]
    %v3674 = vld [vmem:[%s3664 + $0x24] sm:$0xf]
    %v3675 = vld [vmem:[%s3664 + $0x28] sm:$0xf]
    %v3676 = vld [vmem:[%s3664 + $0x2c] sm:$0xf]
    %v3677 = vld [vmem:[%s3664 + $0x30] sm:$0xf]
    %v3678 = vld [vmem:[%s3664 + $0x34] sm:$0xf]
    %v3679 = vld [vmem:[%s3664 + $0x38] sm:$0xf]
    %v3680 = vld [vmem:[%s3664 + $0x3c] sm:$0xf]
    %v3681 = vld [vmem:[%s3664 + $0x40] sm:$0xf]
    %v3682 = vld [vmem:[%s3664 + $0x44] sm:$0xf]
    %v3683 = vld [vmem:[%s3664 + $0x48] sm:$0xf]
    %v3684 = vld [vmem:[%s3664 + $0x4c] sm:$0xf]
    %v3685 = vld [vmem:[%s3664 + $0x50] sm:$0xf]
    %v3686 = vld [vmem:[%s3664 + $0x54] sm:$0xf]
    %v3687 = vld [vmem:[%s3664 + $0x58] sm:$0xf]
    %v3688 = vld [vmem:[%s3664 + $0x5c] sm:$0xf]
    %v3689 = vld [vmem:[%s3664 + $0x60] sm:$0xf]
    %v3690 = vld [vmem:[%s3664 + $0x64] sm:$0xf]
    %v3691 = vld [vmem:[%s3664 + $0x68] sm:$0xf]
    %v3692 = vld [vmem:[%s3664 + $0x6c] sm:$0xf]
    %v3693 = vld [vmem:[%s3664 + $0x70] sm:$0xf]
    %v3694 = vld [vmem:[%s3664 + $0x74] sm:$0xf]
    %v3695 = vld [vmem:[%s3664 + $0x78] sm:$0xf]
    %v3696 = vld [vmem:[%s3664 + $0x7c] sm:$0xf]
    %v3697 = vld [vmem:[%s3664 + $0x80] sm:$0xf]
    %v3698 = vld [vmem:[%s3664 + $0x84] sm:$0xf]
    %v3699 = vld [vmem:[%s3664 + $0x88] sm:$0xf]
    %v3700 = vld [vmem:[%s3664 + $0x8c] sm:$0xf]
    %v3701 = vld [vmem:[%s3664 + $0x90] sm:$0xf]
    %v3702 = vld [vmem:[%s3664 + $0x94] sm:$0xf]
    %v3703 = vld [vmem:[%s3664 + $0x98] sm:$0xf]
    %v3704 = vld [vmem:[%s3664 + $0x9c] sm:$0xf]
    %v3705 = vld [vmem:[%s3664 + $0xa0] sm:$0xf]
    %v3706 = vld [vmem:[%s3664 + $0xa4] sm:$0xf]
    %v3707 = vld [vmem:[%s3664 + $0xa8] sm:$0xf]
    %v3708 = vld [vmem:[%s3664 + $0xac] sm:$0xf]
    %v3709 = vld [vmem:[%s3664 + $0xb0] sm:$0xf]
    %v3710 = vld [vmem:[%s3664 + $0xb4] sm:$0xf]
    %v3711 = vld [vmem:[%s3664 + $0xb8] sm:$0xf]
    %v3712 = vld [vmem:[%s3664 + $0xbc] sm:$0xf]
    %v3713 = vld [vmem:[%s3664 + $0xc0] sm:$0xf]
    %v3714 = vld [vmem:[%s3664 + $0xc4] sm:$0xf]
    %v3715 = vld [vmem:[%s3664 + $0xc8] sm:$0xf]
    %v3716 = vld [vmem:[%s3664 + $0xcc] sm:$0xf]
    %v3717 = vld [vmem:[%s3664 + $0xd0] sm:$0xf]
    %v3718 = vld [vmem:[%s3664 + $0xd4] sm:$0xf]
    %v3719 = vld [vmem:[%s3664 + $0xd8] sm:$0xf]
    %v3720 = vld [vmem:[%s3664 + $0xdc] sm:$0xf]
    %v3721 = vld [vmem:[%s3664 + $0xe0] sm:$0xf]
    %v3722 = vld [vmem:[%s3664 + $0xe4] sm:$0xf]
    %v3723 = vld [vmem:[%s3664 + $0xe8] sm:$0xf]
    %v3724 = vld [vmem:[%s3664 + $0xec] sm:$0xf]
    %v3725 = vld [vmem:[%s3664 + $0xf0] sm:$0xf]
    %v3726 = vld [vmem:[%s3664 + $0xf4] sm:$0xf]
    %v3727 = vld [vmem:[%s3664 + $0xf8] sm:$0xf]
    %v3728 = vld [vmem:[%s3664 + $0xfc] sm:$0xf]
    %v3729 = vld [vmem:[#allocation10] sm:$0x1]
    %v3730 = vpack.c.bf16 %v3663, %v3663
    %vm3731 = vcmask 31744
    %v3733 = vsel %vm3731, %v3729, 0
    %vm3735 = vcmask 1041408
    %v3737 = vsel %vm3735, %v3730, 0
    %3739 = vmatpush.bf16.msra.mxu0 0
    %3740 = vmatpush.bf16.msra.mxu0 0
    %3741 = vmatpush.bf16.msra.mxu0 0
    %3742 = vmatpush.bf16.msra.mxu0 0
    %3743 = vmatpush.bf16.msra.mxu0 0
    %3744 = vmatpush.bf16.msra.mxu0 0
    %3745 = vmatpush.bf16.msra.mxu0 0
    %3746 = vmatpush.bf16.msra.mxu0 %v3737
    %3747 = vmatmul.bf16.gmra.mxu0 %v3733
    %v3748 = vpop.f32.mrf.mxu0
    %v3749 = vadd.f32 0.0, %v3748
    %v3750 = vpop.f32.mrf.mxu0
    %3751 = vdwg.mxu0
    %s3752 = scalar_lea.vmem [#allocation10], 1
    %v3753 = vld [vmem:[%s3752] sm:$0x1]
    %v3755 = vsel %vm3731, %v3753, 0
    %3757 = vmatpush.bf16.msra.mxu0 0
    %3758 = vmatpush.bf16.msra.mxu0 0
    %3759 = vmatpush.bf16.msra.mxu0 0
    %3760 = vmatpush.bf16.msra.mxu0 0
    %3761 = vmatpush.bf16.msra.mxu0 0
    %3762 = vmatpush.bf16.msra.mxu0 0
    %3763 = vmatpush.bf16.msra.mxu0 0
    %3764 = vmatpush.bf16.msra.mxu0 %v3737
    %3765 = vmatmul.bf16.gmra.mxu0 %v3755
    %v3766 = vpop.f32.mrf.mxu0
    %v3767 = vadd.f32 0.0, %v3766
    %v3768 = vpop.f32.mrf.mxu0
    %3769 = vdwg.mxu0
    %s3770 = scalar_lea.vmem [#allocation10], 2
    %v3771 = vld [vmem:[%s3770] sm:$0x1]
    %v3773 = vsel %vm3731, %v3771, 0
    %3775 = vmatpush.bf16.msra.mxu0 0
    %3776 = vmatpush.bf16.msra.mxu0 0
    %3777 = vmatpush.bf16.msra.mxu0 0
    %3778 = vmatpush.bf16.msra.mxu0 0
    %3779 = vmatpush.bf16.msra.mxu0 0
    %3780 = vmatpush.bf16.msra.mxu0 0
    %3781 = vmatpush.bf16.msra.mxu0 0
    %3782 = vmatpush.bf16.msra.mxu0 %v3737
    %3783 = vmatmul.bf16.gmra.mxu0 %v3773
    %v3784 = vpop.f32.mrf.mxu0
    %v3785 = vadd.f32 0.0, %v3784
    %v3786 = vpop.f32.mrf.mxu0
    %3787 = vdwg.mxu0
    %s3788 = scalar_lea.vmem [#allocation10], 3
    %v3789 = vld [vmem:[%s3788] sm:$0x1]
    %v3791 = vsel %vm3731, %v3789, 0
    %3793 = vmatpush.bf16.msra.mxu0 0
    %3794 = vmatpush.bf16.msra.mxu0 0
    %3795 = vmatpush.bf16.msra.mxu0 0
    %3796 = vmatpush.bf16.msra.mxu0 0
    %3797 = vmatpush.bf16.msra.mxu0 0
    %3798 = vmatpush.bf16.msra.mxu0 0
    %3799 = vmatpush.bf16.msra.mxu0 0
    %3800 = vmatpush.bf16.msra.mxu0 %v3737
    %3801 = vmatmul.bf16.gmra.mxu0 %v3791
    %v3802 = vpop.f32.mrf.mxu0
    %v3803 = vadd.f32 0.0, %v3802
    %v3804 = vpop.f32.mrf.mxu0
    %3805 = vdwg.mxu0
    %v3806 = vpack.c.bf16 %v3749, %v3749
    %v3807 = vpack.c.bf16 %v3767, %v3767
    %v3808 = vpack.c.bf16 %v3785, %v3785
    %v3809 = vpack.c.bf16 %v3803, %v3803
    %v3874 = vunpack.c.l.b16 %v3665
    %v3875 = vunpack.c.l.b16 %v3666
    %v3876 = vunpack.c.l.b16 %v3667
    %v3877 = vunpack.c.l.b16 %v3668
    %v3878 = vunpack.c.l.b16 %v3669
    %v3879 = vunpack.c.l.b16 %v3670
    %v3880 = vunpack.c.l.b16 %v3671
    %v3881 = vunpack.c.l.b16 %v3672
    %v3882 = vunpack.c.l.b16 %v3673
    %v3883 = vunpack.c.l.b16 %v3674
    %v3884 = vunpack.c.l.b16 %v3675
    %v3885 = vunpack.c.l.b16 %v3676
    %v3886 = vunpack.c.l.b16 %v3677
    %v3887 = vunpack.c.l.b16 %v3678
    %v3888 = vunpack.c.l.b16 %v3679
    %v3889 = vunpack.c.l.b16 %v3680
    %v3890 = vunpack.c.l.b16 %v3681
    %v3891 = vunpack.c.l.b16 %v3682
    %v3892 = vunpack.c.l.b16 %v3683
    %v3893 = vunpack.c.l.b16 %v3684
    %v3894 = vunpack.c.l.b16 %v3685
    %v3895 = vunpack.c.l.b16 %v3686
    %v3896 = vunpack.c.l.b16 %v3687
    %v3897 = vunpack.c.l.b16 %v3688
    %v3898 = vunpack.c.l.b16 %v3689
    %v3899 = vunpack.c.l.b16 %v3690
    %v3900 = vunpack.c.l.b16 %v3691
    %v3901 = vunpack.c.l.b16 %v3692
    %v3902 = vunpack.c.l.b16 %v3693
    %v3903 = vunpack.c.l.b16 %v3694
    %v3904 = vunpack.c.l.b16 %v3695
    %v3905 = vunpack.c.l.b16 %v3696
    %v3906 = vunpack.c.l.b16 %v3697
    %v3907 = vunpack.c.l.b16 %v3698
    %v3908 = vunpack.c.l.b16 %v3699
    %v3909 = vunpack.c.l.b16 %v3700
    %v3910 = vunpack.c.l.b16 %v3701
    %v3911 = vunpack.c.l.b16 %v3702
    %v3912 = vunpack.c.l.b16 %v3703
    %v3913 = vunpack.c.l.b16 %v3704
    %v3914 = vunpack.c.l.b16 %v3705
    %v3915 = vunpack.c.l.b16 %v3706
    %v3916 = vunpack.c.l.b16 %v3707
    %v3917 = vunpack.c.l.b16 %v3708
    %v3918 = vunpack.c.l.b16 %v3709
    %v3919 = vunpack.c.l.b16 %v3710
    %v3920 = vunpack.c.l.b16 %v3711
    %v3921 = vunpack.c.l.b16 %v3712
    %v3922 = vunpack.c.l.b16 %v3713
    %v3923 = vunpack.c.l.b16 %v3714
    %v3924 = vunpack.c.l.b16 %v3715
    %v3925 = vunpack.c.l.b16 %v3716
    %v3926 = vunpack.c.l.b16 %v3717
    %v3927 = vunpack.c.l.b16 %v3718
    %v3928 = vunpack.c.l.b16 %v3719
    %v3929 = vunpack.c.l.b16 %v3720
    %v3930 = vunpack.c.l.b16 %v3721
    %v3931 = vunpack.c.l.b16 %v3722
    %v3932 = vunpack.c.l.b16 %v3723
    %v3933 = vunpack.c.l.b16 %v3724
    %v3934 = vunpack.c.l.b16 %v3725
    %v3935 = vunpack.c.l.b16 %v3726
    %v3936 = vunpack.c.l.b16 %v3727
    %v3937 = vunpack.c.l.b16 %v3728
    %v3938 = vpack.c.b16 %v3875, %v3874
    %v3939 = vpack.c.b16 %v3877, %v3876
    %v3940 = vpack.c.b16 %v3879, %v3878
    %v3941 = vpack.c.b16 %v3881, %v3880
    %v3942 = vpack.c.b16 %v3883, %v3882
    %v3943 = vpack.c.b16 %v3885, %v3884
    %v3944 = vpack.c.b16 %v3887, %v3886
    %v3945 = vpack.c.b16 %v3889, %v3888
    %v3946 = vpack.c.b16 %v3891, %v3890
    %v3947 = vpack.c.b16 %v3893, %v3892
    %v3948 = vpack.c.b16 %v3895, %v3894
    %v3949 = vpack.c.b16 %v3897, %v3896
    %v3950 = vpack.c.b16 %v3899, %v3898
    %v3951 = vpack.c.b16 %v3901, %v3900
    %v3952 = vpack.c.b16 %v3903, %v3902
    %v3953 = vpack.c.b16 %v3905, %v3904
    %v3954 = vpack.c.b16 %v3907, %v3906
    %v3955 = vpack.c.b16 %v3909, %v3908
    %v3956 = vpack.c.b16 %v3911, %v3910
    %v3957 = vpack.c.b16 %v3913, %v3912
    %v3958 = vpack.c.b16 %v3915, %v3914
    %v3959 = vpack.c.b16 %v3917, %v3916
    %v3960 = vpack.c.b16 %v3919, %v3918
    %v3961 = vpack.c.b16 %v3921, %v3920
    %v3962 = vpack.c.b16 %v3923, %v3922
    %v3963 = vpack.c.b16 %v3925, %v3924
    %v3964 = vpack.c.b16 %v3927, %v3926
    %v3965 = vpack.c.b16 %v3929, %v3928
    %v3966 = vpack.c.b16 %v3931, %v3930
    %v3967 = vpack.c.b16 %v3933, %v3932
    %v3968 = vpack.c.b16 %v3935, %v3934
    %v3969 = vpack.c.b16 %v3937, %v3936
    %4002 = vmatpush.bf16.msra.mxu0 %v3945
    %4003 = vmatpush.bf16.msra.mxu0 %v3944
    %4004 = vmatpush.bf16.msra.mxu0 %v3943
    %4005 = vmatpush.bf16.msra.mxu0 %v3942
    %4006 = vmatpush.bf16.msra.mxu0 %v3941
    %4007 = vmatpush.bf16.msra.mxu0 %v3940
    %4008 = vmatpush.bf16.msra.mxu0 %v3939
    %4009 = vmatpush.bf16.msra.mxu0 %v3938
    %4010 = vmatmul.bf16.gmra.mxu0 %v3806
    %v4011 = vpop.f32.mrf.mxu0
    %v4012 = vadd.f32 0.0, %v4011
    %v4013 = vpop.f32.mrf.mxu0
    %4014 = vdwg.mxu0
    %4015 = vmatpush.bf16.msra.mxu0 %v3953
    %4016 = vmatpush.bf16.msra.mxu0 %v3952
    %4017 = vmatpush.bf16.msra.mxu0 %v3951
    %4018 = vmatpush.bf16.msra.mxu0 %v3950
    %4019 = vmatpush.bf16.msra.mxu0 %v3949
    %4020 = vmatpush.bf16.msra.mxu0 %v3948
    %4021 = vmatpush.bf16.msra.mxu0 %v3947
    %4022 = vmatpush.bf16.msra.mxu0 %v3946
    %4023 = vmatmul.bf16.gmra.mxu0 %v3807
    %v4024 = vpop.f32.mrf.mxu0
    %v4025 = vadd.f32 %v4012, %v4024
    %v4026 = vpop.f32.mrf.mxu0
    %4027 = vdwg.mxu0
    %4028 = vmatpush.bf16.msra.mxu0 %v3961
    %4029 = vmatpush.bf16.msra.mxu0 %v3960
    %4030 = vmatpush.bf16.msra.mxu0 %v3959
    %4031 = vmatpush.bf16.msra.mxu0 %v3958
    %4032 = vmatpush.bf16.msra.mxu0 %v3957
    %4033 = vmatpush.bf16.msra.mxu0 %v3956
    %4034 = vmatpush.bf16.msra.mxu0 %v3955
    %4035 = vmatpush.bf16.msra.mxu0 %v3954
    %4036 = vmatmul.bf16.gmra.mxu0 %v3808
    %v4037 = vpop.f32.mrf.mxu0
    %v4038 = vadd.f32 %v4025, %v4037
    %v4039 = vpop.f32.mrf.mxu0
    %4040 = vdwg.mxu0
    %4041 = vmatpush.bf16.msra.mxu0 %v3969
    %4042 = vmatpush.bf16.msra.mxu0 %v3968
    %4043 = vmatpush.bf16.msra.mxu0 %v3967
    %4044 = vmatpush.bf16.msra.mxu0 %v3966
    %4045 = vmatpush.bf16.msra.mxu0 %v3965
    %4046 = vmatpush.bf16.msra.mxu0 %v3964
    %4047 = vmatpush.bf16.msra.mxu0 %v3963
    %4048 = vmatpush.bf16.msra.mxu0 %v3962
    %4049 = vmatmul.bf16.gmra.mxu0 %v3809
    %v4050 = vpop.f32.mrf.mxu0
    %v4051 = vadd.f32 %v4038, %v4050
    %v4052 = vpop.f32.mrf.mxu0
    %4053 = vdwg.mxu0
    %v4054 = vld [vmem:[#allocation14] sm:$0x1]
    %v4055 = vld [vmem:[#allocation16] sm:$0x1]
    %v4056 = vsel %vm3735, %v4051, 0.0
    %v4057 = vrot.slane %v4056, 4
    %v4058 = vadd.f32 %v4056, %v4057
    %v4059 = vrot.slane %v4058, 2
    %v4060 = vadd.f32 %v4058, %v4059
    %v4061 = vrot.slane %v4060, 1
    %v4062 = vadd.f32 %v4060, %v4061
    %v4063 = vrcp.pop 2.0
    %v4064 = vmul.f32 2.0, %v4063
    %v4065 = vsub.f32 1.0, %v4064
    %v4066 = vmul.f32 %v4063, %v4065
    %v4067 = vadd.f32 %v4063, %v4066
    %vm4068 = vweird.f32 %v4063
    %v4069 = vsel %vm4068, %v4063, %v4067
    %v4070 = vmul.f32 %v4062, %v4069
    %v4071 = vsub.f32 %v4051, %v4070
    %v4072 = vmul.f32 %v4071, %v4071
    %v4073 = vsel %vm3735, %v4072, 0.0
    %v4074 = vrot.slane %v4073, 4
    %v4075 = vadd.f32 %v4073, %v4074
    %v4076 = vrot.slane %v4075, 2
    %v4077 = vadd.f32 %v4075, %v4076
    %v4078 = vrot.slane %v4077, 1
    %v4079 = vadd.f32 %v4077, %v4078
    %v4080 = vmul.f32 %v4079, %v4069
    %v4081 = vadd.f32 %v4080, 1e-05
    %v4082 = vrsqrt.pop %v4081
    %v4083 = vmul.f32 %v4082, %v4081
    %v4084 = vmul.f32 %v4083, %v4082
    %v4085 = vmul.f32 0.5, %v4084
    %v4086 = vsub.f32 1.5, %v4085
    %v4087 = vmul.f32 %v4082, %v4086
    %vm4088 = vweird.f32 %v4081
    %vm4089 = vweird.f32 %v4082
    %vm4090 = vmor %vm4088, %vm4089
    %v4091 = vsel %vm4090, %v4082, %v4087
    %v4092 = vmul.f32 %v4071, %v4091
    %v4093 = vperm.slane %v4054, 0
    %v4094 = vmul.f32 %v4092, %v4093
    %v4095 = vperm.slane %v4055, 0
    %v4096 = vadd.f32 %v4094, %v4095
    %v4097 = vmul.f32 %v4096, 0.2
    %v4098 = vmax.f32 %v4096, %v4097
    %v4099 = vld [vmem:[%s13] sm:$0xf]
    %v4100 = vld [vmem:[%s13 + $0x4] sm:$0xf]
    %v4101 = vld [vmem:[%s13 + $0x8] sm:$0xf]
    %v4102 = vld [vmem:[%s13 + $0xc] sm:$0xf]
    %v4103 = vld [vmem:[%s13 + $0x10] sm:$0xf]
    %v4104 = vld [vmem:[%s13 + $0x14] sm:$0xf]
    %v4105 = vld [vmem:[%s13 + $0x18] sm:$0xf]
    %v4106 = vld [vmem:[%s13 + $0x1c] sm:$0xf]
    %v4107 = vld [vmem:[%s13 + $0x20] sm:$0xf]
    %v4108 = vld [vmem:[%s13 + $0x24] sm:$0xf]
    %v4109 = vld [vmem:[%s13 + $0x28] sm:$0xf]
    %v4110 = vld [vmem:[%s13 + $0x2c] sm:$0xf]
    %v4111 = vld [vmem:[%s13 + $0x30] sm:$0xf]
    %v4112 = vld [vmem:[%s13 + $0x34] sm:$0xf]
    %v4113 = vld [vmem:[%s13 + $0x38] sm:$0xf]
    %v4114 = vld [vmem:[%s13 + $0x3c] sm:$0xf]
    %v4115 = vpack.c.bf16 %v4098, %v4098
    %v4132 = vunpack.c.l.b16 %v4099
    %v4133 = vunpack.c.l.b16 %v4100
    %v4134 = vunpack.c.l.b16 %v4101
    %v4135 = vunpack.c.l.b16 %v4102
    %v4136 = vunpack.c.l.b16 %v4103
    %v4137 = vunpack.c.l.b16 %v4104
    %v4138 = vunpack.c.l.b16 %v4105
    %v4139 = vunpack.c.l.b16 %v4106
    %v4140 = vunpack.c.l.b16 %v4107
    %v4141 = vunpack.c.l.b16 %v4108
    %v4142 = vunpack.c.l.b16 %v4109
    %v4143 = vunpack.c.l.b16 %v4110
    %v4144 = vunpack.c.l.b16 %v4111
    %v4145 = vunpack.c.l.b16 %v4112
    %v4146 = vunpack.c.l.b16 %v4113
    %v4147 = vunpack.c.l.b16 %v4114
    %v4148 = vpack.c.b16 %v4133, %v4132
    %v4149 = vpack.c.b16 %v4135, %v4134
    %v4150 = vpack.c.b16 %v4137, %v4136
    %v4151 = vpack.c.b16 %v4139, %v4138
    %v4152 = vpack.c.b16 %v4141, %v4140
    %v4153 = vpack.c.b16 %v4143, %v4142
    %v4154 = vpack.c.b16 %v4145, %v4144
    %v4155 = vpack.c.b16 %v4147, %v4146
    %4164 = vmatpush.bf16.msra.mxu0 %v4155
    %4165 = vmatpush.bf16.msra.mxu0 %v4154
    %4166 = vmatpush.bf16.msra.mxu0 %v4153
    %4167 = vmatpush.bf16.msra.mxu0 %v4152
    %4168 = vmatpush.bf16.msra.mxu0 %v4151
    %4169 = vmatpush.bf16.msra.mxu0 %v4150
    %4170 = vmatpush.bf16.msra.mxu0 %v4149
    %4171 = vmatpush.bf16.msra.mxu0 %v4148
    %4172 = vmatmul.bf16.gmra.mxu0 %v4115
    %v4173 = vpop.f32.mrf.mxu0
    %v4174 = vadd.f32 0.0, %v4173
    %v4175 = vpop.f32.mrf.mxu0
    %4176 = vdwg.mxu0
    %v4177 = vld [vmem:[#allocation14 + $0x1] sm:$0x1]
    %v4178 = vld [vmem:[#allocation16 + $0x1] sm:$0x1]
    %v4179 = vsel %vm3735, %v4174, 0.0
    %v4180 = vrot.slane %v4179, 4
    %v4181 = vadd.f32 %v4179, %v4180
    %v4182 = vrot.slane %v4181, 2
    %v4183 = vadd.f32 %v4181, %v4182
    %v4184 = vrot.slane %v4183, 1
    %v4185 = vadd.f32 %v4183, %v4184
    %v4186 = vmul.f32 %v4185, %v4069
    %v4187 = vsub.f32 %v4174, %v4186
    %v4188 = vmul.f32 %v4187, %v4187
    %v4189 = vsel %vm3735, %v4188, 0.0
    %v4190 = vrot.slane %v4189, 4
    %v4191 = vadd.f32 %v4189, %v4190
    %v4192 = vrot.slane %v4191, 2
    %v4193 = vadd.f32 %v4191, %v4192
    %v4194 = vrot.slane %v4193, 1
    %v4195 = vadd.f32 %v4193, %v4194
    %v4196 = vmul.f32 %v4195, %v4069
    %v4197 = vadd.f32 %v4196, 1e-05
    %v4198 = vrsqrt.pop %v4197
    %v4199 = vmul.f32 %v4198, %v4197
    %v4200 = vmul.f32 %v4199, %v4198
    %v4201 = vmul.f32 0.5, %v4200
    %v4202 = vsub.f32 1.5, %v4201
    %v4203 = vmul.f32 %v4198, %v4202
    %vm4204 = vweird.f32 %v4197
    %vm4205 = vweird.f32 %v4198
    %vm4206 = vmor %vm4204, %vm4205
    %v4207 = vsel %vm4206, %v4198, %v4203
    %v4208 = vmul.f32 %v4187, %v4207
    %v4209 = vperm.slane %v4177, 0
    %v4210 = vmul.f32 %v4208, %v4209
    %v4211 = vperm.slane %v4178, 0
    %v4212 = vadd.f32 %v4210, %v4211
    %v4213 = vmul.f32 %v4212, 0.2
    %v4214 = vmax.f32 %v4212, %v4213
    %s4215 = scalar_lea.vmem %s13, 64
    %v4216 = vld [vmem:[%s4215] sm:$0xf]
    %v4217 = vld [vmem:[%s4215 + $0x4] sm:$0xf]
    %v4218 = vld [vmem:[%s4215 + $0x8] sm:$0xf]
    %v4219 = vld [vmem:[%s4215 + $0xc] sm:$0xf]
    %v4220 = vld [vmem:[%s4215 + $0x10] sm:$0xf]
    %v4221 = vld [vmem:[%s4215 + $0x14] sm:$0xf]
    %v4222 = vld [vmem:[%s4215 + $0x18] sm:$0xf]
    %v4223 = vld [vmem:[%s4215 + $0x1c] sm:$0xf]
    %v4224 = vld [vmem:[%s4215 + $0x20] sm:$0xf]
    %v4225 = vld [vmem:[%s4215 + $0x24] sm:$0xf]
    %v4226 = vld [vmem:[%s4215 + $0x28] sm:$0xf]
    %v4227 = vld [vmem:[%s4215 + $0x2c] sm:$0xf]
    %v4228 = vld [vmem:[%s4215 + $0x30] sm:$0xf]
    %v4229 = vld [vmem:[%s4215 + $0x34] sm:$0xf]
    %v4230 = vld [vmem:[%s4215 + $0x38] sm:$0xf]
    %v4231 = vld [vmem:[%s4215 + $0x3c] sm:$0xf]
    %v4232 = vpack.c.bf16 %v4214, %v4214
    %v4249 = vunpack.c.l.b16 %v4216
    %v4250 = vunpack.c.l.b16 %v4217
    %v4251 = vunpack.c.l.b16 %v4218
    %v4252 = vunpack.c.l.b16 %v4219
    %v4253 = vunpack.c.l.b16 %v4220
    %v4254 = vunpack.c.l.b16 %v4221
    %v4255 = vunpack.c.l.b16 %v4222
    %v4256 = vunpack.c.l.b16 %v4223
    %v4257 = vunpack.c.l.b16 %v4224
    %v4258 = vunpack.c.l.b16 %v4225
    %v4259 = vunpack.c.l.b16 %v4226
    %v4260 = vunpack.c.l.b16 %v4227
    %v4261 = vunpack.c.l.b16 %v4228
    %v4262 = vunpack.c.l.b16 %v4229
    %v4263 = vunpack.c.l.b16 %v4230
    %v4264 = vunpack.c.l.b16 %v4231
    %v4265 = vpack.c.b16 %v4250, %v4249
    %v4266 = vpack.c.b16 %v4252, %v4251
    %v4267 = vpack.c.b16 %v4254, %v4253
    %v4268 = vpack.c.b16 %v4256, %v4255
    %v4269 = vpack.c.b16 %v4258, %v4257
    %v4270 = vpack.c.b16 %v4260, %v4259
    %v4271 = vpack.c.b16 %v4262, %v4261
    %v4272 = vpack.c.b16 %v4264, %v4263
    %4281 = vmatpush.bf16.msra.mxu0 %v4272
    %4282 = vmatpush.bf16.msra.mxu0 %v4271
    %4283 = vmatpush.bf16.msra.mxu0 %v4270
    %4284 = vmatpush.bf16.msra.mxu0 %v4269
    %4285 = vmatpush.bf16.msra.mxu0 %v4268
    %4286 = vmatpush.bf16.msra.mxu0 %v4267
    %4287 = vmatpush.bf16.msra.mxu0 %v4266
    %4288 = vmatpush.bf16.msra.mxu0 %v4265
    %4289 = vmatmul.bf16.gmra.mxu0 %v4232
    %v4290 = vpop.f32.mrf.mxu0
    %v4291 = vadd.f32 0.0, %v4290
    %v4292 = vpop.f32.mrf.mxu0
    %4293 = vdwg.mxu0
    %v4294 = vld [vmem:[#allocation14 + $0x2] sm:$0x1]
    %v4295 = vld [vmem:[#allocation16 + $0x2] sm:$0x1]
    %v4296 = vsel %vm3735, %v4291, 0.0
    %v4297 = vrot.slane %v4296, 4
    %v4298 = vadd.f32 %v4296, %v4297
    %v4299 = vrot.slane %v4298, 2
    %v4300 = vadd.f32 %v4298, %v4299
    %v4301 = vrot.slane %v4300, 1
    %v4302 = vadd.f32 %v4300, %v4301
    %v4303 = vmul.f32 %v4302, %v4069
    %v4304 = vsub.f32 %v4291, %v4303
    %v4305 = vmul.f32 %v4304, %v4304
    %v4306 = vsel %vm3735, %v4305, 0.0
    %v4307 = vrot.slane %v4306, 4
    %v4308 = vadd.f32 %v4306, %v4307
    %v4309 = vrot.slane %v4308, 2
    %v4310 = vadd.f32 %v4308, %v4309
    %v4311 = vrot.slane %v4310, 1
    %v4312 = vadd.f32 %v4310, %v4311
    %v4313 = vmul.f32 %v4312, %v4069
    %v4314 = vadd.f32 %v4313, 1e-05
    %v4315 = vrsqrt.pop %v4314
    %v4316 = vmul.f32 %v4315, %v4314
    %v4317 = vmul.f32 %v4316, %v4315
    %v4318 = vmul.f32 0.5, %v4317
    %v4319 = vsub.f32 1.5, %v4318
    %v4320 = vmul.f32 %v4315, %v4319
    %vm4321 = vweird.f32 %v4314
    %vm4322 = vweird.f32 %v4315
    %vm4323 = vmor %vm4321, %vm4322
    %v4324 = vsel %vm4323, %v4315, %v4320
    %v4325 = vmul.f32 %v4304, %v4324
    %v4326 = vperm.slane %v4294, 0
    %v4327 = vmul.f32 %v4325, %v4326
    %v4328 = vperm.slane %v4295, 0
    %v4329 = vadd.f32 %v4327, %v4328
    %v4330 = vmul.f32 %v4329, 0.2
    %v4331 = vmax.f32 %v4329, %v4330
    %s4332 = scalar_lea.vmem %s13, 128
    %v4333 = vld [vmem:[%s4332] sm:$0xf]
    %v4334 = vld [vmem:[%s4332 + $0x4] sm:$0xf]
    %v4335 = vld [vmem:[%s4332 + $0x8] sm:$0xf]
    %v4336 = vld [vmem:[%s4332 + $0xc] sm:$0xf]
    %v4337 = vld [vmem:[%s4332 + $0x10] sm:$0xf]
    %v4338 = vld [vmem:[%s4332 + $0x14] sm:$0xf]
    %v4339 = vld [vmem:[%s4332 + $0x18] sm:$0xf]
    %v4340 = vld [vmem:[%s4332 + $0x1c] sm:$0xf]
    %v4341 = vld [vmem:[%s4332 + $0x20] sm:$0xf]
    %v4342 = vld [vmem:[%s4332 + $0x24] sm:$0xf]
    %v4343 = vld [vmem:[%s4332 + $0x28] sm:$0xf]
    %v4344 = vld [vmem:[%s4332 + $0x2c] sm:$0xf]
    %v4345 = vld [vmem:[%s4332 + $0x30] sm:$0xf]
    %v4346 = vld [vmem:[%s4332 + $0x34] sm:$0xf]
    %v4347 = vld [vmem:[%s4332 + $0x38] sm:$0xf]
    %v4348 = vld [vmem:[%s4332 + $0x3c] sm:$0xf]
    %v4349 = vpack.c.bf16 %v4331, %v4331
    %v4366 = vunpack.c.l.b16 %v4333
    %v4367 = vunpack.c.l.b16 %v4334
    %v4368 = vunpack.c.l.b16 %v4335
    %v4369 = vunpack.c.l.b16 %v4336
    %v4370 = vunpack.c.l.b16 %v4337
    %v4371 = vunpack.c.l.b16 %v4338
    %v4372 = vunpack.c.l.b16 %v4339
    %v4373 = vunpack.c.l.b16 %v4340
    %v4374 = vunpack.c.l.b16 %v4341
    %v4375 = vunpack.c.l.b16 %v4342
    %v4376 = vunpack.c.l.b16 %v4343
    %v4377 = vunpack.c.l.b16 %v4344
    %v4378 = vunpack.c.l.b16 %v4345
    %v4379 = vunpack.c.l.b16 %v4346
    %v4380 = vunpack.c.l.b16 %v4347
    %v4381 = vunpack.c.l.b16 %v4348
    %v4382 = vpack.c.b16 %v4367, %v4366
    %v4383 = vpack.c.b16 %v4369, %v4368
    %v4384 = vpack.c.b16 %v4371, %v4370
    %v4385 = vpack.c.b16 %v4373, %v4372
    %v4386 = vpack.c.b16 %v4375, %v4374
    %v4387 = vpack.c.b16 %v4377, %v4376
    %v4388 = vpack.c.b16 %v4379, %v4378
    %v4389 = vpack.c.b16 %v4381, %v4380
    %4398 = vmatpush.bf16.msra.mxu0 %v4389
    %4399 = vmatpush.bf16.msra.mxu0 %v4388
    %4400 = vmatpush.bf16.msra.mxu0 %v4387
    %4401 = vmatpush.bf16.msra.mxu0 %v4386
    %4402 = vmatpush.bf16.msra.mxu0 %v4385
    %4403 = vmatpush.bf16.msra.mxu0 %v4384
    %4404 = vmatpush.bf16.msra.mxu0 %v4383
    %4405 = vmatpush.bf16.msra.mxu0 %v4382
    %4406 = vmatmul.bf16.gmra.mxu0 %v4349
    %v4407 = vpop.f32.mrf.mxu0
    %v4408 = vadd.f32 0.0, %v4407
    %v4409 = vpop.f32.mrf.mxu0
    %4410 = vdwg.mxu0
    %v4411 = vld [vmem:[#allocation14 + $0x3] sm:$0x1]
    %v4412 = vld [vmem:[#allocation16 + $0x3] sm:$0x1]
    %v4413 = vsel %vm3735, %v4408, 0.0
    %v4414 = vrot.slane %v4413, 4
    %v4415 = vadd.f32 %v4413, %v4414
    %v4416 = vrot.slane %v4415, 2
    %v4417 = vadd.f32 %v4415, %v4416
    %v4418 = vrot.slane %v4417, 1
    %v4419 = vadd.f32 %v4417, %v4418
    %v4420 = vmul.f32 %v4419, %v4069
    %v4421 = vsub.f32 %v4408, %v4420
    %v4422 = vmul.f32 %v4421, %v4421
    %v4423 = vsel %vm3735, %v4422, 0.0
    %v4424 = vrot.slane %v4423, 4
    %v4425 = vadd.f32 %v4423, %v4424
    %v4426 = vrot.slane %v4425, 2
    %v4427 = vadd.f32 %v4425, %v4426
    %v4428 = vrot.slane %v4427, 1
    %v4429 = vadd.f32 %v4427, %v4428
    %v4430 = vmul.f32 %v4429, %v4069
    %v4431 = vadd.f32 %v4430, 1e-05
    %v4432 = vrsqrt.pop %v4431
    %v4433 = vmul.f32 %v4432, %v4431
    %v4434 = vmul.f32 %v4433, %v4432
    %v4435 = vmul.f32 0.5, %v4434
    %v4436 = vsub.f32 1.5, %v4435
    %v4437 = vmul.f32 %v4432, %v4436
    %vm4438 = vweird.f32 %v4431
    %vm4439 = vweird.f32 %v4432
    %vm4440 = vmor %vm4438, %vm4439
    %v4441 = vsel %vm4440, %v4432, %v4437
    %v4442 = vmul.f32 %v4421, %v4441
    %v4443 = vperm.slane %v4411, 0
    %v4444 = vmul.f32 %v4442, %v4443
    %v4445 = vperm.slane %v4412, 0
    %v4446 = vadd.f32 %v4444, %v4445
    %v4447 = vmul.f32 %v4446, 0.2
    %v4448 = vmax.f32 %v4446, %v4447
    %s4449 = scalar_lea.vmem %s13, 192
    %v4450 = vld [vmem:[%s4449] sm:$0xf]
    %v4451 = vld [vmem:[%s4449 + $0x4] sm:$0xf]
    %v4452 = vld [vmem:[%s4449 + $0x8] sm:$0xf]
    %v4453 = vld [vmem:[%s4449 + $0xc] sm:$0xf]
    %v4454 = vld [vmem:[%s4449 + $0x10] sm:$0xf]
    %v4455 = vld [vmem:[%s4449 + $0x14] sm:$0xf]
    %v4456 = vld [vmem:[%s4449 + $0x18] sm:$0xf]
    %v4457 = vld [vmem:[%s4449 + $0x1c] sm:$0xf]
    %v4458 = vld [vmem:[%s4449 + $0x20] sm:$0xf]
    %v4459 = vld [vmem:[%s4449 + $0x24] sm:$0xf]
    %v4460 = vld [vmem:[%s4449 + $0x28] sm:$0xf]
    %v4461 = vld [vmem:[%s4449 + $0x2c] sm:$0xf]
    %v4462 = vld [vmem:[%s4449 + $0x30] sm:$0xf]
    %v4463 = vld [vmem:[%s4449 + $0x34] sm:$0xf]
    %v4464 = vld [vmem:[%s4449 + $0x38] sm:$0xf]
    %v4465 = vld [vmem:[%s4449 + $0x3c] sm:$0xf]
    %v4466 = vpack.c.bf16 %v4448, %v4448
    %v4483 = vunpack.c.l.b16 %v4450
    %v4484 = vunpack.c.l.b16 %v4451
    %v4485 = vunpack.c.l.b16 %v4452
    %v4486 = vunpack.c.l.b16 %v4453
    %v4487 = vunpack.c.l.b16 %v4454
    %v4488 = vunpack.c.l.b16 %v4455
    %v4489 = vunpack.c.l.b16 %v4456
    %v4490 = vunpack.c.l.b16 %v4457
    %v4491 = vunpack.c.l.b16 %v4458
    %v4492 = vunpack.c.l.b16 %v4459
    %v4493 = vunpack.c.l.b16 %v4460
    %v4494 = vunpack.c.l.b16 %v4461
    %v4495 = vunpack.c.l.b16 %v4462
    %v4496 = vunpack.c.l.b16 %v4463
    %v4497 = vunpack.c.l.b16 %v4464
    %v4498 = vunpack.c.l.b16 %v4465
    %v4499 = vpack.c.b16 %v4484, %v4483
    %v4500 = vpack.c.b16 %v4486, %v4485
    %v4501 = vpack.c.b16 %v4488, %v4487
    %v4502 = vpack.c.b16 %v4490, %v4489
    %v4503 = vpack.c.b16 %v4492, %v4491
    %v4504 = vpack.c.b16 %v4494, %v4493
    %v4505 = vpack.c.b16 %v4496, %v4495
    %v4506 = vpack.c.b16 %v4498, %v4497
    %4515 = vmatpush.bf16.msra.mxu0 %v4506
    %4516 = vmatpush.bf16.msra.mxu0 %v4505
    %4517 = vmatpush.bf16.msra.mxu0 %v4504
    %4518 = vmatpush.bf16.msra.mxu0 %v4503
    %4519 = vmatpush.bf16.msra.mxu0 %v4502
    %4520 = vmatpush.bf16.msra.mxu0 %v4501
    %4521 = vmatpush.bf16.msra.mxu0 %v4500
    %4522 = vmatpush.bf16.msra.mxu0 %v4499
    %4523 = vmatmul.bf16.gmra.mxu0 %v4466
    %v4524 = vpop.f32.mrf.mxu0
    %v4525 = vadd.f32 0.0, %v4524
    %v4526 = vpop.f32.mrf.mxu0
    %4527 = vdwg.mxu0
    %v4528 = vld [vmem:[#allocation14 + $0x4] sm:$0x1]
    %v4529 = vld [vmem:[#allocation16 + $0x4] sm:$0x1]
    %v4530 = vsel %vm3735, %v4525, 0.0
    %v4531 = vrot.slane %v4530, 4
    %v4532 = vadd.f32 %v4530, %v4531
    %v4533 = vrot.slane %v4532, 2
    %v4534 = vadd.f32 %v4532, %v4533
    %v4535 = vrot.slane %v4534, 1
    %v4536 = vadd.f32 %v4534, %v4535
    %v4537 = vmul.f32 %v4536, %v4069
    %v4538 = vsub.f32 %v4525, %v4537
    %v4539 = vmul.f32 %v4538, %v4538
    %v4540 = vsel %vm3735, %v4539, 0.0
    %v4541 = vrot.slane %v4540, 4
    %v4542 = vadd.f32 %v4540, %v4541
    %v4543 = vrot.slane %v4542, 2
    %v4544 = vadd.f32 %v4542, %v4543
    %v4545 = vrot.slane %v4544, 1
    %v4546 = vadd.f32 %v4544, %v4545
    %v4547 = vmul.f32 %v4546, %v4069
    %v4548 = vadd.f32 %v4547, 1e-05
    %v4549 = vrsqrt.pop %v4548
    %v4550 = vmul.f32 %v4549, %v4548
    %v4551 = vmul.f32 %v4550, %v4549
    %v4552 = vmul.f32 0.5, %v4551
    %v4553 = vsub.f32 1.5, %v4552
    %v4554 = vmul.f32 %v4549, %v4553
    %vm4555 = vweird.f32 %v4548
    %vm4556 = vweird.f32 %v4549
    %vm4557 = vmor %vm4555, %vm4556
    %v4558 = vsel %vm4557, %v4549, %v4554
    %v4559 = vmul.f32 %v4538, %v4558
    %v4560 = vperm.slane %v4528, 0
    %v4561 = vmul.f32 %v4559, %v4560
    %v4562 = vperm.slane %v4529, 0
    %v4563 = vadd.f32 %v4561, %v4562
    %v4564 = vmul.f32 %v4563, 0.2
    %v4565 = vmax.f32 %v4563, %v4564
    %vm4566 = vcmask 58368
    %4567 = vst.msk [vmem:[#allocation17] sm:$0x3] %vm4566, %v4565
    // Predicated region
    $region102: #{d2_forward.1} parent=1 // pred_check
      _
    $region103: #{d2_forward.1} parent=1 // pred_check_branch
      %4569 = sbr.rel (0) target = $region105
    $region104: #{d2_forward.1} parent=1 // pred_region
      %4571 = vsyncadd [#allocation4], 0
      %s4573 = sshll.u32 [#allocation17], 4
      %s4574 = int_to_ptr.vmem [resolvable:$true] %s4573
      %s4575 = sshll.u32 %s16, 4
      %s4576 = int_to_ptr.hbm [resolvable:$true] %s4575
      %4578 = dma.vmem_to_hbm [thread:$0]  %s4574, 32, %s4576, [#allocation4]
    $region105: #{d2_forward.1} parent=1 // pred_fallthru
      _
    // Predicated region
    $region106: #{d2_forward.1} parent=1 // pred_check
      _
    $region107: #{d2_forward.1} parent=1 // pred_check_branch
      %4580 = sbr.rel (0) target = $region109
    $region108: #{d2_forward.1} parent=1 // pred_region
      %4582 = dma.done [#allocation4], 32
    $region109: #{d2_forward.1} parent=1 // pred_fallthru
      _
    %4583 = vsyncpa [#allocation3], 1
    %4584 = vsyncpa [#allocation6], 1
    %4585 = vsyncpa [#allocation9], 1
    %4586 = vsyncpa [#allocation12], 1
    %4587 = vsyncpa [#allocation15], 1
    %4588 = vsyncpa [#allocation4], 1

</llo_original>
